<compile_context>
chip_gen: v5e
topology: v5e:2x2
jax: 0.10.0
libtpu: 0.0.40
codegen_flags: <defaults>
</compile_context>

<pallas_src>
import jax
import jax.numpy as jnp
from jax.experimental import pallas as pl
from jax.experimental.pallas import tpu as pltpu

N_EMBD = 256
N_HEAD = 4
HEAD_SIZE = N_EMBD // N_HEAD
LN_EPS = 1e-5


def _layernorm(x, gamma, beta):
    # x: (M, C) f32; gamma/beta: (1, C) f32
    mean = jnp.mean(x, axis=-1, keepdims=True)
    var = jnp.mean((x - mean) ** 2, axis=-1, keepdims=True)
    inv = jax.lax.rsqrt(var + LN_EPS)
    return (x - mean) * inv * gamma + beta


def transformer_block_kernel(
    x_ref,                 # (BB, T, C) f32
    wqkv_ref,              # (C, 3C) bf16  (1/sqrt(n_embd) scale pre-folded into q cols)
    wp_ref, bp_ref,        # (C, C) bf16, (1, C) f32
    ln1g_ref, ln1b_ref,    # (1, C) f32
    w1_ref, b1_ref,        # (C, 4C) bf16, (1, 4C) f32
    w2_ref, b2_ref,        # (4C, C) bf16, (1, C) f32
    ln2g_ref, ln2b_ref,    # (1, C) f32
    o_ref,                 # (BB, T, C) f32
):
    BB, T, C = x_ref.shape
    M = BB * T

    x = x_ref[...].reshape(M, C)                                    # (M, C) f32

    # ---------------- attention branch (pre-LN) ----------------
    h = _layernorm(x, ln1g_ref[...], ln1b_ref[...]).astype(jnp.bfloat16)
    # fused QKV: one (M, C) x (C, 3C) bf16 matmul, f32 accumulation
    qkv = jnp.dot(h, wqkv_ref[...], preferred_element_type=jnp.float32)   # (M, 3C)
    qkv_b = qkv.astype(jnp.bfloat16).reshape(BB, T, 3 * C)

    # additive causal bias, computed once per grid step (scale already in wq)
    row = jax.lax.broadcasted_iota(jnp.int32, (T, T), 0)
    col = jax.lax.broadcasted_iota(jnp.int32, (T, T), 1)
    causal_bias = jnp.where(col <= row, 0.0, -1e30).astype(jnp.float32)[None, :, :]

    ctx_heads = []
    for hd in range(N_HEAD):
        lo, hi = hd * HEAD_SIZE, (hd + 1) * HEAD_SIZE
        qh = qkv_b[:, :, 0 * C + lo:0 * C + hi]                     # (BB, T, D) bf16
        kh = qkv_b[:, :, 1 * C + lo:1 * C + hi]
        vh = qkv_b[:, :, 2 * C + lo:2 * C + hi]
        # batched scores, contracting the last dim of both operands (no kh.T)
        s = jnp.einsum('bqd,bkd->bqk', qh, kh,
                       preferred_element_type=jnp.float32)          # (BB, T, T) f32
        s = s + causal_bias
        p = jnp.exp(s - jnp.max(s, axis=-1, keepdims=True))
        p = p * pl.reciprocal(jnp.sum(p, axis=-1, keepdims=True), approx=True)
        ctx_heads.append(
            jnp.einsum('bqk,bkd->bqd', p.astype(jnp.bfloat16), vh,
                       preferred_element_type=jnp.float32))         # (BB, T, D) f32

    # single output-projection matmul (lane concat is cheap; 1x M row-feeds vs 4x)
    ctx = jnp.concatenate(ctx_heads, axis=-1).reshape(M, C).astype(jnp.bfloat16)
    attn = jnp.dot(ctx, wp_ref[...], preferred_element_type=jnp.float32) + bp_ref[...]
    x = x + attn                                                    # residual 1

    # ---------------- feed-forward branch (pre-LN) ----------------
    h2 = _layernorm(x, ln2g_ref[...], ln2b_ref[...]).astype(jnp.bfloat16)
    f = jnp.dot(h2, w1_ref[...], preferred_element_type=jnp.float32) + b1_ref[...]
    f = jnp.maximum(f, 0.0).astype(jnp.bfloat16)
    f = jnp.dot(f, w2_ref[...], preferred_element_type=jnp.float32) + b2_ref[...]
    x = x + f                                                       # residual 2

    o_ref[...] = x.reshape(BB, T, C)


def _choose_bb(B, T, target_rows=256):
    """Smallest divisor of B whose (BB*T) fills the MXU M-dim; else all of B."""
    for cand in range(1, B + 1):
        if B % cand == 0 and cand * T >= target_rows:
            return cand
    return B


def transformer_block(x, params):
    B, T, C = x.shape
    assert C == N_EMBD
    BB = _choose_bb(B, T)

    # PyTorch reference scales scores by n_embd ** -0.5; fold it into wq here.
    scale = float(C) ** -0.5
    wqkv = jnp.concatenate(
        [params["wq"] * scale, params["wk"], params["wv"]], axis=1
    ).astype(jnp.bfloat16)                                          # (C, 3C)
    wp = params["wp"].astype(jnp.bfloat16)
    w1 = params["w1"].astype(jnp.bfloat16)
    w2 = params["w2"].astype(jnp.bfloat16)

    def full2d(shape):
        return pl.BlockSpec(shape, lambda b: (0, 0))

    in_specs = [
        pl.BlockSpec((BB, T, C), lambda b: (b, 0, 0)),   # x
        full2d((C, 3 * C)),                               # wqkv
        full2d((C, C)), full2d((1, C)),                   # wp, bp
        full2d((1, C)), full2d((1, C)),                   # ln1 gamma/beta
        full2d((C, 4 * C)), full2d((1, 4 * C)),           # w1, b1
        full2d((4 * C, C)), full2d((1, C)),               # w2, b2
        full2d((1, C)), full2d((1, C)),                   # ln2 gamma/beta
    ]

    return pl.pallas_call(
        transformer_block_kernel,
        out_shape=jax.ShapeDtypeStruct((B, T, C), jnp.float32),
        grid_spec=pltpu.PrefetchScalarGridSpec(
            num_scalar_prefetch=0,
            grid=(B // BB,),
            in_specs=in_specs,
            out_specs=pl.BlockSpec((BB, T, C), lambda b: (b, 0, 0)),
        ),
        compiler_params=pltpu.CompilerParams(
            dimension_semantics=("parallel",),
        ),
    )(
        x,
        wqkv,
        wp, params["bp"],
        params["ln1g"], params["ln1b"],
        w1, params["b1"],
        w2, params["b2"],
        params["ln2g"], params["ln2b"],
    )


def init_params(key):
    C = N_EMBD
    ks = jax.random.split(key, 8)
    s = 0.02
    return {
        "wq": jax.random.normal(ks[0], (C, C), jnp.float32) * s,
        "wk": jax.random.normal(ks[1], (C, C), jnp.float32) * s,
        "wv": jax.random.normal(ks[2], (C, C), jnp.float32) * s,
        "wp": jax.random.normal(ks[3], (C, C), jnp.float32) * s,
        "bp": jnp.zeros((1, C), jnp.float32),
        "ln1g": jnp.ones((1, C), jnp.float32),
        "ln1b": jnp.zeros((1, C), jnp.float32),
        "w1": jax.random.normal(ks[4], (C, 4 * C), jnp.float32) * s,
        "b1": jnp.zeros((1, 4 * C), jnp.float32),
        "w2": jax.random.normal(ks[5], (4 * C, C), jnp.float32) * s,
        "b2": jnp.zeros((1, C), jnp.float32),
        "ln2g": jnp.ones((1, C), jnp.float32),
        "ln2b": jnp.zeros((1, C), jnp.float32),
    }


if __name__ == "__main__":
    # TODO(synk): Dropout is treated as identity (eval mode); no RNG dropout in-kernel.
    key = jax.random.PRNGKey(0)
    kx, kp = jax.random.split(key)
    B, T = 2, 8                      # T <= block_size (128)
    x = jax.random.normal(kx, (B, T, N_EMBD), jnp.float32)
    params = init_params(kp)

    out = transformer_block(x, params)
    jax.block_until_ready(out)
    assert out.shape == (B, T, N_EMBD)
    print("KERNEL_OK")
</pallas_src>

<mosaic_0001>
module attributes {stable_mosaic.version = 11 : i64} {
  func.func @transformer_block_kernel(%arg0: i32, %arg1: memref<2x8x256xf32, #tpu.memory_space<vmem>>, %arg2: memref<256x768xbf16, #tpu.memory_space<vmem>>, %arg3: memref<256x256xbf16, #tpu.memory_space<vmem>>, %arg4: memref<1x256xf32, #tpu.memory_space<vmem>>, %arg5: memref<1x256xf32, #tpu.memory_space<vmem>>, %arg6: memref<1x256xf32, #tpu.memory_space<vmem>>, %arg7: memref<256x1024xbf16, #tpu.memory_space<vmem>>, %arg8: memref<1x1024xf32, #tpu.memory_space<vmem>>, %arg9: memref<1024x256xbf16, #tpu.memory_space<vmem>>, %arg10: memref<1x256xf32, #tpu.memory_space<vmem>>, %arg11: memref<1x256xf32, #tpu.memory_space<vmem>>, %arg12: memref<1x256xf32, #tpu.memory_space<vmem>>, %arg13: memref<2x8x256xf32, #tpu.memory_space<vmem>>) attributes {dimension_semantics = [#tpu.dimension_semantics<parallel>], iteration_bounds = array<i64: 1>, scalar_prefetch = 0 : i64, scratch_operands = 0 : i64, tpu.core_type = #tpu.core_type<tc>, window_params = [{transform_indices = @transform_0, window_bounds = array<i64: 2, 8, 256>}, {pipeline_mode = #tpu.pipeline_mode<synchronous>, transform_indices = @transform_1, window_bounds = array<i64: 256, 768>}, {pipeline_mode = #tpu.pipeline_mode<synchronous>, transform_indices = @transform_2, window_bounds = array<i64: 256, 256>}, {pipeline_mode = #tpu.pipeline_mode<synchronous>, transform_indices = @transform_3, window_bounds = array<i64: 1, 256>}, {pipeline_mode = #tpu.pipeline_mode<synchronous>, transform_indices = @transform_4, window_bounds = array<i64: 1, 256>}, {pipeline_mode = #tpu.pipeline_mode<synchronous>, transform_indices = @transform_5, window_bounds = array<i64: 1, 256>}, {pipeline_mode = #tpu.pipeline_mode<synchronous>, transform_indices = @transform_6, window_bounds = array<i64: 256, 1024>}, {pipeline_mode = #tpu.pipeline_mode<synchronous>, transform_indices = @transform_7, window_bounds = array<i64: 1, 1024>}, {pipeline_mode = #tpu.pipeline_mode<synchronous>, transform_indices = @transform_8, window_bounds = array<i64: 1024, 256>}, {pipeline_mode = #tpu.pipeline_mode<synchronous>, transform_indices = @transform_9, window_bounds = array<i64: 1, 256>}, {pipeline_mode = #tpu.pipeline_mode<synchronous>, transform_indices = @transform_10, window_bounds = array<i64: 1, 256>}, {pipeline_mode = #tpu.pipeline_mode<synchronous>, transform_indices = @transform_11, window_bounds = array<i64: 1, 256>}, {transform_indices = @transform_12, window_bounds = array<i64: 2, 8, 256>}]} {
    %c0 = arith.constant 0 : index
    %c0_0 = arith.constant 0 : index
    %c0_1 = arith.constant 0 : index
    %0 = vector.load %arg1[%c0, %c0_0, %c0_1] : memref<2x8x256xf32, #tpu.memory_space<vmem>>, vector<2x8x256xf32>
    %1 = vector.shape_cast %0 : vector<2x8x256xf32> to vector<16x256xf32>
    %c0_2 = arith.constant 0 : index
    %c0_3 = arith.constant 0 : index
    %2 = vector.load %arg5[%c0_2, %c0_3] : memref<1x256xf32, #tpu.memory_space<vmem>>, vector<1x256xf32>
    %c0_4 = arith.constant 0 : index
    %c0_5 = arith.constant 0 : index
    %3 = vector.load %arg6[%c0_4, %c0_5] : memref<1x256xf32, #tpu.memory_space<vmem>>, vector<1x256xf32>
    %cst = arith.constant dense<0.000000e+00> : vector<16xf32>
    %4 = vector.multi_reduction <add>, %1, %cst [1] : vector<16x256xf32> to vector<16xf32>
    %5 = vector.shape_cast %4 : vector<16xf32> to vector<16x1xf32>
    %cst_6 = arith.constant 2.560000e+02 : f32
    %6 = vector.broadcast %cst_6 : f32 to vector<16x1xf32>
    %7 = arith.divf %5, %6 : vector<16x1xf32>
    %8 = vector.broadcast %7 : vector<16x1xf32> to vector<16x256xf32>
    %9 = arith.subf %1, %8 : vector<16x256xf32>
    %10 = arith.mulf %9, %9 : vector<16x256xf32>
    %cst_7 = arith.constant dense<0.000000e+00> : vector<16xf32>
    %11 = vector.multi_reduction <add>, %10, %cst_7 [1] : vector<16x256xf32> to vector<16xf32>
    %12 = vector.shape_cast %11 : vector<16xf32> to vector<16x1xf32>
    %cst_8 = arith.constant 2.560000e+02 : f32
    %13 = vector.broadcast %cst_8 : f32 to vector<16x1xf32>
    %14 = arith.divf %12, %13 : vector<16x1xf32>
    %cst_9 = arith.constant 9.99999974E-6 : f32
    %15 = vector.broadcast %cst_9 : f32 to vector<16x1xf32>
    %16 = arith.addf %14, %15 : vector<16x1xf32>
    %17 = math.rsqrt %16 : vector<16x1xf32>
    %18 = vector.broadcast %7 : vector<16x1xf32> to vector<16x256xf32>
    %19 = arith.subf %1, %18 : vector<16x256xf32>
    %20 = vector.broadcast %17 : vector<16x1xf32> to vector<16x256xf32>
    %21 = arith.mulf %19, %20 : vector<16x256xf32>
    %22 = vector.broadcast %2 : vector<1x256xf32> to vector<16x256xf32>
    %23 = arith.mulf %21, %22 : vector<16x256xf32>
    %24 = vector.broadcast %3 : vector<1x256xf32> to vector<16x256xf32>
    %25 = arith.addf %23, %24 : vector<16x256xf32>
    %26 = arith.truncf %25 : vector<16x256xf32> to vector<16x256xbf16>
    %c0_10 = arith.constant 0 : index
    %c0_11 = arith.constant 0 : index
    %27 = vector.load %arg2[%c0_10, %c0_11] : memref<256x768xbf16, #tpu.memory_space<vmem>>, vector<256x768xbf16>
    %cst_12 = arith.constant dense<0.000000e+00> : vector<16x768xf32>
    %28 = tpu.matmul %26, %27, %cst_12 {dimension_numbers = #tpu.dot_dimension_numbers<[1], [0], [0], [1], [0, 0, 1, 1], [], []>} : vector<16x256xbf16>, vector<256x768xbf16>, vector<16x768xf32> -> vector<16x768xf32>
    %29 = arith.truncf %28 : vector<16x768xf32> to vector<16x768xbf16>
    %30 = vector.shape_cast %29 : vector<16x768xbf16> to vector<2x8x768xbf16>
    %31 = tpu.iota {dimensions = array<i32: 0>} : vector<8x8xi32>
    %32 = tpu.iota {dimensions = array<i32: 1>} : vector<8x8xi32>
    %33 = arith.cmpi sle, %32, %31 : vector<8x8xi32>
    %cst_13 = arith.constant 0.000000e+00 : f32
    %cst_14 = arith.constant -1.000000e+30 : f32
    %34 = vector.broadcast %cst_13 : f32 to vector<8x8xf32>
    %35 = vector.broadcast %cst_14 : f32 to vector<8x8xf32>
    %36 = arith.select %33, %34, %35 : vector<8x8xi1>, vector<8x8xf32>
    %37 = vector.shape_cast %36 : vector<8x8xf32> to vector<1x8x8xf32>
    %38 = vector.extract_strided_slice %30 {offsets = [0, 0, 0], sizes = [2, 8, 64], strides = [1, 1, 1]} : vector<2x8x768xbf16> to vector<2x8x64xbf16>
    %39 = vector.extract_strided_slice %30 {offsets = [0, 0, 256], sizes = [2, 8, 64], strides = [1, 1, 1]} : vector<2x8x768xbf16> to vector<2x8x64xbf16>
    %40 = vector.extract_strided_slice %30 {offsets = [0, 0, 512], sizes = [2, 8, 64], strides = [1, 1, 1]} : vector<2x8x768xbf16> to vector<2x8x64xbf16>
    "tpu.trace_start"() <{level = 10 : i32, message = "bqd,bkd->bqk"}> : () -> ()
    %cst_15 = arith.constant dense<0.000000e+00> : vector<2x8x8xf32>
    %41 = tpu.matmul %38, %39, %cst_15 {dimension_numbers = #tpu.dot_dimension_numbers<[2], [2], [1], [1], [0, 0, 0, 1, 1, 1], [0], [0]>} : vector<2x8x64xbf16>, vector<2x8x64xbf16>, vector<2x8x8xf32> -> vector<2x8x8xf32>
    "tpu.trace_stop"() : () -> ()
    %42 = vector.broadcast %37 : vector<1x8x8xf32> to vector<2x8x8xf32>
    %43 = arith.addf %41, %42 : vector<2x8x8xf32>
    %cst_16 = arith.constant dense<0xFF800000> : vector<2x8xf32>
    %44 = vector.multi_reduction <maximumf>, %43, %cst_16 [2] : vector<2x8x8xf32> to vector<2x8xf32>
    %45 = vector.shape_cast %44 : vector<2x8xf32> to vector<2x8x1xf32>
    %46 = vector.broadcast %45 : vector<2x8x1xf32> to vector<2x8x8xf32>
    %47 = arith.subf %43, %46 : vector<2x8x8xf32>
    %48 = math.exp %47 : vector<2x8x8xf32>
    %cst_17 = arith.constant dense<0.000000e+00> : vector<2x8xf32>
    %49 = vector.multi_reduction <add>, %48, %cst_17 [2] : vector<2x8x8xf32> to vector<2x8xf32>
    %50 = vector.shape_cast %49 : vector<2x8xf32> to vector<2x8x1xf32>
    %51 = tpu.reciprocal %50 {approx = true} : vector<2x8x1xf32> -> vector<2x8x1xf32>
    %52 = vector.broadcast %51 : vector<2x8x1xf32> to vector<2x8x8xf32>
    %53 = arith.mulf %48, %52 : vector<2x8x8xf32>
    %54 = arith.truncf %53 : vector<2x8x8xf32> to vector<2x8x8xbf16>
    "tpu.trace_start"() <{level = 10 : i32, message = "bqk,bkd->bqd"}> : () -> ()
    %cst_18 = arith.constant dense<0.000000e+00> : vector<2x8x64xf32>
    %55 = tpu.matmul %54, %40, %cst_18 {dimension_numbers = #tpu.dot_dimension_numbers<[2], [1], [1], [2], [0, 0, 0, 1, 1, 2], [0], [0]>} : vector<2x8x8xbf16>, vector<2x8x64xbf16>, vector<2x8x64xf32> -> vector<2x8x64xf32>
    "tpu.trace_stop"() : () -> ()
    %56 = vector.extract_strided_slice %30 {offsets = [0, 0, 64], sizes = [2, 8, 64], strides = [1, 1, 1]} : vector<2x8x768xbf16> to vector<2x8x64xbf16>
    %57 = vector.extract_strided_slice %30 {offsets = [0, 0, 320], sizes = [2, 8, 64], strides = [1, 1, 1]} : vector<2x8x768xbf16> to vector<2x8x64xbf16>
    %58 = vector.extract_strided_slice %30 {offsets = [0, 0, 576], sizes = [2, 8, 64], strides = [1, 1, 1]} : vector<2x8x768xbf16> to vector<2x8x64xbf16>
    "tpu.trace_start"() <{level = 10 : i32, message = "bqd,bkd->bqk"}> : () -> ()
    %cst_19 = arith.constant dense<0.000000e+00> : vector<2x8x8xf32>
    %59 = tpu.matmul %56, %57, %cst_19 {dimension_numbers = #tpu.dot_dimension_numbers<[2], [2], [1], [1], [0, 0, 0, 1, 1, 1], [0], [0]>} : vector<2x8x64xbf16>, vector<2x8x64xbf16>, vector<2x8x8xf32> -> vector<2x8x8xf32>
    "tpu.trace_stop"() : () -> ()
    %60 = vector.broadcast %37 : vector<1x8x8xf32> to vector<2x8x8xf32>
    %61 = arith.addf %59, %60 : vector<2x8x8xf32>
    %cst_20 = arith.constant dense<0xFF800000> : vector<2x8xf32>
    %62 = vector.multi_reduction <maximumf>, %61, %cst_20 [2] : vector<2x8x8xf32> to vector<2x8xf32>
    %63 = vector.shape_cast %62 : vector<2x8xf32> to vector<2x8x1xf32>
    %64 = vector.broadcast %63 : vector<2x8x1xf32> to vector<2x8x8xf32>
    %65 = arith.subf %61, %64 : vector<2x8x8xf32>
    %66 = math.exp %65 : vector<2x8x8xf32>
    %cst_21 = arith.constant dense<0.000000e+00> : vector<2x8xf32>
    %67 = vector.multi_reduction <add>, %66, %cst_21 [2] : vector<2x8x8xf32> to vector<2x8xf32>
    %68 = vector.shape_cast %67 : vector<2x8xf32> to vector<2x8x1xf32>
    %69 = tpu.reciprocal %68 {approx = true} : vector<2x8x1xf32> -> vector<2x8x1xf32>
    %70 = vector.broadcast %69 : vector<2x8x1xf32> to vector<2x8x8xf32>
    %71 = arith.mulf %66, %70 : vector<2x8x8xf32>
    %72 = arith.truncf %71 : vector<2x8x8xf32> to vector<2x8x8xbf16>
    "tpu.trace_start"() <{level = 10 : i32, message = "bqk,bkd->bqd"}> : () -> ()
    %cst_22 = arith.constant dense<0.000000e+00> : vector<2x8x64xf32>
    %73 = tpu.matmul %72, %58, %cst_22 {dimension_numbers = #tpu.dot_dimension_numbers<[2], [1], [1], [2], [0, 0, 0, 1, 1, 2], [0], [0]>} : vector<2x8x8xbf16>, vector<2x8x64xbf16>, vector<2x8x64xf32> -> vector<2x8x64xf32>
    "tpu.trace_stop"() : () -> ()
    %74 = vector.extract_strided_slice %30 {offsets = [0, 0, 128], sizes = [2, 8, 64], strides = [1, 1, 1]} : vector<2x8x768xbf16> to vector<2x8x64xbf16>
    %75 = vector.extract_strided_slice %30 {offsets = [0, 0, 384], sizes = [2, 8, 64], strides = [1, 1, 1]} : vector<2x8x768xbf16> to vector<2x8x64xbf16>
    %76 = vector.extract_strided_slice %30 {offsets = [0, 0, 640], sizes = [2, 8, 64], strides = [1, 1, 1]} : vector<2x8x768xbf16> to vector<2x8x64xbf16>
    "tpu.trace_start"() <{level = 10 : i32, message = "bqd,bkd->bqk"}> : () -> ()
    %cst_23 = arith.constant dense<0.000000e+00> : vector<2x8x8xf32>
    %77 = tpu.matmul %74, %75, %cst_23 {dimension_numbers = #tpu.dot_dimension_numbers<[2], [2], [1], [1], [0, 0, 0, 1, 1, 1], [0], [0]>} : vector<2x8x64xbf16>, vector<2x8x64xbf16>, vector<2x8x8xf32> -> vector<2x8x8xf32>
    "tpu.trace_stop"() : () -> ()
    %78 = vector.broadcast %37 : vector<1x8x8xf32> to vector<2x8x8xf32>
    %79 = arith.addf %77, %78 : vector<2x8x8xf32>
    %cst_24 = arith.constant dense<0xFF800000> : vector<2x8xf32>
    %80 = vector.multi_reduction <maximumf>, %79, %cst_24 [2] : vector<2x8x8xf32> to vector<2x8xf32>
    %81 = vector.shape_cast %80 : vector<2x8xf32> to vector<2x8x1xf32>
    %82 = vector.broadcast %81 : vector<2x8x1xf32> to vector<2x8x8xf32>
    %83 = arith.subf %79, %82 : vector<2x8x8xf32>
    %84 = math.exp %83 : vector<2x8x8xf32>
    %cst_25 = arith.constant dense<0.000000e+00> : vector<2x8xf32>
    %85 = vector.multi_reduction <add>, %84, %cst_25 [2] : vector<2x8x8xf32> to vector<2x8xf32>
    %86 = vector.shape_cast %85 : vector<2x8xf32> to vector<2x8x1xf32>
    %87 = tpu.reciprocal %86 {approx = true} : vector<2x8x1xf32> -> vector<2x8x1xf32>
    %88 = vector.broadcast %87 : vector<2x8x1xf32> to vector<2x8x8xf32>
    %89 = arith.mulf %84, %88 : vector<2x8x8xf32>
    %90 = arith.truncf %89 : vector<2x8x8xf32> to vector<2x8x8xbf16>
    "tpu.trace_start"() <{level = 10 : i32, message = "bqk,bkd->bqd"}> : () -> ()
    %cst_26 = arith.constant dense<0.000000e+00> : vector<2x8x64xf32>
    %91 = tpu.matmul %90, %76, %cst_26 {dimension_numbers = #tpu.dot_dimension_numbers<[2], [1], [1], [2], [0, 0, 0, 1, 1, 2], [0], [0]>} : vector<2x8x8xbf16>, vector<2x8x64xbf16>, vector<2x8x64xf32> -> vector<2x8x64xf32>
    "tpu.trace_stop"() : () -> ()
    %92 = vector.extract_strided_slice %30 {offsets = [0, 0, 192], sizes = [2, 8, 64], strides = [1, 1, 1]} : vector<2x8x768xbf16> to vector<2x8x64xbf16>
    %93 = vector.extract_strided_slice %30 {offsets = [0, 0, 448], sizes = [2, 8, 64], strides = [1, 1, 1]} : vector<2x8x768xbf16> to vector<2x8x64xbf16>
    %94 = vector.extract_strided_slice %30 {offsets = [0, 0, 704], sizes = [2, 8, 64], strides = [1, 1, 1]} : vector<2x8x768xbf16> to vector<2x8x64xbf16>
    "tpu.trace_start"() <{level = 10 : i32, message = "bqd,bkd->bqk"}> : () -> ()
    %cst_27 = arith.constant dense<0.000000e+00> : vector<2x8x8xf32>
    %95 = tpu.matmul %92, %93, %cst_27 {dimension_numbers = #tpu.dot_dimension_numbers<[2], [2], [1], [1], [0, 0, 0, 1, 1, 1], [0], [0]>} : vector<2x8x64xbf16>, vector<2x8x64xbf16>, vector<2x8x8xf32> -> vector<2x8x8xf32>
    "tpu.trace_stop"() : () -> ()
    %96 = vector.broadcast %37 : vector<1x8x8xf32> to vector<2x8x8xf32>
    %97 = arith.addf %95, %96 : vector<2x8x8xf32>
    %cst_28 = arith.constant dense<0xFF800000> : vector<2x8xf32>
    %98 = vector.multi_reduction <maximumf>, %97, %cst_28 [2] : vector<2x8x8xf32> to vector<2x8xf32>
    %99 = vector.shape_cast %98 : vector<2x8xf32> to vector<2x8x1xf32>
    %100 = vector.broadcast %99 : vector<2x8x1xf32> to vector<2x8x8xf32>
    %101 = arith.subf %97, %100 : vector<2x8x8xf32>
    %102 = math.exp %101 : vector<2x8x8xf32>
    %cst_29 = arith.constant dense<0.000000e+00> : vector<2x8xf32>
    %103 = vector.multi_reduction <add>, %102, %cst_29 [2] : vector<2x8x8xf32> to vector<2x8xf32>
    %104 = vector.shape_cast %103 : vector<2x8xf32> to vector<2x8x1xf32>
    %105 = tpu.reciprocal %104 {approx = true} : vector<2x8x1xf32> -> vector<2x8x1xf32>
    %106 = vector.broadcast %105 : vector<2x8x1xf32> to vector<2x8x8xf32>
    %107 = arith.mulf %102, %106 : vector<2x8x8xf32>
    %108 = arith.truncf %107 : vector<2x8x8xf32> to vector<2x8x8xbf16>
    "tpu.trace_start"() <{level = 10 : i32, message = "bqk,bkd->bqd"}> : () -> ()
    %cst_30 = arith.constant dense<0.000000e+00> : vector<2x8x64xf32>
    %109 = tpu.matmul %108, %94, %cst_30 {dimension_numbers = #tpu.dot_dimension_numbers<[2], [1], [1], [2], [0, 0, 0, 1, 1, 2], [0], [0]>} : vector<2x8x8xbf16>, vector<2x8x64xbf16>, vector<2x8x64xf32> -> vector<2x8x64xf32>
    "tpu.trace_stop"() : () -> ()
    %110 = tpu.concatenate %55, %73, %91, %109 in 2 : vector<2x8x64xf32>, vector<2x8x64xf32>, vector<2x8x64xf32>, vector<2x8x64xf32> -> vector<2x8x256xf32>
    %111 = vector.shape_cast %110 : vector<2x8x256xf32> to vector<16x256xf32>
    %112 = arith.truncf %111 : vector<16x256xf32> to vector<16x256xbf16>
    %c0_31 = arith.constant 0 : index
    %c0_32 = arith.constant 0 : index
    %113 = vector.load %arg3[%c0_31, %c0_32] : memref<256x256xbf16, #tpu.memory_space<vmem>>, vector<256x256xbf16>
    %cst_33 = arith.constant dense<0.000000e+00> : vector<16x256xf32>
    %114 = tpu.matmul %112, %113, %cst_33 {dimension_numbers = #tpu.dot_dimension_numbers<[1], [0], [0], [1], [0, 0, 1, 1], [], []>} : vector<16x256xbf16>, vector<256x256xbf16>, vector<16x256xf32> -> vector<16x256xf32>
    %c0_34 = arith.constant 0 : index
    %c0_35 = arith.constant 0 : index
    %115 = vector.load %arg4[%c0_34, %c0_35] : memref<1x256xf32, #tpu.memory_space<vmem>>, vector<1x256xf32>
    %116 = vector.broadcast %115 : vector<1x256xf32> to vector<16x256xf32>
    %117 = arith.addf %114, %116 : vector<16x256xf32>
    %118 = arith.addf %1, %117 : vector<16x256xf32>
    %c0_36 = arith.constant 0 : index
    %c0_37 = arith.constant 0 : index
    %119 = vector.load %arg11[%c0_36, %c0_37] : memref<1x256xf32, #tpu.memory_space<vmem>>, vector<1x256xf32>
    %c0_38 = arith.constant 0 : index
    %c0_39 = arith.constant 0 : index
    %120 = vector.load %arg12[%c0_38, %c0_39] : memref<1x256xf32, #tpu.memory_space<vmem>>, vector<1x256xf32>
    %cst_40 = arith.constant dense<0.000000e+00> : vector<16xf32>
    %121 = vector.multi_reduction <add>, %118, %cst_40 [1] : vector<16x256xf32> to vector<16xf32>
    %122 = vector.shape_cast %121 : vector<16xf32> to vector<16x1xf32>
    %cst_41 = arith.constant 2.560000e+02 : f32
    %123 = vector.broadcast %cst_41 : f32 to vector<16x1xf32>
    %124 = arith.divf %122, %123 : vector<16x1xf32>
    %125 = vector.broadcast %124 : vector<16x1xf32> to vector<16x256xf32>
    %126 = arith.subf %118, %125 : vector<16x256xf32>
    %127 = arith.mulf %126, %126 : vector<16x256xf32>
    %cst_42 = arith.constant dense<0.000000e+00> : vector<16xf32>
    %128 = vector.multi_reduction <add>, %127, %cst_42 [1] : vector<16x256xf32> to vector<16xf32>
    %129 = vector.shape_cast %128 : vector<16xf32> to vector<16x1xf32>
    %cst_43 = arith.constant 2.560000e+02 : f32
    %130 = vector.broadcast %cst_43 : f32 to vector<16x1xf32>
    %131 = arith.divf %129, %130 : vector<16x1xf32>
    %cst_44 = arith.constant 9.99999974E-6 : f32
    %132 = vector.broadcast %cst_44 : f32 to vector<16x1xf32>
    %133 = arith.addf %131, %132 : vector<16x1xf32>
    %134 = math.rsqrt %133 : vector<16x1xf32>
    %135 = vector.broadcast %124 : vector<16x1xf32> to vector<16x256xf32>
    %136 = arith.subf %118, %135 : vector<16x256xf32>
    %137 = vector.broadcast %134 : vector<16x1xf32> to vector<16x256xf32>
    %138 = arith.mulf %136, %137 : vector<16x256xf32>
    %139 = vector.broadcast %119 : vector<1x256xf32> to vector<16x256xf32>
    %140 = arith.mulf %138, %139 : vector<16x256xf32>
    %141 = vector.broadcast %120 : vector<1x256xf32> to vector<16x256xf32>
    %142 = arith.addf %140, %141 : vector<16x256xf32>
    %143 = arith.truncf %142 : vector<16x256xf32> to vector<16x256xbf16>
    %c0_45 = arith.constant 0 : index
    %c0_46 = arith.constant 0 : index
    %144 = vector.load %arg7[%c0_45, %c0_46] : memref<256x1024xbf16, #tpu.memory_space<vmem>>, vector<256x1024xbf16>
    %cst_47 = arith.constant dense<0.000000e+00> : vector<16x1024xf32>
    %145 = tpu.matmul %143, %144, %cst_47 {dimension_numbers = #tpu.dot_dimension_numbers<[1], [0], [0], [1], [0, 0, 1, 1], [], []>} : vector<16x256xbf16>, vector<256x1024xbf16>, vector<16x1024xf32> -> vector<16x1024xf32>
    %c0_48 = arith.constant 0 : index
    %c0_49 = arith.constant 0 : index
    %146 = vector.load %arg8[%c0_48, %c0_49] : memref<1x1024xf32, #tpu.memory_space<vmem>>, vector<1x1024xf32>
    %147 = vector.broadcast %146 : vector<1x1024xf32> to vector<16x1024xf32>
    %148 = arith.addf %145, %147 : vector<16x1024xf32>
    %cst_50 = arith.constant 0.000000e+00 : f32
    %149 = vector.broadcast %cst_50 : f32 to vector<16x1024xf32>
    %150 = arith.maximumf %148, %149 : vector<16x1024xf32>
    %151 = arith.truncf %150 : vector<16x1024xf32> to vector<16x1024xbf16>
    %c0_51 = arith.constant 0 : index
    %c0_52 = arith.constant 0 : index
    %152 = vector.load %arg9[%c0_51, %c0_52] : memref<1024x256xbf16, #tpu.memory_space<vmem>>, vector<1024x256xbf16>
    %cst_53 = arith.constant dense<0.000000e+00> : vector<16x256xf32>
    %153 = tpu.matmul %151, %152, %cst_53 {dimension_numbers = #tpu.dot_dimension_numbers<[1], [0], [0], [1], [0, 0, 1, 1], [], []>} : vector<16x1024xbf16>, vector<1024x256xbf16>, vector<16x256xf32> -> vector<16x256xf32>
    %c0_54 = arith.constant 0 : index
    %c0_55 = arith.constant 0 : index
    %154 = vector.load %arg10[%c0_54, %c0_55] : memref<1x256xf32, #tpu.memory_space<vmem>>, vector<1x256xf32>
    %155 = vector.broadcast %154 : vector<1x256xf32> to vector<16x256xf32>
    %156 = arith.addf %153, %155 : vector<16x256xf32>
    %157 = arith.addf %118, %156 : vector<16x256xf32>
    %158 = vector.shape_cast %157 : vector<16x256xf32> to vector<2x8x256xf32>
    %c0_56 = arith.constant 0 : index
    %c0_57 = arith.constant 0 : index
    %c0_58 = arith.constant 0 : index
    %159 = vector.load %arg13[%c0_56, %c0_57, %c0_58] : memref<2x8x256xf32, #tpu.memory_space<vmem>>, vector<2x8x256xf32>
    tpu.vector_store %arg13[%c0_56, %c0_57, %c0_58], %158 {strides = array<i32>} : memref<2x8x256xf32, #tpu.memory_space<vmem>>, vector<2x8x256xf32>,
    return
  }
  func.func @transform_0(%arg0: i32) -> (i32, i32, i32) {
    %c0_i32 = arith.constant 0 : i32
    %c0_i32_0 = arith.constant 0 : i32
    %c0_i32_1 = arith.constant 0 : i32
    return %arg0, %c0_i32, %c0_i32_0 : i32, i32, i32
  }
  func.func @transform_1(%arg0: i32) -> (i32, i32) {
    %c0_i32 = arith.constant 0 : i32
    %c0_i32_0 = arith.constant 0 : i32
    %c0_i32_1 = arith.constant 0 : i32
    return %c0_i32, %c0_i32_0 : i32, i32
  }
  func.func @transform_2(%arg0: i32) -> (i32, i32) {
    %c0_i32 = arith.constant 0 : i32
    %c0_i32_0 = arith.constant 0 : i32
    %c0_i32_1 = arith.constant 0 : i32
    return %c0_i32, %c0_i32_0 : i32, i32
  }
  func.func @transform_3(%arg0: i32) -> (i32, i32) {
    %c0_i32 = arith.constant 0 : i32
    %c0_i32_0 = arith.constant 0 : i32
    %c0_i32_1 = arith.constant 0 : i32
    return %c0_i32, %c0_i32_0 : i32, i32
  }
  func.func @transform_4(%arg0: i32) -> (i32, i32) {
    %c0_i32 = arith.constant 0 : i32
    %c0_i32_0 = arith.constant 0 : i32
    %c0_i32_1 = arith.constant 0 : i32
    return %c0_i32, %c0_i32_0 : i32, i32
  }
  func.func @transform_5(%arg0: i32) -> (i32, i32) {
    %c0_i32 = arith.constant 0 : i32
    %c0_i32_0 = arith.constant 0 : i32
    %c0_i32_1 = arith.constant 0 : i32
    return %c0_i32, %c0_i32_0 : i32, i32
  }
  func.func @transform_6(%arg0: i32) -> (i32, i32) {
    %c0_i32 = arith.constant 0 : i32
    %c0_i32_0 = arith.constant 0 : i32
    %c0_i32_1 = arith.constant 0 : i32
    return %c0_i32, %c0_i32_0 : i32, i32
  }
  func.func @transform_7(%arg0: i32) -> (i32, i32) {
    %c0_i32 = arith.constant 0 : i32
    %c0_i32_0 = arith.constant 0 : i32
    %c0_i32_1 = arith.constant 0 : i32
    return %c0_i32, %c0_i32_0 : i32, i32
  }
  func.func @transform_8(%arg0: i32) -> (i32, i32) {
    %c0_i32 = arith.constant 0 : i32
    %c0_i32_0 = arith.constant 0 : i32
    %c0_i32_1 = arith.constant 0 : i32
    return %c0_i32, %c0_i32_0 : i32, i32
  }
  func.func @transform_9(%arg0: i32) -> (i32, i32) {
    %c0_i32 = arith.constant 0 : i32
    %c0_i32_0 = arith.constant 0 : i32
    %c0_i32_1 = arith.constant 0 : i32
    return %c0_i32, %c0_i32_0 : i32, i32
  }
  func.func @transform_10(%arg0: i32) -> (i32, i32) {
    %c0_i32 = arith.constant 0 : i32
    %c0_i32_0 = arith.constant 0 : i32
    %c0_i32_1 = arith.constant 0 : i32
    return %c0_i32, %c0_i32_0 : i32, i32
  }
  func.func @transform_11(%arg0: i32) -> (i32, i32) {
    %c0_i32 = arith.constant 0 : i32
    %c0_i32_0 = arith.constant 0 : i32
    %c0_i32_1 = arith.constant 0 : i32
    return %c0_i32, %c0_i32_0 : i32, i32
  }
  func.func @transform_12(%arg0: i32) -> (i32, i32, i32) {
    %c0_i32 = arith.constant 0 : i32
    %c0_i32_0 = arith.constant 0 : i32
    %c0_i32_1 = arith.constant 0 : i32
    return %arg0, %c0_i32, %c0_i32_0 : i32, i32, i32
  }
}

</mosaic_0001>

<llo_original>
// kernel: tpu_custom_call.1
$region0: #{tpu_custom_call.1}
  #allocation0 [shape = 'u32[]', space=smem, size = 0x4, offset = 0x4, fixed_abs, tag = 'smem constant byte address 0x4 - core index']
  #allocation1 [shape = 'u32[72,128]{1,0:T(1,128)}', space=vmem, size = 0x9000, scoped, tag = 'internal scratch']
  %s0 = inlined_call_operand.hbm [shape: f32[2,8,256], index: 0, kind: input, shape index: {}]
  %s1 = inlined_call_operand.hbm [shape: bf16[256,768], index: 1, kind: input, shape index: {}]
  %s2 = inlined_call_operand.hbm [shape: bf16[256,256], index: 2, kind: input, shape index: {}]
  %s3 = inlined_call_operand.vmem [shape: f32[1,256], index: 3, kind: input, shape index: {}]
  %s4 = inlined_call_operand.hbm [shape: f32[1,256], index: 4, kind: input, shape index: {}]
  %s5 = inlined_call_operand.vmem [shape: f32[1,256], index: 5, kind: input, shape index: {}]
  %s6 = inlined_call_operand.hbm [shape: bf16[256,1024], index: 6, kind: input, shape index: {}]
  %s7 = inlined_call_operand.hbm [shape: f32[1,1024], index: 7, kind: input, shape index: {}]
  %s8 = inlined_call_operand.hbm [shape: bf16[1024,256], index: 8, kind: input, shape index: {}]
  %s9 = inlined_call_operand.vmem [shape: f32[1,256], index: 9, kind: input, shape index: {}]
  %s10 = inlined_call_operand.vmem [shape: f32[1,256], index: 10, kind: input, shape index: {}]
  %s11 = inlined_call_operand.vmem [shape: f32[1,256], index: 11, kind: input, shape index: {}]
  %s12 = inlined_call_operand.hbm [shape: f32[2,8,256], index: 12, kind: output, shape index: {}]
  %s13 = sld [smem:[#allocation0]]
  $region86: #{tpu_custom_call.1} parent=0
    _
  %s15 = ssub.s32 1, %s13
  %s16 = scalar_select 0, %s15, %s13
  $region1: #{tpu_custom_call.1} parent=0
    #allocation2 [shape = 'u8[16384]{0}', space=vmem, size = 0x4000, scoped, tag = 'input window, operand 0, single buffered']
    #allocation3 [shape = 's32[1]{0}', space=sflag, size = 0x4, scoped, tag = 'scoped memory for tpu_custom_call.1']
    #allocation4 [shape = 's32[1]{0}', space=sflag, size = 0x4, scoped, tag = 'scoped memory for tpu_custom_call.1']
    #allocation5 [shape = 'u8[393216]{0}', space=vmem, size = 0x60000, scoped, tag = 'input window, operand 1, single buffered']
    #allocation6 [shape = 's32[1]{0}', space=sflag, size = 0x4, scoped, tag = 'scoped memory for tpu_custom_call.1']
    #allocation7 [shape = 'u8[131072]{0}', space=vmem, size = 0x20000, scoped, tag = 'input window, operand 2, single buffered']
    #allocation8 [shape = 'u8[1024]{0}', space=vmem, size = 0x400, scoped, tag = 'input window, operand 4, single buffered']
    #allocation9 [shape = 's32[1]{0}', space=sflag, size = 0x4, scoped, tag = 'scoped memory for tpu_custom_call.1']
    #allocation10 [shape = 'u8[524288]{0}', space=vmem, size = 0x80000, scoped, tag = 'input window, operand 6, single buffered']
    #allocation11 [shape = 'u8[4096]{0}', space=vmem, size = 0x1000, scoped, tag = 'input window, operand 7, single buffered']
    #allocation12 [shape = 's32[1]{0}', space=sflag, size = 0x4, scoped, tag = 'scoped memory for tpu_custom_call.1']
    #allocation13 [shape = 'u8[524288]{0}', space=vmem, size = 0x80000, scoped, tag = 'input window, operand 8, single buffered']
    #allocation14 [shape = 'u8[16384]{0}', space=vmem, size = 0x4000, scoped, tag = 'output window, operand 0, single buffered']
    %17 = vsyncpa [#allocation3], 0
    %18 = vsyncpa [#allocation6], 0
    %19 = vsyncpa [#allocation9], 0
    %20 = vsyncpa [#allocation12], 0
    %21 = vsyncpa [#allocation4], 0
    // Predicated region
    $region2: #{tpu_custom_call.1} parent=1 // pred_check
      _
    $region3: #{tpu_custom_call.1} parent=1 // pred_check_branch
      %23 = sbr.rel (0) target = $region5
    $region4: #{tpu_custom_call.1} parent=1 // pred_region
      %25 = vsyncadd [#allocation3], 0
      %s26 = sshll.u32 %s0, 4
      %s27 = int_to_ptr.hbm [resolvable:$true] %s26
      %s28 = sshll.u32 [#allocation2], 4
      %s29 = int_to_ptr.vmem [resolvable:$true] %s28
      %34 = dma.hbm_to_vmem [thread:$0]  %s27, 512, %s29, [#allocation3], 256, 256, 16
    $region5: #{tpu_custom_call.1} parent=1 // pred_fallthru
      _
    // Predicated region
    $region6: #{tpu_custom_call.1} parent=1 // pred_check
      _
    $region7: #{tpu_custom_call.1} parent=1 // pred_check_branch
      %36 = sbr.rel (0) target = $region9
    $region8: #{tpu_custom_call.1} parent=1 // pred_region
      %38 = vsyncadd [#allocation6], 0
      %s39 = sshll.u32 %s1, 4
      %s40 = int_to_ptr.hbm [resolvable:$true] %s39
      %s41 = sshll.u32 [#allocation5], 4
      %s42 = int_to_ptr.vmem [resolvable:$true] %s41
      %47 = dma.hbm_to_vmem [thread:$0]  %s40, 12288, %s42, [#allocation6], 384, 384, 24
    $region9: #{tpu_custom_call.1} parent=1 // pred_fallthru
      _
    // Predicated region
    $region10: #{tpu_custom_call.1} parent=1 // pred_check
      _
    $region11: #{tpu_custom_call.1} parent=1 // pred_check_branch
      %49 = sbr.rel (0) target = $region13
    $region12: #{tpu_custom_call.1} parent=1 // pred_region
      %51 = vsyncadd [#allocation6], 0
      %s52 = sshll.u32 %s2, 4
      %s53 = int_to_ptr.hbm [resolvable:$true] %s52
      %s54 = sshll.u32 [#allocation7], 4
      %s55 = int_to_ptr.vmem [resolvable:$true] %s54
      %60 = dma.hbm_to_vmem [thread:$0]  %s53, 4096, %s55, [#allocation6], 128, 128, 8
    $region13: #{tpu_custom_call.1} parent=1 // pred_fallthru
      _
    // Predicated region
    $region14: #{tpu_custom_call.1} parent=1 // pred_check
      _
    $region15: #{tpu_custom_call.1} parent=1 // pred_check_branch
      %62 = sbr.rel (0) target = $region17
    $region16: #{tpu_custom_call.1} parent=1 // pred_region
      _
    $region17: #{tpu_custom_call.1} parent=1 // pred_fallthru
      _
    // Predicated region
    $region18: #{tpu_custom_call.1} parent=1 // pred_check
      _
    $region19: #{tpu_custom_call.1} parent=1 // pred_check_branch
      %64 = sbr.rel (0) target = $region21
    $region20: #{tpu_custom_call.1} parent=1 // pred_region
      %66 = vsyncadd [#allocation9], 0
      %s68 = sshll.u32 %s4, 4
      %s69 = int_to_ptr.hbm [resolvable:$true] %s68
      %s70 = sshll.u32 [#allocation8], 4
      %s71 = int_to_ptr.vmem [resolvable:$true] %s70
      %73 = dma.hbm_to_vmem [thread:$0]  %s69, 32, %s71, [#allocation9]
    $region21: #{tpu_custom_call.1} parent=1 // pred_fallthru
      _
    // Predicated region
    $region22: #{tpu_custom_call.1} parent=1 // pred_check
      _
    $region23: #{tpu_custom_call.1} parent=1 // pred_check_branch
      %75 = sbr.rel (0) target = $region25
    $region24: #{tpu_custom_call.1} parent=1 // pred_region
      _
    $region25: #{tpu_custom_call.1} parent=1 // pred_fallthru
      _
    // Predicated region
    $region26: #{tpu_custom_call.1} parent=1 // pred_check
      _
    $region27: #{tpu_custom_call.1} parent=1 // pred_check_branch
      %77 = sbr.rel (0) target = $region29
    $region28: #{tpu_custom_call.1} parent=1 // pred_region
      %79 = vsyncadd [#allocation9], 0
      %s80 = sshll.u32 %s6, 4
      %s81 = int_to_ptr.hbm [resolvable:$true] %s80
      %s82 = sshll.u32 [#allocation10], 4
      %s83 = int_to_ptr.vmem [resolvable:$true] %s82
      %88 = dma.hbm_to_vmem [thread:$0]  %s81, 16384, %s83, [#allocation9], 512, 512, 32
    $region29: #{tpu_custom_call.1} parent=1 // pred_fallthru
      _
    // Predicated region
    $region30: #{tpu_custom_call.1} parent=1 // pred_check
      _
    $region31: #{tpu_custom_call.1} parent=1 // pred_check_branch
      %90 = sbr.rel (0) target = $region33
    $region32: #{tpu_custom_call.1} parent=1 // pred_region
      %92 = vsyncadd [#allocation12], 0
      %s94 = sshll.u32 %s7, 4
      %s95 = int_to_ptr.hbm [resolvable:$true] %s94
      %s96 = sshll.u32 [#allocation11], 4
      %s97 = int_to_ptr.vmem [resolvable:$true] %s96
      %99 = dma.hbm_to_vmem [thread:$0]  %s95, 128, %s97, [#allocation12]
    $region33: #{tpu_custom_call.1} parent=1 // pred_fallthru
      _
    // Predicated region
    $region34: #{tpu_custom_call.1} parent=1 // pred_check
      _
    $region35: #{tpu_custom_call.1} parent=1 // pred_check_branch
      %101 = sbr.rel (0) target = $region37
    $region36: #{tpu_custom_call.1} parent=1 // pred_region
      %103 = vsyncadd [#allocation12], 0
      %s104 = sshll.u32 %s8, 4
      %s105 = int_to_ptr.hbm [resolvable:$true] %s104
      %s106 = sshll.u32 [#allocation13], 4
      %s107 = int_to_ptr.vmem [resolvable:$true] %s106
      %112 = dma.hbm_to_vmem [thread:$0]  %s105, 16384, %s107, [#allocation12], 128, 128, 8
    $region37: #{tpu_custom_call.1} parent=1 // pred_fallthru
      _
    // Predicated region
    $region38: #{tpu_custom_call.1} parent=1 // pred_check
      _
    $region39: #{tpu_custom_call.1} parent=1 // pred_check_branch
      %114 = sbr.rel (0) target = $region41
    $region40: #{tpu_custom_call.1} parent=1 // pred_region
      _
    $region41: #{tpu_custom_call.1} parent=1 // pred_fallthru
      _
    // Predicated region
    $region42: #{tpu_custom_call.1} parent=1 // pred_check
      _
    $region43: #{tpu_custom_call.1} parent=1 // pred_check_branch
      %116 = sbr.rel (0) target = $region45
    $region44: #{tpu_custom_call.1} parent=1 // pred_region
      _
    $region45: #{tpu_custom_call.1} parent=1 // pred_fallthru
      _
    // Predicated region
    $region46: #{tpu_custom_call.1} parent=1 // pred_check
      _
    $region47: #{tpu_custom_call.1} parent=1 // pred_check_branch
      %118 = sbr.rel (0) target = $region49
    $region48: #{tpu_custom_call.1} parent=1 // pred_region
      _
    $region49: #{tpu_custom_call.1} parent=1 // pred_fallthru
      _
    // Predicated region
    $region50: #{tpu_custom_call.1} parent=1 // pred_check
      _
    $region51: #{tpu_custom_call.1} parent=1 // pred_check_branch
      %120 = sbr.rel (0) target = $region53
    $region52: #{tpu_custom_call.1} parent=1 // pred_region
      %122 = dma.done [#allocation3], 512
    $region53: #{tpu_custom_call.1} parent=1 // pred_fallthru
      _
    // Predicated region
    $region54: #{tpu_custom_call.1} parent=1 // pred_check
      _
    $region55: #{tpu_custom_call.1} parent=1 // pred_check_branch
      %124 = sbr.rel (0) target = $region57
    $region56: #{tpu_custom_call.1} parent=1 // pred_region
      %126 = dma.done [#allocation6], 12288
    $region57: #{tpu_custom_call.1} parent=1 // pred_fallthru
      _
    // Predicated region
    $region58: #{tpu_custom_call.1} parent=1 // pred_check
      _
    $region59: #{tpu_custom_call.1} parent=1 // pred_check_branch
      %128 = sbr.rel (0) target = $region61
    $region60: #{tpu_custom_call.1} parent=1 // pred_region
      %130 = dma.done [#allocation6], 4096
    $region61: #{tpu_custom_call.1} parent=1 // pred_fallthru
      _
    // Predicated region
    $region62: #{tpu_custom_call.1} parent=1 // pred_check
      _
    $region63: #{tpu_custom_call.1} parent=1 // pred_check_branch
      %132 = sbr.rel (0) target = $region65
    $region64: #{tpu_custom_call.1} parent=1 // pred_region
      %134 = dma.done [#allocation9], 32
    $region65: #{tpu_custom_call.1} parent=1 // pred_fallthru
      _
    // Predicated region
    $region66: #{tpu_custom_call.1} parent=1 // pred_check
      _
    $region67: #{tpu_custom_call.1} parent=1 // pred_check_branch
      %136 = sbr.rel (0) target = $region69
    $region68: #{tpu_custom_call.1} parent=1 // pred_region
      %138 = dma.done [#allocation9], 16384
    $region69: #{tpu_custom_call.1} parent=1 // pred_fallthru
      _
    // Predicated region
    $region70: #{tpu_custom_call.1} parent=1 // pred_check
      _
    $region71: #{tpu_custom_call.1} parent=1 // pred_check_branch
      %140 = sbr.rel (0) target = $region73
    $region72: #{tpu_custom_call.1} parent=1 // pred_region
      %142 = dma.done [#allocation12], 128
    $region73: #{tpu_custom_call.1} parent=1 // pred_fallthru
      _
    // Predicated region
    $region74: #{tpu_custom_call.1} parent=1 // pred_check
      _
    $region75: #{tpu_custom_call.1} parent=1 // pred_check_branch
      %144 = sbr.rel (0) target = $region77
    $region76: #{tpu_custom_call.1} parent=1 // pred_region
      %146 = dma.done [#allocation12], 16384
    $region77: #{tpu_custom_call.1} parent=1 // pred_fallthru
      _
    %v148 = vld [vmem:[#allocation2] sm:$0xff]
    %v149 = vld [vmem:[#allocation2 + $0x8] sm:$0xff]
    %v150 = vld [vmem:[#allocation2 + $0x10] sm:$0xff]
    %v151 = vld [vmem:[#allocation2 + $0x18] sm:$0xff]
    %v152 = vld [vmem:[#allocation8] sm:$0x3]
    %v153 = vld [vmem:[%s5] sm:$0x3]
    %v154 = vadd.f32 %v148, %v149
    %155 = vadd.xlane.f32.xlu0 %v154
    %v156 = vpop.xlane.xlu0 %155
    %v157 = vadd.f32 %v150, %v151
    %158 = vadd.xlane.f32.xlu0 %v157
    %v159 = vpop.xlane.xlu0 %158
    %v160 = vrcp.pop 256.0
    %v161 = vmul.f32 256.0, %v160
    %v162 = vsub.f32 1.0, %v161
    %v163 = vmul.f32 %v160, %v162
    %v164 = vadd.f32 %v160, %v163
    %vm165 = vweird.f32 %v160
    %v166 = vsel %vm165, %v160, %v164
    %v167 = vmul.f32 %v156, %v166
    %v168 = vmul.f32 %v159, %v166
    %v169 = vsub.f32 %v148, %v167
    %v170 = vsub.f32 %v149, %v167
    %v171 = vsub.f32 %v150, %v168
    %v172 = vsub.f32 %v151, %v168
    %v173 = vmul.f32 %v169, %v169
    %v174 = vmul.f32 %v170, %v170
    %v175 = vmul.f32 %v171, %v171
    %v176 = vmul.f32 %v172, %v172
    %v177 = vadd.f32 %v173, %v174
    %178 = vadd.xlane.f32.xlu0 %v177
    %v179 = vpop.xlane.xlu0 %178
    %v180 = vadd.f32 %v175, %v176
    %181 = vadd.xlane.f32.xlu0 %v180
    %v182 = vpop.xlane.xlu0 %181
    %v183 = vmul.f32 %v179, %v166
    %v184 = vmul.f32 %v182, %v166
    %v185 = vadd.f32 %v183, 1e-05
    %v186 = vadd.f32 %v184, 1e-05
    %v187 = vrsqrt.pop %v185
    %v188 = vmul.f32 %v187, %v185
    %v189 = vmul.f32 %v188, %v187
    %v190 = vmul.f32 0.5, %v189
    %v191 = vsub.f32 1.5, %v190
    %v192 = vmul.f32 %v187, %v191
    %vm193 = vweird.f32 %v185
    %vm194 = vweird.f32 %v187
    %vm195 = vmor %vm193, %vm194
    %v196 = vsel %vm195, %v187, %v192
    %v197 = vrsqrt.pop %v186
    %v198 = vmul.f32 %v197, %v186
    %v199 = vmul.f32 %v198, %v197
    %v200 = vmul.f32 0.5, %v199
    %v201 = vsub.f32 1.5, %v200
    %v202 = vmul.f32 %v197, %v201
    %vm203 = vweird.f32 %v186
    %vm204 = vweird.f32 %v197
    %vm205 = vmor %vm203, %vm204
    %v206 = vsel %vm205, %v197, %v202
    %v207 = vmul.f32 %v169, %v196
    %v208 = vmul.f32 %v170, %v196
    %v209 = vmul.f32 %v171, %v206
    %v210 = vmul.f32 %v172, %v206
    %v212 = vperm.slane %v152, 0
    %v213 = vperm.slane %v152, 1
    %v216 = vmul.f32 %v207, %v212
    %v217 = vmul.f32 %v208, %v213
    %v218 = vmul.f32 %v209, %v212
    %v219 = vmul.f32 %v210, %v213
    %v221 = vperm.slane %v153, 0
    %v222 = vperm.slane %v153, 1
    %v225 = vadd.f32 %v216, %v221
    %v226 = vadd.f32 %v217, %v222
    %v227 = vadd.f32 %v218, %v221
    %v228 = vadd.f32 %v219, %v222
    %v229 = vpack.c.bf16 %v227, %v225
    %v230 = vpack.c.bf16 %v228, %v226
    %v231 = vld [vmem:[#allocation5] sm:$0xff]
    %v232 = vld [vmem:[#allocation5 + $0x8] sm:$0xff]
    %v233 = vld [vmem:[#allocation5 + $0x10] sm:$0xff]
    %v234 = vld [vmem:[#allocation5 + $0x18] sm:$0xff]
    %v235 = vld [vmem:[#allocation5 + $0x20] sm:$0xff]
    %v236 = vld [vmem:[#allocation5 + $0x28] sm:$0xff]
    %v237 = vld [vmem:[#allocation5 + $0x30] sm:$0xff]
    %v238 = vld [vmem:[#allocation5 + $0x38] sm:$0xff]
    %v239 = vld [vmem:[#allocation5 + $0x40] sm:$0xff]
    %v240 = vld [vmem:[#allocation5 + $0x48] sm:$0xff]
    %v241 = vld [vmem:[#allocation5 + $0x50] sm:$0xff]
    %v242 = vld [vmem:[#allocation5 + $0x58] sm:$0xff]
    %v243 = vld [vmem:[#allocation5 + $0x60] sm:$0xff]
    %v244 = vld [vmem:[#allocation5 + $0x68] sm:$0xff]
    %v245 = vld [vmem:[#allocation5 + $0x70] sm:$0xff]
    %v246 = vld [vmem:[#allocation5 + $0x78] sm:$0xff]
    %v247 = vld [vmem:[#allocation5 + $0x80] sm:$0xff]
    %v248 = vld [vmem:[#allocation5 + $0x88] sm:$0xff]
    %v249 = vld [vmem:[#allocation5 + $0x90] sm:$0xff]
    %v250 = vld [vmem:[#allocation5 + $0x98] sm:$0xff]
    %v251 = vld [vmem:[#allocation5 + $0xa0] sm:$0xff]
    %v252 = vld [vmem:[#allocation5 + $0xa8] sm:$0xff]
    %v253 = vld [vmem:[#allocation5 + $0xb0] sm:$0xff]
    %v254 = vld [vmem:[#allocation5 + $0xb8] sm:$0xff]
    %v255 = vld [vmem:[#allocation5 + $0xc0] sm:$0xff]
    %v256 = vld [vmem:[#allocation5 + $0xc8] sm:$0xff]
    %v257 = vld [vmem:[#allocation5 + $0xd0] sm:$0xff]
    %v258 = vld [vmem:[#allocation5 + $0xd8] sm:$0xff]
    %v259 = vld [vmem:[#allocation5 + $0xe0] sm:$0xff]
    %v260 = vld [vmem:[#allocation5 + $0xe8] sm:$0xff]
    %v261 = vld [vmem:[#allocation5 + $0xf0] sm:$0xff]
    %v262 = vld [vmem:[#allocation5 + $0xf8] sm:$0xff]
    %v263 = vld [vmem:[#allocation5 + $0x100] sm:$0xff]
    %v264 = vld [vmem:[#allocation5 + $0x108] sm:$0xff]
    %v265 = vld [vmem:[#allocation5 + $0x110] sm:$0xff]
    %v266 = vld [vmem:[#allocation5 + $0x118] sm:$0xff]
    %v267 = vld [vmem:[#allocation5 + $0x120] sm:$0xff]
    %v268 = vld [vmem:[#allocation5 + $0x128] sm:$0xff]
    %v269 = vld [vmem:[#allocation5 + $0x130] sm:$0xff]
    %v270 = vld [vmem:[#allocation5 + $0x138] sm:$0xff]
    %v271 = vld [vmem:[#allocation5 + $0x140] sm:$0xff]
    %v272 = vld [vmem:[#allocation5 + $0x148] sm:$0xff]
    %v273 = vld [vmem:[#allocation5 + $0x150] sm:$0xff]
    %v274 = vld [vmem:[#allocation5 + $0x158] sm:$0xff]
    %v275 = vld [vmem:[#allocation5 + $0x160] sm:$0xff]
    %v276 = vld [vmem:[#allocation5 + $0x168] sm:$0xff]
    %v277 = vld [vmem:[#allocation5 + $0x170] sm:$0xff]
    %v278 = vld [vmem:[#allocation5 + $0x178] sm:$0xff]
    %v279 = vld [vmem:[#allocation5 + $0x180] sm:$0xff]
    %v280 = vld [vmem:[#allocation5 + $0x188] sm:$0xff]
    %v281 = vld [vmem:[#allocation5 + $0x190] sm:$0xff]
    %v282 = vld [vmem:[#allocation5 + $0x198] sm:$0xff]
    %v283 = vld [vmem:[#allocation5 + $0x1a0] sm:$0xff]
    %v284 = vld [vmem:[#allocation5 + $0x1a8] sm:$0xff]
    %v285 = vld [vmem:[#allocation5 + $0x1b0] sm:$0xff]
    %v286 = vld [vmem:[#allocation5 + $0x1b8] sm:$0xff]
    %v287 = vld [vmem:[#allocation5 + $0x1c0] sm:$0xff]
    %v288 = vld [vmem:[#allocation5 + $0x1c8] sm:$0xff]
    %v289 = vld [vmem:[#allocation5 + $0x1d0] sm:$0xff]
    %v290 = vld [vmem:[#allocation5 + $0x1d8] sm:$0xff]
    %v291 = vld [vmem:[#allocation5 + $0x1e0] sm:$0xff]
    %v292 = vld [vmem:[#allocation5 + $0x1e8] sm:$0xff]
    %v293 = vld [vmem:[#allocation5 + $0x1f0] sm:$0xff]
    %v294 = vld [vmem:[#allocation5 + $0x1f8] sm:$0xff]
    %v295 = vld [vmem:[#allocation5 + $0x200] sm:$0xff]
    %v296 = vld [vmem:[#allocation5 + $0x208] sm:$0xff]
    %v297 = vld [vmem:[#allocation5 + $0x210] sm:$0xff]
    %v298 = vld [vmem:[#allocation5 + $0x218] sm:$0xff]
    %v299 = vld [vmem:[#allocation5 + $0x220] sm:$0xff]
    %v300 = vld [vmem:[#allocation5 + $0x228] sm:$0xff]
    %v301 = vld [vmem:[#allocation5 + $0x230] sm:$0xff]
    %v302 = vld [vmem:[#allocation5 + $0x238] sm:$0xff]
    %v303 = vld [vmem:[#allocation5 + $0x240] sm:$0xff]
    %v304 = vld [vmem:[#allocation5 + $0x248] sm:$0xff]
    %v305 = vld [vmem:[#allocation5 + $0x250] sm:$0xff]
    %v306 = vld [vmem:[#allocation5 + $0x258] sm:$0xff]
    %v307 = vld [vmem:[#allocation5 + $0x260] sm:$0xff]
    %v308 = vld [vmem:[#allocation5 + $0x268] sm:$0xff]
    %v309 = vld [vmem:[#allocation5 + $0x270] sm:$0xff]
    %v310 = vld [vmem:[#allocation5 + $0x278] sm:$0xff]
    %v311 = vld [vmem:[#allocation5 + $0x280] sm:$0xff]
    %v312 = vld [vmem:[#allocation5 + $0x288] sm:$0xff]
    %v313 = vld [vmem:[#allocation5 + $0x290] sm:$0xff]
    %v314 = vld [vmem:[#allocation5 + $0x298] sm:$0xff]
    %v315 = vld [vmem:[#allocation5 + $0x2a0] sm:$0xff]
    %v316 = vld [vmem:[#allocation5 + $0x2a8] sm:$0xff]
    %v317 = vld [vmem:[#allocation5 + $0x2b0] sm:$0xff]
    %v318 = vld [vmem:[#allocation5 + $0x2b8] sm:$0xff]
    %v319 = vld [vmem:[#allocation5 + $0x2c0] sm:$0xff]
    %v320 = vld [vmem:[#allocation5 + $0x2c8] sm:$0xff]
    %v321 = vld [vmem:[#allocation5 + $0x2d0] sm:$0xff]
    %v322 = vld [vmem:[#allocation5 + $0x2d8] sm:$0xff]
    %v323 = vld [vmem:[#allocation5 + $0x2e0] sm:$0xff]
    %v324 = vld [vmem:[#allocation5 + $0x2e8] sm:$0xff]
    %v325 = vld [vmem:[#allocation5 + $0x2f0] sm:$0xff]
    %v326 = vld [vmem:[#allocation5 + $0x2f8] sm:$0xff]
    %v423 = vunpack.c.l.b16 %v231
    %v424 = vunpack.c.h.b16 %v231
    %v425 = vunpack.c.l.b16 %v232
    %v426 = vunpack.c.h.b16 %v232
    %v427 = vunpack.c.l.b16 %v233
    %v428 = vunpack.c.h.b16 %v233
    %v429 = vunpack.c.l.b16 %v234
    %v430 = vunpack.c.h.b16 %v234
    %v431 = vunpack.c.l.b16 %v235
    %v432 = vunpack.c.h.b16 %v235
    %v433 = vunpack.c.l.b16 %v236
    %v434 = vunpack.c.h.b16 %v236
    %v435 = vunpack.c.l.b16 %v237
    %v436 = vunpack.c.h.b16 %v237
    %v437 = vunpack.c.l.b16 %v238
    %v438 = vunpack.c.h.b16 %v238
    %v439 = vunpack.c.l.b16 %v239
    %v440 = vunpack.c.h.b16 %v239
    %v441 = vunpack.c.l.b16 %v240
    %v442 = vunpack.c.h.b16 %v240
    %v443 = vunpack.c.l.b16 %v241
    %v444 = vunpack.c.h.b16 %v241
    %v445 = vunpack.c.l.b16 %v242
    %v446 = vunpack.c.h.b16 %v242
    %v447 = vunpack.c.l.b16 %v243
    %v448 = vunpack.c.h.b16 %v243
    %v449 = vunpack.c.l.b16 %v244
    %v450 = vunpack.c.h.b16 %v244
    %v451 = vunpack.c.l.b16 %v245
    %v452 = vunpack.c.h.b16 %v245
    %v453 = vunpack.c.l.b16 %v246
    %v454 = vunpack.c.h.b16 %v246
    %v455 = vunpack.c.l.b16 %v247
    %v456 = vunpack.c.h.b16 %v247
    %v457 = vunpack.c.l.b16 %v248
    %v458 = vunpack.c.h.b16 %v248
    %v459 = vunpack.c.l.b16 %v249
    %v460 = vunpack.c.h.b16 %v249
    %v461 = vunpack.c.l.b16 %v250
    %v462 = vunpack.c.h.b16 %v250
    %v463 = vunpack.c.l.b16 %v251
    %v464 = vunpack.c.h.b16 %v251
    %v465 = vunpack.c.l.b16 %v252
    %v466 = vunpack.c.h.b16 %v252
    %v467 = vunpack.c.l.b16 %v253
    %v468 = vunpack.c.h.b16 %v253
    %v469 = vunpack.c.l.b16 %v254
    %v470 = vunpack.c.h.b16 %v254
    %v471 = vunpack.c.l.b16 %v255
    %v472 = vunpack.c.h.b16 %v255
    %v473 = vunpack.c.l.b16 %v256
    %v474 = vunpack.c.h.b16 %v256
    %v475 = vunpack.c.l.b16 %v257
    %v476 = vunpack.c.h.b16 %v257
    %v477 = vunpack.c.l.b16 %v258
    %v478 = vunpack.c.h.b16 %v258
    %v479 = vunpack.c.l.b16 %v259
    %v480 = vunpack.c.h.b16 %v259
    %v481 = vunpack.c.l.b16 %v260
    %v482 = vunpack.c.h.b16 %v260
    %v483 = vunpack.c.l.b16 %v261
    %v484 = vunpack.c.h.b16 %v261
    %v485 = vunpack.c.l.b16 %v262
    %v486 = vunpack.c.h.b16 %v262
    %v487 = vunpack.c.l.b16 %v263
    %v488 = vunpack.c.h.b16 %v263
    %v489 = vunpack.c.l.b16 %v264
    %v490 = vunpack.c.h.b16 %v264
    %v491 = vunpack.c.l.b16 %v265
    %v492 = vunpack.c.h.b16 %v265
    %v493 = vunpack.c.l.b16 %v266
    %v494 = vunpack.c.h.b16 %v266
    %v495 = vunpack.c.l.b16 %v267
    %v496 = vunpack.c.h.b16 %v267
    %v497 = vunpack.c.l.b16 %v268
    %v498 = vunpack.c.h.b16 %v268
    %v499 = vunpack.c.l.b16 %v269
    %v500 = vunpack.c.h.b16 %v269
    %v501 = vunpack.c.l.b16 %v270
    %v502 = vunpack.c.h.b16 %v270
    %v503 = vunpack.c.l.b16 %v271
    %v504 = vunpack.c.h.b16 %v271
    %v505 = vunpack.c.l.b16 %v272
    %v506 = vunpack.c.h.b16 %v272
    %v507 = vunpack.c.l.b16 %v273
    %v508 = vunpack.c.h.b16 %v273
    %v509 = vunpack.c.l.b16 %v274
    %v510 = vunpack.c.h.b16 %v274
    %v511 = vunpack.c.l.b16 %v275
    %v512 = vunpack.c.h.b16 %v275
    %v513 = vunpack.c.l.b16 %v276
    %v514 = vunpack.c.h.b16 %v276
    %v515 = vunpack.c.l.b16 %v277
    %v516 = vunpack.c.h.b16 %v277
    %v517 = vunpack.c.l.b16 %v278
    %v518 = vunpack.c.h.b16 %v278
    %v519 = vunpack.c.l.b16 %v279
    %v520 = vunpack.c.h.b16 %v279
    %v521 = vunpack.c.l.b16 %v280
    %v522 = vunpack.c.h.b16 %v280
    %v523 = vunpack.c.l.b16 %v281
    %v524 = vunpack.c.h.b16 %v281
    %v525 = vunpack.c.l.b16 %v282
    %v526 = vunpack.c.h.b16 %v282
    %v527 = vunpack.c.l.b16 %v283
    %v528 = vunpack.c.h.b16 %v283
    %v529 = vunpack.c.l.b16 %v284
    %v530 = vunpack.c.h.b16 %v284
    %v531 = vunpack.c.l.b16 %v285
    %v532 = vunpack.c.h.b16 %v285
    %v533 = vunpack.c.l.b16 %v286
    %v534 = vunpack.c.h.b16 %v286
    %v535 = vunpack.c.l.b16 %v287
    %v536 = vunpack.c.h.b16 %v287
    %v537 = vunpack.c.l.b16 %v288
    %v538 = vunpack.c.h.b16 %v288
    %v539 = vunpack.c.l.b16 %v289
    %v540 = vunpack.c.h.b16 %v289
    %v541 = vunpack.c.l.b16 %v290
    %v542 = vunpack.c.h.b16 %v290
    %v543 = vunpack.c.l.b16 %v291
    %v544 = vunpack.c.h.b16 %v291
    %v545 = vunpack.c.l.b16 %v292
    %v546 = vunpack.c.h.b16 %v292
    %v547 = vunpack.c.l.b16 %v293
    %v548 = vunpack.c.h.b16 %v293
    %v549 = vunpack.c.l.b16 %v294
    %v550 = vunpack.c.h.b16 %v294
    %v551 = vunpack.c.l.b16 %v295
    %v552 = vunpack.c.h.b16 %v295
    %v553 = vunpack.c.l.b16 %v296
    %v554 = vunpack.c.h.b16 %v296
    %v555 = vunpack.c.l.b16 %v297
    %v556 = vunpack.c.h.b16 %v297
    %v557 = vunpack.c.l.b16 %v298
    %v558 = vunpack.c.h.b16 %v298
    %v559 = vunpack.c.l.b16 %v299
    %v560 = vunpack.c.h.b16 %v299
    %v561 = vunpack.c.l.b16 %v300
    %v562 = vunpack.c.h.b16 %v300
    %v563 = vunpack.c.l.b16 %v301
    %v564 = vunpack.c.h.b16 %v301
    %v565 = vunpack.c.l.b16 %v302
    %v566 = vunpack.c.h.b16 %v302
    %v567 = vunpack.c.l.b16 %v303
    %v568 = vunpack.c.h.b16 %v303
    %v569 = vunpack.c.l.b16 %v304
    %v570 = vunpack.c.h.b16 %v304
    %v571 = vunpack.c.l.b16 %v305
    %v572 = vunpack.c.h.b16 %v305
    %v573 = vunpack.c.l.b16 %v306
    %v574 = vunpack.c.h.b16 %v306
    %v575 = vunpack.c.l.b16 %v307
    %v576 = vunpack.c.h.b16 %v307
    %v577 = vunpack.c.l.b16 %v308
    %v578 = vunpack.c.h.b16 %v308
    %v579 = vunpack.c.l.b16 %v309
    %v580 = vunpack.c.h.b16 %v309
    %v581 = vunpack.c.l.b16 %v310
    %v582 = vunpack.c.h.b16 %v310
    %v583 = vunpack.c.l.b16 %v311
    %v584 = vunpack.c.h.b16 %v311
    %v585 = vunpack.c.l.b16 %v312
    %v586 = vunpack.c.h.b16 %v312
    %v587 = vunpack.c.l.b16 %v313
    %v588 = vunpack.c.h.b16 %v313
    %v589 = vunpack.c.l.b16 %v314
    %v590 = vunpack.c.h.b16 %v314
    %v591 = vunpack.c.l.b16 %v315
    %v592 = vunpack.c.h.b16 %v315
    %v593 = vunpack.c.l.b16 %v316
    %v594 = vunpack.c.h.b16 %v316
    %v595 = vunpack.c.l.b16 %v317
    %v596 = vunpack.c.h.b16 %v317
    %v597 = vunpack.c.l.b16 %v318
    %v598 = vunpack.c.h.b16 %v318
    %v599 = vunpack.c.l.b16 %v319
    %v600 = vunpack.c.h.b16 %v319
    %v601 = vunpack.c.l.b16 %v320
    %v602 = vunpack.c.h.b16 %v320
    %v603 = vunpack.c.l.b16 %v321
    %v604 = vunpack.c.h.b16 %v321
    %v605 = vunpack.c.l.b16 %v322
    %v606 = vunpack.c.h.b16 %v322
    %v607 = vunpack.c.l.b16 %v323
    %v608 = vunpack.c.h.b16 %v323
    %v609 = vunpack.c.l.b16 %v324
    %v610 = vunpack.c.h.b16 %v324
    %v611 = vunpack.c.l.b16 %v325
    %v612 = vunpack.c.h.b16 %v325
    %v613 = vunpack.c.l.b16 %v326
    %v614 = vunpack.c.h.b16 %v326
    %v615 = vpack.c.b16 %v429, %v423
    %v616 = vpack.c.b16 %v430, %v424
    %v617 = vpack.c.b16 %v431, %v425
    %v618 = vpack.c.b16 %v432, %v426
    %v619 = vpack.c.b16 %v433, %v427
    %v620 = vpack.c.b16 %v434, %v428
    %v621 = vpack.c.b16 %v441, %v435
    %v622 = vpack.c.b16 %v442, %v436
    %v623 = vpack.c.b16 %v443, %v437
    %v624 = vpack.c.b16 %v444, %v438
    %v625 = vpack.c.b16 %v445, %v439
    %v626 = vpack.c.b16 %v446, %v440
    %v627 = vpack.c.b16 %v453, %v447
    %v628 = vpack.c.b16 %v454, %v448
    %v629 = vpack.c.b16 %v455, %v449
    %v630 = vpack.c.b16 %v456, %v450
    %v631 = vpack.c.b16 %v457, %v451
    %v632 = vpack.c.b16 %v458, %v452
    %v633 = vpack.c.b16 %v465, %v459
    %v634 = vpack.c.b16 %v466, %v460
    %v635 = vpack.c.b16 %v467, %v461
    %v636 = vpack.c.b16 %v468, %v462
    %v637 = vpack.c.b16 %v469, %v463
    %v638 = vpack.c.b16 %v470, %v464
    %v639 = vpack.c.b16 %v477, %v471
    %v640 = vpack.c.b16 %v478, %v472
    %v641 = vpack.c.b16 %v479, %v473
    %v642 = vpack.c.b16 %v480, %v474
    %v643 = vpack.c.b16 %v481, %v475
    %v644 = vpack.c.b16 %v482, %v476
    %v645 = vpack.c.b16 %v489, %v483
    %v646 = vpack.c.b16 %v490, %v484
    %v647 = vpack.c.b16 %v491, %v485
    %v648 = vpack.c.b16 %v492, %v486
    %v649 = vpack.c.b16 %v493, %v487
    %v650 = vpack.c.b16 %v494, %v488
    %v651 = vpack.c.b16 %v501, %v495
    %v652 = vpack.c.b16 %v502, %v496
    %v653 = vpack.c.b16 %v503, %v497
    %v654 = vpack.c.b16 %v504, %v498
    %v655 = vpack.c.b16 %v505, %v499
    %v656 = vpack.c.b16 %v506, %v500
    %v657 = vpack.c.b16 %v513, %v507
    %v658 = vpack.c.b16 %v514, %v508
    %v659 = vpack.c.b16 %v515, %v509
    %v660 = vpack.c.b16 %v516, %v510
    %v661 = vpack.c.b16 %v517, %v511
    %v662 = vpack.c.b16 %v518, %v512
    %v663 = vpack.c.b16 %v525, %v519
    %v664 = vpack.c.b16 %v526, %v520
    %v665 = vpack.c.b16 %v527, %v521
    %v666 = vpack.c.b16 %v528, %v522
    %v667 = vpack.c.b16 %v529, %v523
    %v668 = vpack.c.b16 %v530, %v524
    %v669 = vpack.c.b16 %v537, %v531
    %v670 = vpack.c.b16 %v538, %v532
    %v671 = vpack.c.b16 %v539, %v533
    %v672 = vpack.c.b16 %v540, %v534
    %v673 = vpack.c.b16 %v541, %v535
    %v674 = vpack.c.b16 %v542, %v536
    %v675 = vpack.c.b16 %v549, %v543
    %v676 = vpack.c.b16 %v550, %v544
    %v677 = vpack.c.b16 %v551, %v545
    %v678 = vpack.c.b16 %v552, %v546
    %v679 = vpack.c.b16 %v553, %v547
    %v680 = vpack.c.b16 %v554, %v548
    %v681 = vpack.c.b16 %v561, %v555
    %v682 = vpack.c.b16 %v562, %v556
    %v683 = vpack.c.b16 %v563, %v557
    %v684 = vpack.c.b16 %v564, %v558
    %v685 = vpack.c.b16 %v565, %v559
    %v686 = vpack.c.b16 %v566, %v560
    %v687 = vpack.c.b16 %v573, %v567
    %v688 = vpack.c.b16 %v574, %v568
    %v689 = vpack.c.b16 %v575, %v569
    %v690 = vpack.c.b16 %v576, %v570
    %v691 = vpack.c.b16 %v577, %v571
    %v692 = vpack.c.b16 %v578, %v572
    %v693 = vpack.c.b16 %v585, %v579
    %v694 = vpack.c.b16 %v586, %v580
    %v695 = vpack.c.b16 %v587, %v581
    %v696 = vpack.c.b16 %v588, %v582
    %v697 = vpack.c.b16 %v589, %v583
    %v698 = vpack.c.b16 %v590, %v584
    %v699 = vpack.c.b16 %v597, %v591
    %v700 = vpack.c.b16 %v598, %v592
    %v701 = vpack.c.b16 %v599, %v593
    %v702 = vpack.c.b16 %v600, %v594
    %v703 = vpack.c.b16 %v601, %v595
    %v704 = vpack.c.b16 %v602, %v596
    %v705 = vpack.c.b16 %v609, %v603
    %v706 = vpack.c.b16 %v610, %v604
    %v707 = vpack.c.b16 %v611, %v605
    %v708 = vpack.c.b16 %v612, %v606
    %v709 = vpack.c.b16 %v613, %v607
    %v710 = vpack.c.b16 %v614, %v608
    %807 = vmatpush.bf16.msra.mxu0 %v657
    %808 = vmatpush.bf16.msra.mxu0 %v651
    %809 = vmatpush.bf16.msra.mxu0 %v645
    %810 = vmatpush.bf16.msra.mxu0 %v639
    %811 = vmatpush.bf16.msra.mxu0 %v633
    %812 = vmatpush.bf16.msra.mxu0 %v627
    %813 = vmatpush.bf16.msra.mxu0 %v621
    %814 = vmatpush.bf16.msra.mxu0 %v615
    %815 = vmatmul.bf16.gmra.mxu0 %v229
    %v816 = vpop.f32.mrf.mxu0
    %v817 = vadd.f32 0.0, %v816
    %v818 = vpop.f32.mrf.mxu0
    %v819 = vadd.f32 0.0, %v818
    %820 = vdwg.mxu0
    %821 = vmatpush.bf16.msra.mxu0 %v705
    %822 = vmatpush.bf16.msra.mxu0 %v699
    %823 = vmatpush.bf16.msra.mxu0 %v693
    %824 = vmatpush.bf16.msra.mxu0 %v687
    %825 = vmatpush.bf16.msra.mxu0 %v681
    %826 = vmatpush.bf16.msra.mxu0 %v675
    %827 = vmatpush.bf16.msra.mxu0 %v669
    %828 = vmatpush.bf16.msra.mxu0 %v663
    %829 = vmatmul.bf16.gmra.mxu0 %v230
    %v830 = vpop.f32.mrf.mxu0
    %v831 = vadd.f32 %v817, %v830
    %v832 = vpop.f32.mrf.mxu0
    %v833 = vadd.f32 %v819, %v832
    %834 = vdwg.mxu0
    %835 = vmatpush.bf16.msra.mxu0 %v658
    %836 = vmatpush.bf16.msra.mxu0 %v652
    %837 = vmatpush.bf16.msra.mxu0 %v646
    %838 = vmatpush.bf16.msra.mxu0 %v640
    %839 = vmatpush.bf16.msra.mxu0 %v634
    %840 = vmatpush.bf16.msra.mxu0 %v628
    %841 = vmatpush.bf16.msra.mxu0 %v622
    %842 = vmatpush.bf16.msra.mxu0 %v616
    %843 = vmatmul.bf16.gmra.mxu0 %v229
    %v844 = vpop.f32.mrf.mxu0
    %v845 = vadd.f32 0.0, %v844
    %v846 = vpop.f32.mrf.mxu0
    %v847 = vadd.f32 0.0, %v846
    %848 = vdwg.mxu0
    %849 = vmatpush.bf16.msra.mxu0 %v706
    %850 = vmatpush.bf16.msra.mxu0 %v700
    %851 = vmatpush.bf16.msra.mxu0 %v694
    %852 = vmatpush.bf16.msra.mxu0 %v688
    %853 = vmatpush.bf16.msra.mxu0 %v682
    %854 = vmatpush.bf16.msra.mxu0 %v676
    %855 = vmatpush.bf16.msra.mxu0 %v670
    %856 = vmatpush.bf16.msra.mxu0 %v664
    %857 = vmatmul.bf16.gmra.mxu0 %v230
    %v858 = vpop.f32.mrf.mxu0
    %v859 = vadd.f32 %v845, %v858
    %v860 = vpop.f32.mrf.mxu0
    %v861 = vadd.f32 %v847, %v860
    %862 = vdwg.mxu0
    %863 = vmatpush.bf16.msra.mxu0 %v659
    %864 = vmatpush.bf16.msra.mxu0 %v653
    %865 = vmatpush.bf16.msra.mxu0 %v647
    %866 = vmatpush.bf16.msra.mxu0 %v641
    %867 = vmatpush.bf16.msra.mxu0 %v635
    %868 = vmatpush.bf16.msra.mxu0 %v629
    %869 = vmatpush.bf16.msra.mxu0 %v623
    %870 = vmatpush.bf16.msra.mxu0 %v617
    %871 = vmatmul.bf16.gmra.mxu0 %v229
    %v872 = vpop.f32.mrf.mxu0
    %v873 = vadd.f32 0.0, %v872
    %v874 = vpop.f32.mrf.mxu0
    %v875 = vadd.f32 0.0, %v874
    %876 = vdwg.mxu0
    %877 = vmatpush.bf16.msra.mxu0 %v707
    %878 = vmatpush.bf16.msra.mxu0 %v701
    %879 = vmatpush.bf16.msra.mxu0 %v695
    %880 = vmatpush.bf16.msra.mxu0 %v689
    %881 = vmatpush.bf16.msra.mxu0 %v683
    %882 = vmatpush.bf16.msra.mxu0 %v677
    %883 = vmatpush.bf16.msra.mxu0 %v671
    %884 = vmatpush.bf16.msra.mxu0 %v665
    %885 = vmatmul.bf16.gmra.mxu0 %v230
    %v886 = vpop.f32.mrf.mxu0
    %v887 = vadd.f32 %v873, %v886
    %v888 = vpop.f32.mrf.mxu0
    %v889 = vadd.f32 %v875, %v888
    %890 = vdwg.mxu0
    %891 = vmatpush.bf16.msra.mxu0 %v660
    %892 = vmatpush.bf16.msra.mxu0 %v654
    %893 = vmatpush.bf16.msra.mxu0 %v648
    %894 = vmatpush.bf16.msra.mxu0 %v642
    %895 = vmatpush.bf16.msra.mxu0 %v636
    %896 = vmatpush.bf16.msra.mxu0 %v630
    %897 = vmatpush.bf16.msra.mxu0 %v624
    %898 = vmatpush.bf16.msra.mxu0 %v618
    %899 = vmatmul.bf16.gmra.mxu0 %v229
    %v900 = vpop.f32.mrf.mxu0
    %v901 = vadd.f32 0.0, %v900
    %v902 = vpop.f32.mrf.mxu0
    %v903 = vadd.f32 0.0, %v902
    %904 = vdwg.mxu0
    %905 = vmatpush.bf16.msra.mxu0 %v708
    %906 = vmatpush.bf16.msra.mxu0 %v702
    %907 = vmatpush.bf16.msra.mxu0 %v696
    %908 = vmatpush.bf16.msra.mxu0 %v690
    %909 = vmatpush.bf16.msra.mxu0 %v684
    %910 = vmatpush.bf16.msra.mxu0 %v678
    %911 = vmatpush.bf16.msra.mxu0 %v672
    %912 = vmatpush.bf16.msra.mxu0 %v666
    %913 = vmatmul.bf16.gmra.mxu0 %v230
    %v914 = vpop.f32.mrf.mxu0
    %v915 = vadd.f32 %v901, %v914
    %v916 = vpop.f32.mrf.mxu0
    %v917 = vadd.f32 %v903, %v916
    %918 = vdwg.mxu0
    %919 = vmatpush.bf16.msra.mxu0 %v661
    %920 = vmatpush.bf16.msra.mxu0 %v655
    %921 = vmatpush.bf16.msra.mxu0 %v649
    %922 = vmatpush.bf16.msra.mxu0 %v643
    %923 = vmatpush.bf16.msra.mxu0 %v637
    %924 = vmatpush.bf16.msra.mxu0 %v631
    %925 = vmatpush.bf16.msra.mxu0 %v625
    %926 = vmatpush.bf16.msra.mxu0 %v619
    %927 = vmatmul.bf16.gmra.mxu0 %v229
    %v928 = vpop.f32.mrf.mxu0
    %v929 = vadd.f32 0.0, %v928
    %v930 = vpop.f32.mrf.mxu0
    %v931 = vadd.f32 0.0, %v930
    %932 = vdwg.mxu0
    %933 = vmatpush.bf16.msra.mxu0 %v709
    %934 = vmatpush.bf16.msra.mxu0 %v703
    %935 = vmatpush.bf16.msra.mxu0 %v697
    %936 = vmatpush.bf16.msra.mxu0 %v691
    %937 = vmatpush.bf16.msra.mxu0 %v685
    %938 = vmatpush.bf16.msra.mxu0 %v679
    %939 = vmatpush.bf16.msra.mxu0 %v673
    %940 = vmatpush.bf16.msra.mxu0 %v667
    %941 = vmatmul.bf16.gmra.mxu0 %v230
    %v942 = vpop.f32.mrf.mxu0
    %v943 = vadd.f32 %v929, %v942
    %v944 = vpop.f32.mrf.mxu0
    %v945 = vadd.f32 %v931, %v944
    %946 = vdwg.mxu0
    %947 = vmatpush.bf16.msra.mxu0 %v662
    %948 = vmatpush.bf16.msra.mxu0 %v656
    %949 = vmatpush.bf16.msra.mxu0 %v650
    %950 = vmatpush.bf16.msra.mxu0 %v644
    %951 = vmatpush.bf16.msra.mxu0 %v638
    %952 = vmatpush.bf16.msra.mxu0 %v632
    %953 = vmatpush.bf16.msra.mxu0 %v626
    %954 = vmatpush.bf16.msra.mxu0 %v620
    %955 = vmatmul.bf16.gmra.mxu0 %v229
    %v956 = vpop.f32.mrf.mxu0
    %v957 = vadd.f32 0.0, %v956
    %v958 = vpop.f32.mrf.mxu0
    %v959 = vadd.f32 0.0, %v958
    %960 = vdwg.mxu0
    %961 = vmatpush.bf16.msra.mxu0 %v710
    %962 = vmatpush.bf16.msra.mxu0 %v704
    %963 = vmatpush.bf16.msra.mxu0 %v698
    %964 = vmatpush.bf16.msra.mxu0 %v692
    %965 = vmatpush.bf16.msra.mxu0 %v686
    %966 = vmatpush.bf16.msra.mxu0 %v680
    %967 = vmatpush.bf16.msra.mxu0 %v674
    %968 = vmatpush.bf16.msra.mxu0 %v668
    %969 = vmatmul.bf16.gmra.mxu0 %v230
    %v970 = vpop.f32.mrf.mxu0
    %v971 = vadd.f32 %v957, %v970
    %v972 = vpop.f32.mrf.mxu0
    %v973 = vadd.f32 %v959, %v972
    %974 = vdwg.mxu0
    %v975 = vpack.c.bf16 %v859, %v831
    %v976 = vpack.c.bf16 %v915, %v887
    %v977 = vpack.c.bf16 %v971, %v943
    %v978 = vpack.c.bf16 %v861, %v833
    %v979 = vpack.c.bf16 %v917, %v889
    %v980 = vpack.c.bf16 %v973, %v945
    %v981 = vlaneseq
    %v982 = vshrl.u32 %v981, 7
    %v983 = vlaneseq
    %v984 = vand.u32 %v983, 127
    %vm985 = vcmp.le.s32.totalorder %v984, %v982
    %v986 = vsel %vm985, 0.0, -1e+30
    %vm987 = vcmask 523264
    %v989 = vsel %vm987, %v975, 0
    %v992 = vsel %vm987, %v976, 0
    %994 = vmatpush.bf16.xpose.msra.mxu0 0
    %995 = vmatpush.bf16.xpose.msra.mxu0 0
    %996 = vmatpush.bf16.xpose.msra.mxu0 0
    %997 = vmatpush.bf16.xpose.msra.mxu0 0
    %998 = vmatpush.bf16.xpose.msra.mxu0 0
    %999 = vmatpush.bf16.xpose.msra.mxu0 0
    %1000 = vmatpush.bf16.xpose.msra.mxu0 0
    %1001 = vmatpush.bf16.xpose.msra.mxu0 %v992
    %1002 = vmatmul.bf16.gmra.mxu0 %v989
    %v1003 = vpop.f32.mrf.mxu0
    %v1004 = vadd.f32 %v986, %v1003
    %v1005 = vpop.f32.mrf.mxu0
    %1006 = vdwg.mxu0
    %v1008 = vsel %vm987, %v978, 0
    %v1011 = vsel %vm987, %v979, 0
    %1013 = vmatpush.bf16.xpose.msra.mxu0 0
    %1014 = vmatpush.bf16.xpose.msra.mxu0 0
    %1015 = vmatpush.bf16.xpose.msra.mxu0 0
    %1016 = vmatpush.bf16.xpose.msra.mxu0 0
    %1017 = vmatpush.bf16.xpose.msra.mxu0 0
    %1018 = vmatpush.bf16.xpose.msra.mxu0 0
    %1019 = vmatpush.bf16.xpose.msra.mxu0 0
    %1020 = vmatpush.bf16.xpose.msra.mxu0 %v1011
    %1021 = vmatmul.bf16.gmra.mxu0 %v1008
    %v1022 = vpop.f32.mrf.mxu0
    %v1023 = vadd.f32 %v986, %v1022
    %v1024 = vpop.f32.mrf.mxu0
    %1025 = vdwg.mxu0
    %vm1026 = vcmask 64512
    %v1027 = vsel %vm1026, %v1004, -inf
    %1028 = vmax.xlane.f32.xlu0 %v1027
    %v1029 = vpop.xlane.xlu0 %1028
    %v1030 = vsel %vm1026, %v1023, -inf
    %1031 = vmax.xlane.f32.xlu0 %v1030
    %v1032 = vpop.xlane.xlu0 %1031
    %v1033 = vsub.f32 %v1004, %v1029
    %v1034 = vsub.f32 %v1023, %v1032
    %v1035 = vmul.f32 %v1033, 1.442695
    %v1036 = vpow.pop %v1035
    %v1037 = vmul.f32 %v1034, 1.442695
    %v1038 = vpow.pop %v1037
    %v1039 = vsel %vm1026, %v1036, 0.0
    %1040 = vadd.xlane.f32.xlu0 %v1039
    %v1041 = vpop.xlane.xlu0 %1040
    %v1042 = vsel %vm1026, %v1038, 0.0
    %1043 = vadd.xlane.f32.xlu0 %v1042
    %v1044 = vpop.xlane.xlu0 %1043
    %v1045 = vrcp.pop %v1041
    %v1046 = vrcp.pop %v1044
    %v1047 = vmul.f32 %v1036, %v1045
    %v1048 = vmul.f32 %v1038, %v1046
    %v1049 = vpack.c.bf16 %v1047, %v1047
    %v1050 = vpack.c.bf16 %v1048, %v1048
    %v1052 = vsel %vm1026, %v1049, 0
    %vm1054 = vcmask 1043456
    %v1056 = vsel %vm1054, %v977, 0
    %1058 = vmatpush.bf16.msra.mxu0 0
    %1059 = vmatpush.bf16.msra.mxu0 0
    %1060 = vmatpush.bf16.msra.mxu0 0
    %1061 = vmatpush.bf16.msra.mxu0 0
    %1062 = vmatpush.bf16.msra.mxu0 0
    %1063 = vmatpush.bf16.msra.mxu0 0
    %1064 = vmatpush.bf16.msra.mxu0 0
    %1065 = vmatpush.bf16.msra.mxu0 %v1056
    %1066 = vmatmul.bf16.gmra.mxu0 %v1052
    %v1067 = vpop.f32.mrf.mxu0
    %v1068 = vadd.f32 0.0, %v1067
    %v1069 = vpop.f32.mrf.mxu0
    %1070 = vdwg.mxu0
    %v1072 = vsel %vm1026, %v1050, 0
    %v1075 = vsel %vm1054, %v980, 0
    %1077 = vmatpush.bf16.msra.mxu0 0
    %1078 = vmatpush.bf16.msra.mxu0 0
    %1079 = vmatpush.bf16.msra.mxu0 0
    %1080 = vmatpush.bf16.msra.mxu0 0
    %1081 = vmatpush.bf16.msra.mxu0 0
    %1082 = vmatpush.bf16.msra.mxu0 0
    %1083 = vmatpush.bf16.msra.mxu0 0
    %1084 = vmatpush.bf16.msra.mxu0 %v1075
    %1085 = vmatmul.bf16.gmra.mxu0 %v1072
    %v1086 = vpop.f32.mrf.mxu0
    %v1087 = vadd.f32 0.0, %v1086
    %v1088 = vpop.f32.mrf.mxu0
    %1089 = vdwg.mxu0
    %v1091 = vunpack.c.l.b16 %v975
    %v1092 = vpack.c.b16 %v1091, %v1091
    %1093 = vrot.lane.b32.xlu0 %v1092, 64
    %v1094 = vpop.permute.xlu0 %1093
    %v1096 = vunpack.c.l.b16 %v976
    %v1097 = vpack.c.b16 %v1096, %v1096
    %1098 = vrot.lane.b32.xlu0 %v1097, 64
    %v1099 = vpop.permute.xlu0 %1098
    %v1101 = vsel %vm987, %v1094, 0
    %v1104 = vsel %vm987, %v1099, 0
    %1106 = vmatpush.bf16.xpose.msra.mxu0 0
    %1107 = vmatpush.bf16.xpose.msra.mxu0 0
    %1108 = vmatpush.bf16.xpose.msra.mxu0 0
    %1109 = vmatpush.bf16.xpose.msra.mxu0 0
    %1110 = vmatpush.bf16.xpose.msra.mxu0 0
    %1111 = vmatpush.bf16.xpose.msra.mxu0 0
    %1112 = vmatpush.bf16.xpose.msra.mxu0 0
    %1113 = vmatpush.bf16.xpose.msra.mxu0 %v1104
    %1114 = vmatmul.bf16.gmra.mxu0 %v1101
    %v1115 = vpop.f32.mrf.mxu0
    %v1116 = vadd.f32 %v986, %v1115
    %v1117 = vpop.f32.mrf.mxu0
    %1118 = vdwg.mxu0
    %v1120 = vunpack.c.l.b16 %v978
    %v1121 = vpack.c.b16 %v1120, %v1120
    %1122 = vrot.lane.b32.xlu0 %v1121, 64
    %v1123 = vpop.permute.xlu0 %1122
    %v1125 = vunpack.c.l.b16 %v979
    %v1126 = vpack.c.b16 %v1125, %v1125
    %1127 = vrot.lane.b32.xlu0 %v1126, 64
    %v1128 = vpop.permute.xlu0 %1127
    %v1130 = vsel %vm987, %v1123, 0
    %v1133 = vsel %vm987, %v1128, 0
    %1135 = vmatpush.bf16.xpose.msra.mxu0 0
    %1136 = vmatpush.bf16.xpose.msra.mxu0 0
    %1137 = vmatpush.bf16.xpose.msra.mxu0 0
    %1138 = vmatpush.bf16.xpose.msra.mxu0 0
    %1139 = vmatpush.bf16.xpose.msra.mxu0 0
    %1140 = vmatpush.bf16.xpose.msra.mxu0 0
    %1141 = vmatpush.bf16.xpose.msra.mxu0 0
    %1142 = vmatpush.bf16.xpose.msra.mxu0 %v1133
    %1143 = vmatmul.bf16.gmra.mxu0 %v1130
    %v1144 = vpop.f32.mrf.mxu0
    %v1145 = vadd.f32 %v986, %v1144
    %v1146 = vpop.f32.mrf.mxu0
    %1147 = vdwg.mxu0
    %v1148 = vsel %vm1026, %v1116, -inf
    %1149 = vmax.xlane.f32.xlu0 %v1148
    %v1150 = vpop.xlane.xlu0 %1149
    %v1151 = vsel %vm1026, %v1145, -inf
    %1152 = vmax.xlane.f32.xlu0 %v1151
    %v1153 = vpop.xlane.xlu0 %1152
    %v1154 = vsub.f32 %v1116, %v1150
    %v1155 = vsub.f32 %v1145, %v1153
    %v1156 = vmul.f32 %v1154, 1.442695
    %v1157 = vpow.pop %v1156
    %v1158 = vmul.f32 %v1155, 1.442695
    %v1159 = vpow.pop %v1158
    %v1160 = vsel %vm1026, %v1157, 0.0
    %1161 = vadd.xlane.f32.xlu0 %v1160
    %v1162 = vpop.xlane.xlu0 %1161
    %v1163 = vsel %vm1026, %v1159, 0.0
    %1164 = vadd.xlane.f32.xlu0 %v1163
    %v1165 = vpop.xlane.xlu0 %1164
    %v1166 = vrcp.pop %v1162
    %v1167 = vrcp.pop %v1165
    %v1168 = vmul.f32 %v1157, %v1166
    %v1169 = vmul.f32 %v1159, %v1167
    %v1170 = vpack.c.bf16 %v1168, %v1168
    %v1171 = vpack.c.bf16 %v1169, %v1169
    %v1173 = vunpack.c.l.b16 %v977
    %v1174 = vpack.c.b16 %v1173, %v1173
    %1175 = vrot.lane.b32.xlu0 %v1174, 64
    %v1176 = vpop.permute.xlu0 %1175
    %v1178 = vsel %vm1026, %v1170, 0
    %v1181 = vsel %vm1054, %v1176, 0
    %1183 = vmatpush.bf16.msra.mxu0 0
    %1184 = vmatpush.bf16.msra.mxu0 0
    %1185 = vmatpush.bf16.msra.mxu0 0
    %1186 = vmatpush.bf16.msra.mxu0 0
    %1187 = vmatpush.bf16.msra.mxu0 0
    %1188 = vmatpush.bf16.msra.mxu0 0
    %1189 = vmatpush.bf16.msra.mxu0 0
    %1190 = vmatpush.bf16.msra.mxu0 %v1181
    %1191 = vmatmul.bf16.gmra.mxu0 %v1178
    %v1192 = vpop.f32.mrf.mxu0
    %v1193 = vadd.f32 0.0, %v1192
    %v1194 = vpop.f32.mrf.mxu0
    %1195 = vdwg.mxu0
    %v1197 = vunpack.c.l.b16 %v980
    %v1198 = vpack.c.b16 %v1197, %v1197
    %1199 = vrot.lane.b32.xlu0 %v1198, 64
    %v1200 = vpop.permute.xlu0 %1199
    %v1202 = vsel %vm1026, %v1171, 0
    %v1205 = vsel %vm1054, %v1200, 0
    %1207 = vmatpush.bf16.msra.mxu0 0
    %1208 = vmatpush.bf16.msra.mxu0 0
    %1209 = vmatpush.bf16.msra.mxu0 0
    %1210 = vmatpush.bf16.msra.mxu0 0
    %1211 = vmatpush.bf16.msra.mxu0 0
    %1212 = vmatpush.bf16.msra.mxu0 0
    %1213 = vmatpush.bf16.msra.mxu0 0
    %1214 = vmatpush.bf16.msra.mxu0 %v1205
    %1215 = vmatmul.bf16.gmra.mxu0 %v1202
    %v1216 = vpop.f32.mrf.mxu0
    %v1217 = vadd.f32 0.0, %v1216
    %v1218 = vpop.f32.mrf.mxu0
    %1219 = vdwg.mxu0
    %v1220 = vrot.slane %v975, 4
    %v1221 = vrot.slane %v976, 4
    %v1223 = vsel %vm987, %v1220, 0
    %v1226 = vsel %vm987, %v1221, 0
    %1228 = vmatpush.bf16.xpose.msra.mxu0 0
    %1229 = vmatpush.bf16.xpose.msra.mxu0 0
    %1230 = vmatpush.bf16.xpose.msra.mxu0 0
    %1231 = vmatpush.bf16.xpose.msra.mxu0 0
    %1232 = vmatpush.bf16.xpose.msra.mxu0 0
    %1233 = vmatpush.bf16.xpose.msra.mxu0 0
    %1234 = vmatpush.bf16.xpose.msra.mxu0 0
    %1235 = vmatpush.bf16.xpose.msra.mxu0 %v1226
    %1236 = vmatmul.bf16.gmra.mxu0 %v1223
    %v1237 = vpop.f32.mrf.mxu0
    %v1238 = vadd.f32 %v986, %v1237
    %v1239 = vpop.f32.mrf.mxu0
    %1240 = vdwg.mxu0
    %v1241 = vrot.slane %v978, 4
    %v1242 = vrot.slane %v979, 4
    %v1244 = vsel %vm987, %v1241, 0
    %v1247 = vsel %vm987, %v1242, 0
    %1249 = vmatpush.bf16.xpose.msra.mxu0 0
    %1250 = vmatpush.bf16.xpose.msra.mxu0 0
    %1251 = vmatpush.bf16.xpose.msra.mxu0 0
    %1252 = vmatpush.bf16.xpose.msra.mxu0 0
    %1253 = vmatpush.bf16.xpose.msra.mxu0 0
    %1254 = vmatpush.bf16.xpose.msra.mxu0 0
    %1255 = vmatpush.bf16.xpose.msra.mxu0 0
    %1256 = vmatpush.bf16.xpose.msra.mxu0 %v1247
    %1257 = vmatmul.bf16.gmra.mxu0 %v1244
    %v1258 = vpop.f32.mrf.mxu0
    %v1259 = vadd.f32 %v986, %v1258
    %v1260 = vpop.f32.mrf.mxu0
    %1261 = vdwg.mxu0
    %v1262 = vsel %vm1026, %v1238, -inf
    %1263 = vmax.xlane.f32.xlu0 %v1262
    %v1264 = vpop.xlane.xlu0 %1263
    %v1265 = vsel %vm1026, %v1259, -inf
    %1266 = vmax.xlane.f32.xlu0 %v1265
    %v1267 = vpop.xlane.xlu0 %1266
    %v1268 = vsub.f32 %v1238, %v1264
    %v1269 = vsub.f32 %v1259, %v1267
    %v1270 = vmul.f32 %v1268, 1.442695
    %v1271 = vpow.pop %v1270
    %v1272 = vmul.f32 %v1269, 1.442695
    %v1273 = vpow.pop %v1272
    %v1274 = vsel %vm1026, %v1271, 0.0
    %1275 = vadd.xlane.f32.xlu0 %v1274
    %v1276 = vpop.xlane.xlu0 %1275
    %v1277 = vsel %vm1026, %v1273, 0.0
    %1278 = vadd.xlane.f32.xlu0 %v1277
    %v1279 = vpop.xlane.xlu0 %1278
    %v1280 = vrcp.pop %v1276
    %v1281 = vrcp.pop %v1279
    %v1282 = vmul.f32 %v1271, %v1280
    %v1283 = vmul.f32 %v1273, %v1281
    %v1284 = vpack.c.bf16 %v1282, %v1282
    %v1285 = vpack.c.bf16 %v1283, %v1283
    %v1286 = vrot.slane %v977, 4
    %v1288 = vsel %vm1026, %v1284, 0
    %v1291 = vsel %vm1054, %v1286, 0
    %1293 = vmatpush.bf16.msra.mxu0 0
    %1294 = vmatpush.bf16.msra.mxu0 0
    %1295 = vmatpush.bf16.msra.mxu0 0
    %1296 = vmatpush.bf16.msra.mxu0 0
    %1297 = vmatpush.bf16.msra.mxu0 0
    %1298 = vmatpush.bf16.msra.mxu0 0
    %1299 = vmatpush.bf16.msra.mxu0 0
    %1300 = vmatpush.bf16.msra.mxu0 %v1291
    %1301 = vmatmul.bf16.gmra.mxu0 %v1288
    %v1302 = vpop.f32.mrf.mxu0
    %v1303 = vadd.f32 0.0, %v1302
    %v1304 = vpop.f32.mrf.mxu0
    %1305 = vdwg.mxu0
    %v1306 = vrot.slane %v980, 4
    %v1308 = vsel %vm1026, %v1285, 0
    %v1311 = vsel %vm1054, %v1306, 0
    %1313 = vmatpush.bf16.msra.mxu0 0
    %1314 = vmatpush.bf16.msra.mxu0 0
    %1315 = vmatpush.bf16.msra.mxu0 0
    %1316 = vmatpush.bf16.msra.mxu0 0
    %1317 = vmatpush.bf16.msra.mxu0 0
    %1318 = vmatpush.bf16.msra.mxu0 0
    %1319 = vmatpush.bf16.msra.mxu0 0
    %1320 = vmatpush.bf16.msra.mxu0 %v1311
    %1321 = vmatmul.bf16.gmra.mxu0 %v1308
    %v1322 = vpop.f32.mrf.mxu0
    %v1323 = vadd.f32 0.0, %v1322
    %v1324 = vpop.f32.mrf.mxu0
    %1325 = vdwg.mxu0
    %1326 = vrot.lane.b32.xlu0 %v975, 64
    %v1327 = vpop.permute.xlu0 %1326
    %v1328 = vrot.slane %v1327, 4
    %1329 = vrot.lane.b32.xlu0 %v976, 64
    %v1330 = vpop.permute.xlu0 %1329
    %v1331 = vrot.slane %v1330, 4
    %v1333 = vsel %vm987, %v1328, 0
    %v1336 = vsel %vm987, %v1331, 0
    %1338 = vmatpush.bf16.xpose.msra.mxu0 0
    %1339 = vmatpush.bf16.xpose.msra.mxu0 0
    %1340 = vmatpush.bf16.xpose.msra.mxu0 0
    %1341 = vmatpush.bf16.xpose.msra.mxu0 0
    %1342 = vmatpush.bf16.xpose.msra.mxu0 0
    %1343 = vmatpush.bf16.xpose.msra.mxu0 0
    %1344 = vmatpush.bf16.xpose.msra.mxu0 0
    %1345 = vmatpush.bf16.xpose.msra.mxu0 %v1336
    %1346 = vmatmul.bf16.gmra.mxu0 %v1333
    %v1347 = vpop.f32.mrf.mxu0
    %v1348 = vadd.f32 %v986, %v1347
    %v1349 = vpop.f32.mrf.mxu0
    %1350 = vdwg.mxu0
    %1351 = vrot.lane.b32.xlu0 %v978, 64
    %v1352 = vpop.permute.xlu0 %1351
    %v1353 = vrot.slane %v1352, 4
    %1354 = vrot.lane.b32.xlu0 %v979, 64
    %v1355 = vpop.permute.xlu0 %1354
    %v1356 = vrot.slane %v1355, 4
    %v1358 = vsel %vm987, %v1353, 0
    %v1361 = vsel %vm987, %v1356, 0
    %1363 = vmatpush.bf16.xpose.msra.mxu0 0
    %1364 = vmatpush.bf16.xpose.msra.mxu0 0
    %1365 = vmatpush.bf16.xpose.msra.mxu0 0
    %1366 = vmatpush.bf16.xpose.msra.mxu0 0
    %1367 = vmatpush.bf16.xpose.msra.mxu0 0
    %1368 = vmatpush.bf16.xpose.msra.mxu0 0
    %1369 = vmatpush.bf16.xpose.msra.mxu0 0
    %1370 = vmatpush.bf16.xpose.msra.mxu0 %v1361
    %1371 = vmatmul.bf16.gmra.mxu0 %v1358
    %v1372 = vpop.f32.mrf.mxu0
    %v1373 = vadd.f32 %v986, %v1372
    %v1374 = vpop.f32.mrf.mxu0
    %1375 = vdwg.mxu0
    %v1376 = vsel %vm1026, %v1348, -inf
    %1377 = vmax.xlane.f32.xlu0 %v1376
    %v1378 = vpop.xlane.xlu0 %1377
    %v1379 = vsel %vm1026, %v1373, -inf
    %1380 = vmax.xlane.f32.xlu0 %v1379
    %v1381 = vpop.xlane.xlu0 %1380
    %v1382 = vsub.f32 %v1348, %v1378
    %v1383 = vsub.f32 %v1373, %v1381
    %v1384 = vmul.f32 %v1382, 1.442695
    %v1385 = vpow.pop %v1384
    %v1386 = vmul.f32 %v1383, 1.442695
    %v1387 = vpow.pop %v1386
    %v1388 = vsel %vm1026, %v1385, 0.0
    %1389 = vadd.xlane.f32.xlu0 %v1388
    %v1390 = vpop.xlane.xlu0 %1389
    %v1391 = vsel %vm1026, %v1387, 0.0
    %1392 = vadd.xlane.f32.xlu0 %v1391
    %v1393 = vpop.xlane.xlu0 %1392
    %v1394 = vrcp.pop %v1390
    %v1395 = vrcp.pop %v1393
    %v1396 = vmul.f32 %v1385, %v1394
    %v1397 = vmul.f32 %v1387, %v1395
    %v1398 = vpack.c.bf16 %v1396, %v1396
    %v1399 = vpack.c.bf16 %v1397, %v1397
    %1400 = vrot.lane.b32.xlu0 %v977, 64
    %v1401 = vpop.permute.xlu0 %1400
    %v1402 = vrot.slane %v1401, 4
    %v1404 = vsel %vm1026, %v1398, 0
    %v1407 = vsel %vm1054, %v1402, 0
    %1409 = vmatpush.bf16.msra.mxu0 0
    %1410 = vmatpush.bf16.msra.mxu0 0
    %1411 = vmatpush.bf16.msra.mxu0 0
    %1412 = vmatpush.bf16.msra.mxu0 0
    %1413 = vmatpush.bf16.msra.mxu0 0
    %1414 = vmatpush.bf16.msra.mxu0 0
    %1415 = vmatpush.bf16.msra.mxu0 0
    %1416 = vmatpush.bf16.msra.mxu0 %v1407
    %1417 = vmatmul.bf16.gmra.mxu0 %v1404
    %v1418 = vpop.f32.mrf.mxu0
    %v1419 = vadd.f32 0.0, %v1418
    %v1420 = vpop.f32.mrf.mxu0
    %1421 = vdwg.mxu0
    %1422 = vrot.lane.b32.xlu0 %v980, 64
    %v1423 = vpop.permute.xlu0 %1422
    %v1424 = vrot.slane %v1423, 4
    %v1426 = vsel %vm1026, %v1399, 0
    %v1429 = vsel %vm1054, %v1424, 0
    %1431 = vmatpush.bf16.msra.mxu0 0
    %1432 = vmatpush.bf16.msra.mxu0 0
    %1433 = vmatpush.bf16.msra.mxu0 0
    %1434 = vmatpush.bf16.msra.mxu0 0
    %1435 = vmatpush.bf16.msra.mxu0 0
    %1436 = vmatpush.bf16.msra.mxu0 0
    %1437 = vmatpush.bf16.msra.mxu0 0
    %1438 = vmatpush.bf16.msra.mxu0 %v1429
    %1439 = vmatmul.bf16.gmra.mxu0 %v1426
    %v1440 = vpop.f32.mrf.mxu0
    %v1441 = vadd.f32 0.0, %v1440
    %v1442 = vpop.f32.mrf.mxu0
    %1443 = vdwg.mxu0
    %1446 = vrot.lane.b32.xlu0 %v1193, 64
    %v1447 = vpop.permute.xlu0 %1446
    %1448 = vrot.lane.b32.xlu0 %v1217, 64
    %v1449 = vpop.permute.xlu0 %1448
    %1454 = vrot.lane.b32.xlu0 %v1419, 64
    %v1455 = vpop.permute.xlu0 %1454
    %1456 = vrot.lane.b32.xlu0 %v1441, 64
    %v1457 = vpop.permute.xlu0 %1456
    %v1460 = vsel %vm987, %v1068, %v1447
    %v1461 = vsel %vm987, %v1087, %v1449
    %v1462 = vsel %vm987, %v1303, %v1455
    %v1463 = vsel %vm987, %v1323, %v1457
    %v1464 = vpack.c.bf16 %v1461, %v1460
    %v1465 = vpack.c.bf16 %v1463, %v1462
    %v1466 = vld [vmem:[#allocation7] sm:$0xff]
    %v1467 = vld [vmem:[#allocation7 + $0x8] sm:$0xff]
    %v1468 = vld [vmem:[#allocation7 + $0x10] sm:$0xff]
    %v1469 = vld [vmem:[#allocation7 + $0x18] sm:$0xff]
    %v1470 = vld [vmem:[#allocation7 + $0x20] sm:$0xff]
    %v1471 = vld [vmem:[#allocation7 + $0x28] sm:$0xff]
    %v1472 = vld [vmem:[#allocation7 + $0x30] sm:$0xff]
    %v1473 = vld [vmem:[#allocation7 + $0x38] sm:$0xff]
    %v1474 = vld [vmem:[#allocation7 + $0x40] sm:$0xff]
    %v1475 = vld [vmem:[#allocation7 + $0x48] sm:$0xff]
    %v1476 = vld [vmem:[#allocation7 + $0x50] sm:$0xff]
    %v1477 = vld [vmem:[#allocation7 + $0x58] sm:$0xff]
    %v1478 = vld [vmem:[#allocation7 + $0x60] sm:$0xff]
    %v1479 = vld [vmem:[#allocation7 + $0x68] sm:$0xff]
    %v1480 = vld [vmem:[#allocation7 + $0x70] sm:$0xff]
    %v1481 = vld [vmem:[#allocation7 + $0x78] sm:$0xff]
    %v1482 = vld [vmem:[#allocation7 + $0x80] sm:$0xff]
    %v1483 = vld [vmem:[#allocation7 + $0x88] sm:$0xff]
    %v1484 = vld [vmem:[#allocation7 + $0x90] sm:$0xff]
    %v1485 = vld [vmem:[#allocation7 + $0x98] sm:$0xff]
    %v1486 = vld [vmem:[#allocation7 + $0xa0] sm:$0xff]
    %v1487 = vld [vmem:[#allocation7 + $0xa8] sm:$0xff]
    %v1488 = vld [vmem:[#allocation7 + $0xb0] sm:$0xff]
    %v1489 = vld [vmem:[#allocation7 + $0xb8] sm:$0xff]
    %v1490 = vld [vmem:[#allocation7 + $0xc0] sm:$0xff]
    %v1491 = vld [vmem:[#allocation7 + $0xc8] sm:$0xff]
    %v1492 = vld [vmem:[#allocation7 + $0xd0] sm:$0xff]
    %v1493 = vld [vmem:[#allocation7 + $0xd8] sm:$0xff]
    %v1494 = vld [vmem:[#allocation7 + $0xe0] sm:$0xff]
    %v1495 = vld [vmem:[#allocation7 + $0xe8] sm:$0xff]
    %v1496 = vld [vmem:[#allocation7 + $0xf0] sm:$0xff]
    %v1497 = vld [vmem:[#allocation7 + $0xf8] sm:$0xff]
    %v1498 = vld [vmem:[%s3] sm:$0x3]
    %v1500 = vperm.slane %v1498, 0
    %v1501 = vperm.slane %v1498, 1
    %v1536 = vunpack.c.l.b16 %v1466
    %v1537 = vunpack.c.h.b16 %v1466
    %v1538 = vunpack.c.l.b16 %v1467
    %v1539 = vunpack.c.h.b16 %v1467
    %v1540 = vunpack.c.l.b16 %v1468
    %v1541 = vunpack.c.h.b16 %v1468
    %v1542 = vunpack.c.l.b16 %v1469
    %v1543 = vunpack.c.h.b16 %v1469
    %v1544 = vunpack.c.l.b16 %v1470
    %v1545 = vunpack.c.h.b16 %v1470
    %v1546 = vunpack.c.l.b16 %v1471
    %v1547 = vunpack.c.h.b16 %v1471
    %v1548 = vunpack.c.l.b16 %v1472
    %v1549 = vunpack.c.h.b16 %v1472
    %v1550 = vunpack.c.l.b16 %v1473
    %v1551 = vunpack.c.h.b16 %v1473
    %v1552 = vunpack.c.l.b16 %v1474
    %v1553 = vunpack.c.h.b16 %v1474
    %v1554 = vunpack.c.l.b16 %v1475
    %v1555 = vunpack.c.h.b16 %v1475
    %v1556 = vunpack.c.l.b16 %v1476
    %v1557 = vunpack.c.h.b16 %v1476
    %v1558 = vunpack.c.l.b16 %v1477
    %v1559 = vunpack.c.h.b16 %v1477
    %v1560 = vunpack.c.l.b16 %v1478
    %v1561 = vunpack.c.h.b16 %v1478
    %v1562 = vunpack.c.l.b16 %v1479
    %v1563 = vunpack.c.h.b16 %v1479
    %v1564 = vunpack.c.l.b16 %v1480
    %v1565 = vunpack.c.h.b16 %v1480
    %v1566 = vunpack.c.l.b16 %v1481
    %v1567 = vunpack.c.h.b16 %v1481
    %v1568 = vunpack.c.l.b16 %v1482
    %v1569 = vunpack.c.h.b16 %v1482
    %v1570 = vunpack.c.l.b16 %v1483
    %v1571 = vunpack.c.h.b16 %v1483
    %v1572 = vunpack.c.l.b16 %v1484
    %v1573 = vunpack.c.h.b16 %v1484
    %v1574 = vunpack.c.l.b16 %v1485
    %v1575 = vunpack.c.h.b16 %v1485
    %v1576 = vunpack.c.l.b16 %v1486
    %v1577 = vunpack.c.h.b16 %v1486
    %v1578 = vunpack.c.l.b16 %v1487
    %v1579 = vunpack.c.h.b16 %v1487
    %v1580 = vunpack.c.l.b16 %v1488
    %v1581 = vunpack.c.h.b16 %v1488
    %v1582 = vunpack.c.l.b16 %v1489
    %v1583 = vunpack.c.h.b16 %v1489
    %v1584 = vunpack.c.l.b16 %v1490
    %v1585 = vunpack.c.h.b16 %v1490
    %v1586 = vunpack.c.l.b16 %v1491
    %v1587 = vunpack.c.h.b16 %v1491
    %v1588 = vunpack.c.l.b16 %v1492
    %v1589 = vunpack.c.h.b16 %v1492
    %v1590 = vunpack.c.l.b16 %v1493
    %v1591 = vunpack.c.h.b16 %v1493
    %v1592 = vunpack.c.l.b16 %v1494
    %v1593 = vunpack.c.h.b16 %v1494
    %v1594 = vunpack.c.l.b16 %v1495
    %v1595 = vunpack.c.h.b16 %v1495
    %v1596 = vunpack.c.l.b16 %v1496
    %v1597 = vunpack.c.h.b16 %v1496
    %v1598 = vunpack.c.l.b16 %v1497
    %v1599 = vunpack.c.h.b16 %v1497
    %v1600 = vpack.c.b16 %v1538, %v1536
    %v1601 = vpack.c.b16 %v1539, %v1537
    %v1602 = vpack.c.b16 %v1542, %v1540
    %v1603 = vpack.c.b16 %v1543, %v1541
    %v1604 = vpack.c.b16 %v1546, %v1544
    %v1605 = vpack.c.b16 %v1547, %v1545
    %v1606 = vpack.c.b16 %v1550, %v1548
    %v1607 = vpack.c.b16 %v1551, %v1549
    %v1608 = vpack.c.b16 %v1554, %v1552
    %v1609 = vpack.c.b16 %v1555, %v1553
    %v1610 = vpack.c.b16 %v1558, %v1556
    %v1611 = vpack.c.b16 %v1559, %v1557
    %v1612 = vpack.c.b16 %v1562, %v1560
    %v1613 = vpack.c.b16 %v1563, %v1561
    %v1614 = vpack.c.b16 %v1566, %v1564
    %v1615 = vpack.c.b16 %v1567, %v1565
    %v1616 = vpack.c.b16 %v1570, %v1568
    %v1617 = vpack.c.b16 %v1571, %v1569
    %v1618 = vpack.c.b16 %v1574, %v1572
    %v1619 = vpack.c.b16 %v1575, %v1573
    %v1620 = vpack.c.b16 %v1578, %v1576
    %v1621 = vpack.c.b16 %v1579, %v1577
    %v1622 = vpack.c.b16 %v1582, %v1580
    %v1623 = vpack.c.b16 %v1583, %v1581
    %v1624 = vpack.c.b16 %v1586, %v1584
    %v1625 = vpack.c.b16 %v1587, %v1585
    %v1626 = vpack.c.b16 %v1590, %v1588
    %v1627 = vpack.c.b16 %v1591, %v1589
    %v1628 = vpack.c.b16 %v1594, %v1592
    %v1629 = vpack.c.b16 %v1595, %v1593
    %v1630 = vpack.c.b16 %v1598, %v1596
    %v1631 = vpack.c.b16 %v1599, %v1597
    %1664 = vmatpush.bf16.msra.mxu0 %v1614
    %1665 = vmatpush.bf16.msra.mxu0 %v1612
    %1666 = vmatpush.bf16.msra.mxu0 %v1610
    %1667 = vmatpush.bf16.msra.mxu0 %v1608
    %1668 = vmatpush.bf16.msra.mxu0 %v1606
    %1669 = vmatpush.bf16.msra.mxu0 %v1604
    %1670 = vmatpush.bf16.msra.mxu0 %v1602
    %1671 = vmatpush.bf16.msra.mxu0 %v1600
    %1672 = vmatmul.bf16.gmra.mxu0 %v1464
    %v1673 = vpop.f32.mrf.mxu0
    %v1674 = vadd.f32 %v1500, %v1673
    %v1675 = vpop.f32.mrf.mxu0
    %v1676 = vadd.f32 %v1500, %v1675
    %1677 = vdwg.mxu0
    %1678 = vmatpush.bf16.msra.mxu0 %v1630
    %1679 = vmatpush.bf16.msra.mxu0 %v1628
    %1680 = vmatpush.bf16.msra.mxu0 %v1626
    %1681 = vmatpush.bf16.msra.mxu0 %v1624
    %1682 = vmatpush.bf16.msra.mxu0 %v1622
    %1683 = vmatpush.bf16.msra.mxu0 %v1620
    %1684 = vmatpush.bf16.msra.mxu0 %v1618
    %1685 = vmatpush.bf16.msra.mxu0 %v1616
    %1686 = vmatmul.bf16.gmra.mxu0 %v1465
    %v1687 = vpop.f32.mrf.mxu0
    %v1688 = vadd.f32 %v1674, %v1687
    %v1689 = vpop.f32.mrf.mxu0
    %v1690 = vadd.f32 %v1676, %v1689
    %1691 = vdwg.mxu0
    %1692 = vmatpush.bf16.msra.mxu0 %v1615
    %1693 = vmatpush.bf16.msra.mxu0 %v1613
    %1694 = vmatpush.bf16.msra.mxu0 %v1611
    %1695 = vmatpush.bf16.msra.mxu0 %v1609
    %1696 = vmatpush.bf16.msra.mxu0 %v1607
    %1697 = vmatpush.bf16.msra.mxu0 %v1605
    %1698 = vmatpush.bf16.msra.mxu0 %v1603
    %1699 = vmatpush.bf16.msra.mxu0 %v1601
    %1700 = vmatmul.bf16.gmra.mxu0 %v1464
    %v1701 = vpop.f32.mrf.mxu0
    %v1702 = vadd.f32 %v1501, %v1701
    %v1703 = vpop.f32.mrf.mxu0
    %v1704 = vadd.f32 %v1501, %v1703
    %1705 = vdwg.mxu0
    %1706 = vmatpush.bf16.msra.mxu0 %v1631
    %1707 = vmatpush.bf16.msra.mxu0 %v1629
    %1708 = vmatpush.bf16.msra.mxu0 %v1627
    %1709 = vmatpush.bf16.msra.mxu0 %v1625
    %1710 = vmatpush.bf16.msra.mxu0 %v1623
    %1711 = vmatpush.bf16.msra.mxu0 %v1621
    %1712 = vmatpush.bf16.msra.mxu0 %v1619
    %1713 = vmatpush.bf16.msra.mxu0 %v1617
    %1714 = vmatmul.bf16.gmra.mxu0 %v1465
    %v1715 = vpop.f32.mrf.mxu0
    %v1716 = vadd.f32 %v1702, %v1715
    %v1717 = vpop.f32.mrf.mxu0
    %v1718 = vadd.f32 %v1704, %v1717
    %1719 = vdwg.mxu0
    %v1720 = vadd.f32 %v148, %v1688
    %v1721 = vadd.f32 %v149, %v1716
    %v1722 = vadd.f32 %v150, %v1690
    %v1723 = vadd.f32 %v151, %v1718
    %v1724 = vld [vmem:[%s10] sm:$0x3]
    %v1725 = vld [vmem:[%s11] sm:$0x3]
    %v1726 = vadd.f32 %v1720, %v1721
    %1727 = vadd.xlane.f32.xlu0 %v1726
    %v1728 = vpop.xlane.xlu0 %1727
    %v1729 = vadd.f32 %v1722, %v1723
    %1730 = vadd.xlane.f32.xlu0 %v1729
    %v1731 = vpop.xlane.xlu0 %1730
    %v1732 = vmul.f32 %v1728, %v166
    %v1733 = vmul.f32 %v1731, %v166
    %v1734 = vsub.f32 %v1720, %v1732
    %v1735 = vsub.f32 %v1721, %v1732
    %v1736 = vsub.f32 %v1722, %v1733
    %v1737 = vsub.f32 %v1723, %v1733
    %v1738 = vmul.f32 %v1734, %v1734
    %v1739 = vmul.f32 %v1735, %v1735
    %v1740 = vmul.f32 %v1736, %v1736
    %v1741 = vmul.f32 %v1737, %v1737
    %v1742 = vadd.f32 %v1738, %v1739
    %1743 = vadd.xlane.f32.xlu0 %v1742
    %v1744 = vpop.xlane.xlu0 %1743
    %v1745 = vadd.f32 %v1740, %v1741
    %1746 = vadd.xlane.f32.xlu0 %v1745
    %v1747 = vpop.xlane.xlu0 %1746
    %v1748 = vmul.f32 %v1744, %v166
    %v1749 = vmul.f32 %v1747, %v166
    %v1750 = vadd.f32 %v1748, 1e-05
    %v1751 = vadd.f32 %v1749, 1e-05
    %v1752 = vrsqrt.pop %v1750
    %v1753 = vmul.f32 %v1752, %v1750
    %v1754 = vmul.f32 %v1753, %v1752
    %v1755 = vmul.f32 0.5, %v1754
    %v1756 = vsub.f32 1.5, %v1755
    %v1757 = vmul.f32 %v1752, %v1756
    %vm1758 = vweird.f32 %v1750
    %vm1759 = vweird.f32 %v1752
    %vm1760 = vmor %vm1758, %vm1759
    %v1761 = vsel %vm1760, %v1752, %v1757
    %v1762 = vrsqrt.pop %v1751
    %v1763 = vmul.f32 %v1762, %v1751
    %v1764 = vmul.f32 %v1763, %v1762
    %v1765 = vmul.f32 0.5, %v1764
    %v1766 = vsub.f32 1.5, %v1765
    %v1767 = vmul.f32 %v1762, %v1766
    %vm1768 = vweird.f32 %v1751
    %vm1769 = vweird.f32 %v1762
    %vm1770 = vmor %vm1768, %vm1769
    %v1771 = vsel %vm1770, %v1762, %v1767
    %v1772 = vmul.f32 %v1734, %v1761
    %v1773 = vmul.f32 %v1735, %v1761
    %v1774 = vmul.f32 %v1736, %v1771
    %v1775 = vmul.f32 %v1737, %v1771
    %v1777 = vperm.slane %v1724, 0
    %v1778 = vperm.slane %v1724, 1
    %v1781 = vmul.f32 %v1772, %v1777
    %v1782 = vmul.f32 %v1773, %v1778
    %v1783 = vmul.f32 %v1774, %v1777
    %v1784 = vmul.f32 %v1775, %v1778
    %v1786 = vperm.slane %v1725, 0
    %v1787 = vperm.slane %v1725, 1
    %v1790 = vadd.f32 %v1781, %v1786
    %v1791 = vadd.f32 %v1782, %v1787
    %v1792 = vadd.f32 %v1783, %v1786
    %v1793 = vadd.f32 %v1784, %v1787
    %v1794 = vpack.c.bf16 %v1792, %v1790
    %v1795 = vpack.c.bf16 %v1793, %v1791
    %v1796 = vld [vmem:[#allocation10] sm:$0xff]
    %v1797 = vld [vmem:[#allocation10 + $0x8] sm:$0xff]
    %v1798 = vld [vmem:[#allocation10 + $0x10] sm:$0xff]
    %v1799 = vld [vmem:[#allocation10 + $0x18] sm:$0xff]
    %v1800 = vld [vmem:[#allocation10 + $0x20] sm:$0xff]
    %v1801 = vld [vmem:[#allocation10 + $0x28] sm:$0xff]
    %v1802 = vld [vmem:[#allocation10 + $0x30] sm:$0xff]
    %v1803 = vld [vmem:[#allocation10 + $0x38] sm:$0xff]
    %v1804 = vld [vmem:[#allocation10 + $0x40] sm:$0xff]
    %v1805 = vld [vmem:[#allocation10 + $0x48] sm:$0xff]
    %v1806 = vld [vmem:[#allocation10 + $0x50] sm:$0xff]
    %v1807 = vld [vmem:[#allocation10 + $0x58] sm:$0xff]
    %v1808 = vld [vmem:[#allocation10 + $0x60] sm:$0xff]
    %v1809 = vld [vmem:[#allocation10 + $0x68] sm:$0xff]
    %v1810 = vld [vmem:[#allocation10 + $0x70] sm:$0xff]
    %v1811 = vld [vmem:[#allocation10 + $0x78] sm:$0xff]
    %v1812 = vld [vmem:[#allocation10 + $0x80] sm:$0xff]
    %v1813 = vld [vmem:[#allocation10 + $0x88] sm:$0xff]
    %v1814 = vld [vmem:[#allocation10 + $0x90] sm:$0xff]
    %v1815 = vld [vmem:[#allocation10 + $0x98] sm:$0xff]
    %v1816 = vld [vmem:[#allocation10 + $0xa0] sm:$0xff]
    %v1817 = vld [vmem:[#allocation10 + $0xa8] sm:$0xff]
    %v1818 = vld [vmem:[#allocation10 + $0xb0] sm:$0xff]
    %v1819 = vld [vmem:[#allocation10 + $0xb8] sm:$0xff]
    %v1820 = vld [vmem:[#allocation10 + $0xc0] sm:$0xff]
    %v1821 = vld [vmem:[#allocation10 + $0xc8] sm:$0xff]
    %v1822 = vld [vmem:[#allocation10 + $0xd0] sm:$0xff]
    %v1823 = vld [vmem:[#allocation10 + $0xd8] sm:$0xff]
    %v1824 = vld [vmem:[#allocation10 + $0xe0] sm:$0xff]
    %v1825 = vld [vmem:[#allocation10 + $0xe8] sm:$0xff]
    %v1826 = vld [vmem:[#allocation10 + $0xf0] sm:$0xff]
    %v1827 = vld [vmem:[#allocation10 + $0xf8] sm:$0xff]
    %v1828 = vld [vmem:[#allocation10 + $0x100] sm:$0xff]
    %v1829 = vld [vmem:[#allocation10 + $0x108] sm:$0xff]
    %v1830 = vld [vmem:[#allocation10 + $0x110] sm:$0xff]
    %v1831 = vld [vmem:[#allocation10 + $0x118] sm:$0xff]
    %v1832 = vld [vmem:[#allocation10 + $0x120] sm:$0xff]
    %v1833 = vld [vmem:[#allocation10 + $0x128] sm:$0xff]
    %v1834 = vld [vmem:[#allocation10 + $0x130] sm:$0xff]
    %v1835 = vld [vmem:[#allocation10 + $0x138] sm:$0xff]
    %v1836 = vld [vmem:[#allocation10 + $0x140] sm:$0xff]
    %v1837 = vld [vmem:[#allocation10 + $0x148] sm:$0xff]
    %v1838 = vld [vmem:[#allocation10 + $0x150] sm:$0xff]
    %v1839 = vld [vmem:[#allocation10 + $0x158] sm:$0xff]
    %v1840 = vld [vmem:[#allocation10 + $0x160] sm:$0xff]
    %v1841 = vld [vmem:[#allocation10 + $0x168] sm:$0xff]
    %v1842 = vld [vmem:[#allocation10 + $0x170] sm:$0xff]
    %v1843 = vld [vmem:[#allocation10 + $0x178] sm:$0xff]
    %v1844 = vld [vmem:[#allocation10 + $0x180] sm:$0xff]
    %v1845 = vld [vmem:[#allocation10 + $0x188] sm:$0xff]
    %v1846 = vld [vmem:[#allocation10 + $0x190] sm:$0xff]
    %v1847 = vld [vmem:[#allocation10 + $0x198] sm:$0xff]
    %v1848 = vld [vmem:[#allocation10 + $0x1a0] sm:$0xff]
    %v1849 = vld [vmem:[#allocation10 + $0x1a8] sm:$0xff]
    %v1850 = vld [vmem:[#allocation10 + $0x1b0] sm:$0xff]
    %v1851 = vld [vmem:[#allocation10 + $0x1b8] sm:$0xff]
    %v1852 = vld [vmem:[#allocation10 + $0x1c0] sm:$0xff]
    %v1853 = vld [vmem:[#allocation10 + $0x1c8] sm:$0xff]
    %v1854 = vld [vmem:[#allocation10 + $0x1d0] sm:$0xff]
    %v1855 = vld [vmem:[#allocation10 + $0x1d8] sm:$0xff]
    %v1856 = vld [vmem:[#allocation10 + $0x1e0] sm:$0xff]
    %v1857 = vld [vmem:[#allocation10 + $0x1e8] sm:$0xff]
    %v1858 = vld [vmem:[#allocation10 + $0x1f0] sm:$0xff]
    %v1859 = vld [vmem:[#allocation10 + $0x1f8] sm:$0xff]
    %v1860 = vld [vmem:[#allocation10 + $0x200] sm:$0xff]
    %v1861 = vld [vmem:[#allocation10 + $0x208] sm:$0xff]
    %v1862 = vld [vmem:[#allocation10 + $0x210] sm:$0xff]
    %v1863 = vld [vmem:[#allocation10 + $0x218] sm:$0xff]
    %v1864 = vld [vmem:[#allocation10 + $0x220] sm:$0xff]
    %v1865 = vld [vmem:[#allocation10 + $0x228] sm:$0xff]
    %v1866 = vld [vmem:[#allocation10 + $0x230] sm:$0xff]
    %v1867 = vld [vmem:[#allocation10 + $0x238] sm:$0xff]
    %v1868 = vld [vmem:[#allocation10 + $0x240] sm:$0xff]
    %v1869 = vld [vmem:[#allocation10 + $0x248] sm:$0xff]
    %v1870 = vld [vmem:[#allocation10 + $0x250] sm:$0xff]
    %v1871 = vld [vmem:[#allocation10 + $0x258] sm:$0xff]
    %v1872 = vld [vmem:[#allocation10 + $0x260] sm:$0xff]
    %v1873 = vld [vmem:[#allocation10 + $0x268] sm:$0xff]
    %v1874 = vld [vmem:[#allocation10 + $0x270] sm:$0xff]
    %v1875 = vld [vmem:[#allocation10 + $0x278] sm:$0xff]
    %v1876 = vld [vmem:[#allocation10 + $0x280] sm:$0xff]
    %v1877 = vld [vmem:[#allocation10 + $0x288] sm:$0xff]
    %v1878 = vld [vmem:[#allocation10 + $0x290] sm:$0xff]
    %v1879 = vld [vmem:[#allocation10 + $0x298] sm:$0xff]
    %v1880 = vld [vmem:[#allocation10 + $0x2a0] sm:$0xff]
    %v1881 = vld [vmem:[#allocation10 + $0x2a8] sm:$0xff]
    %v1882 = vld [vmem:[#allocation10 + $0x2b0] sm:$0xff]
    %v1883 = vld [vmem:[#allocation10 + $0x2b8] sm:$0xff]
    %v1884 = vld [vmem:[#allocation10 + $0x2c0] sm:$0xff]
    %v1885 = vld [vmem:[#allocation10 + $0x2c8] sm:$0xff]
    %v1886 = vld [vmem:[#allocation10 + $0x2d0] sm:$0xff]
    %v1887 = vld [vmem:[#allocation10 + $0x2d8] sm:$0xff]
    %v1888 = vld [vmem:[#allocation10 + $0x2e0] sm:$0xff]
    %v1889 = vld [vmem:[#allocation10 + $0x2e8] sm:$0xff]
    %v1890 = vld [vmem:[#allocation10 + $0x2f0] sm:$0xff]
    %v1891 = vld [vmem:[#allocation10 + $0x2f8] sm:$0xff]
    %v1892 = vld [vmem:[#allocation10 + $0x300] sm:$0xff]
    %v1893 = vld [vmem:[#allocation10 + $0x308] sm:$0xff]
    %v1894 = vld [vmem:[#allocation10 + $0x310] sm:$0xff]
    %v1895 = vld [vmem:[#allocation10 + $0x318] sm:$0xff]
    %v1896 = vld [vmem:[#allocation10 + $0x320] sm:$0xff]
    %v1897 = vld [vmem:[#allocation10 + $0x328] sm:$0xff]
    %v1898 = vld [vmem:[#allocation10 + $0x330] sm:$0xff]
    %v1899 = vld [vmem:[#allocation10 + $0x338] sm:$0xff]
    %v1900 = vld [vmem:[#allocation10 + $0x340] sm:$0xff]
    %v1901 = vld [vmem:[#allocation10 + $0x348] sm:$0xff]
    %v1902 = vld [vmem:[#allocation10 + $0x350] sm:$0xff]
    %v1903 = vld [vmem:[#allocation10 + $0x358] sm:$0xff]
    %v1904 = vld [vmem:[#allocation10 + $0x360] sm:$0xff]
    %v1905 = vld [vmem:[#allocation10 + $0x368] sm:$0xff]
    %v1906 = vld [vmem:[#allocation10 + $0x370] sm:$0xff]
    %v1907 = vld [vmem:[#allocation10 + $0x378] sm:$0xff]
    %v1908 = vld [vmem:[#allocation10 + $0x380] sm:$0xff]
    %v1909 = vld [vmem:[#allocation10 + $0x388] sm:$0xff]
    %v1910 = vld [vmem:[#allocation10 + $0x390] sm:$0xff]
    %v1911 = vld [vmem:[#allocation10 + $0x398] sm:$0xff]
    %v1912 = vld [vmem:[#allocation10 + $0x3a0] sm:$0xff]
    %v1913 = vld [vmem:[#allocation10 + $0x3a8] sm:$0xff]
    %v1914 = vld [vmem:[#allocation10 + $0x3b0] sm:$0xff]
    %v1915 = vld [vmem:[#allocation10 + $0x3b8] sm:$0xff]
    %v1916 = vld [vmem:[#allocation10 + $0x3c0] sm:$0xff]
    %v1917 = vld [vmem:[#allocation10 + $0x3c8] sm:$0xff]
    %v1918 = vld [vmem:[#allocation10 + $0x3d0] sm:$0xff]
    %v1919 = vld [vmem:[#allocation10 + $0x3d8] sm:$0xff]
    %v1920 = vld [vmem:[#allocation10 + $0x3e0] sm:$0xff]
    %v1921 = vld [vmem:[#allocation10 + $0x3e8] sm:$0xff]
    %v1922 = vld [vmem:[#allocation10 + $0x3f0] sm:$0xff]
    %v1923 = vld [vmem:[#allocation10 + $0x3f8] sm:$0xff]
    %v1924 = vld [vmem:[#allocation11] sm:$0xff]
    %v1926 = vperm.slane %v1924, 0
    %v1927 = vperm.slane %v1924, 1
    %v1928 = vperm.slane %v1924, 2
    %v1929 = vperm.slane %v1924, 3
    %v1930 = vperm.slane %v1924, 4
    %v1931 = vperm.slane %v1924, 5
    %v1932 = vperm.slane %v1924, 6
    %v1933 = vperm.slane %v1924, 7
    %v2070 = vunpack.c.l.b16 %v1796
    %v2071 = vunpack.c.h.b16 %v1796
    %v2072 = vunpack.c.l.b16 %v1797
    %v2073 = vunpack.c.h.b16 %v1797
    %v2074 = vunpack.c.l.b16 %v1798
    %v2075 = vunpack.c.h.b16 %v1798
    %v2076 = vunpack.c.l.b16 %v1799
    %v2077 = vunpack.c.h.b16 %v1799
    %v2078 = vunpack.c.l.b16 %v1800
    %v2079 = vunpack.c.h.b16 %v1800
    %v2080 = vunpack.c.l.b16 %v1801
    %v2081 = vunpack.c.h.b16 %v1801
    %v2082 = vunpack.c.l.b16 %v1802
    %v2083 = vunpack.c.h.b16 %v1802
    %v2084 = vunpack.c.l.b16 %v1803
    %v2085 = vunpack.c.h.b16 %v1803
    %v2086 = vunpack.c.l.b16 %v1804
    %v2087 = vunpack.c.h.b16 %v1804
    %v2088 = vunpack.c.l.b16 %v1805
    %v2089 = vunpack.c.h.b16 %v1805
    %v2090 = vunpack.c.l.b16 %v1806
    %v2091 = vunpack.c.h.b16 %v1806
    %v2092 = vunpack.c.l.b16 %v1807
    %v2093 = vunpack.c.h.b16 %v1807
    %v2094 = vunpack.c.l.b16 %v1808
    %v2095 = vunpack.c.h.b16 %v1808
    %v2096 = vunpack.c.l.b16 %v1809
    %v2097 = vunpack.c.h.b16 %v1809
    %v2098 = vunpack.c.l.b16 %v1810
    %v2099 = vunpack.c.h.b16 %v1810
    %v2100 = vunpack.c.l.b16 %v1811
    %v2101 = vunpack.c.h.b16 %v1811
    %v2102 = vunpack.c.l.b16 %v1812
    %v2103 = vunpack.c.h.b16 %v1812
    %v2104 = vunpack.c.l.b16 %v1813
    %v2105 = vunpack.c.h.b16 %v1813
    %v2106 = vunpack.c.l.b16 %v1814
    %v2107 = vunpack.c.h.b16 %v1814
    %v2108 = vunpack.c.l.b16 %v1815
    %v2109 = vunpack.c.h.b16 %v1815
    %v2110 = vunpack.c.l.b16 %v1816
    %v2111 = vunpack.c.h.b16 %v1816
    %v2112 = vunpack.c.l.b16 %v1817
    %v2113 = vunpack.c.h.b16 %v1817
    %v2114 = vunpack.c.l.b16 %v1818
    %v2115 = vunpack.c.h.b16 %v1818
    %v2116 = vunpack.c.l.b16 %v1819
    %v2117 = vunpack.c.h.b16 %v1819
    %v2118 = vunpack.c.l.b16 %v1820
    %v2119 = vunpack.c.h.b16 %v1820
    %v2120 = vunpack.c.l.b16 %v1821
    %v2121 = vunpack.c.h.b16 %v1821
    %v2122 = vunpack.c.l.b16 %v1822
    %v2123 = vunpack.c.h.b16 %v1822
    %v2124 = vunpack.c.l.b16 %v1823
    %v2125 = vunpack.c.h.b16 %v1823
    %v2126 = vunpack.c.l.b16 %v1824
    %v2127 = vunpack.c.h.b16 %v1824
    %v2128 = vunpack.c.l.b16 %v1825
    %v2129 = vunpack.c.h.b16 %v1825
    %v2130 = vunpack.c.l.b16 %v1826
    %v2131 = vunpack.c.h.b16 %v1826
    %v2132 = vunpack.c.l.b16 %v1827
    %v2133 = vunpack.c.h.b16 %v1827
    %v2134 = vunpack.c.l.b16 %v1828
    %v2135 = vunpack.c.h.b16 %v1828
    %v2136 = vunpack.c.l.b16 %v1829
    %v2137 = vunpack.c.h.b16 %v1829
    %v2138 = vunpack.c.l.b16 %v1830
    %v2139 = vunpack.c.h.b16 %v1830
    %v2140 = vunpack.c.l.b16 %v1831
    %v2141 = vunpack.c.h.b16 %v1831
    %v2142 = vunpack.c.l.b16 %v1832
    %v2143 = vunpack.c.h.b16 %v1832
    %v2144 = vunpack.c.l.b16 %v1833
    %v2145 = vunpack.c.h.b16 %v1833
    %v2146 = vunpack.c.l.b16 %v1834
    %v2147 = vunpack.c.h.b16 %v1834
    %v2148 = vunpack.c.l.b16 %v1835
    %v2149 = vunpack.c.h.b16 %v1835
    %v2150 = vunpack.c.l.b16 %v1836
    %v2151 = vunpack.c.h.b16 %v1836
    %v2152 = vunpack.c.l.b16 %v1837
    %v2153 = vunpack.c.h.b16 %v1837
    %v2154 = vunpack.c.l.b16 %v1838
    %v2155 = vunpack.c.h.b16 %v1838
    %v2156 = vunpack.c.l.b16 %v1839
    %v2157 = vunpack.c.h.b16 %v1839
    %v2158 = vunpack.c.l.b16 %v1840
    %v2159 = vunpack.c.h.b16 %v1840
    %v2160 = vunpack.c.l.b16 %v1841
    %v2161 = vunpack.c.h.b16 %v1841
    %v2162 = vunpack.c.l.b16 %v1842
    %v2163 = vunpack.c.h.b16 %v1842
    %v2164 = vunpack.c.l.b16 %v1843
    %v2165 = vunpack.c.h.b16 %v1843
    %v2166 = vunpack.c.l.b16 %v1844
    %v2167 = vunpack.c.h.b16 %v1844
    %v2168 = vunpack.c.l.b16 %v1845
    %v2169 = vunpack.c.h.b16 %v1845
    %v2170 = vunpack.c.l.b16 %v1846
    %v2171 = vunpack.c.h.b16 %v1846
    %v2172 = vunpack.c.l.b16 %v1847
    %v2173 = vunpack.c.h.b16 %v1847
    %v2174 = vunpack.c.l.b16 %v1848
    %v2175 = vunpack.c.h.b16 %v1848
    %v2176 = vunpack.c.l.b16 %v1849
    %v2177 = vunpack.c.h.b16 %v1849
    %v2178 = vunpack.c.l.b16 %v1850
    %v2179 = vunpack.c.h.b16 %v1850
    %v2180 = vunpack.c.l.b16 %v1851
    %v2181 = vunpack.c.h.b16 %v1851
    %v2182 = vunpack.c.l.b16 %v1852
    %v2183 = vunpack.c.h.b16 %v1852
    %v2184 = vunpack.c.l.b16 %v1853
    %v2185 = vunpack.c.h.b16 %v1853
    %v2186 = vunpack.c.l.b16 %v1854
    %v2187 = vunpack.c.h.b16 %v1854
    %v2188 = vunpack.c.l.b16 %v1855
    %v2189 = vunpack.c.h.b16 %v1855
    %v2190 = vunpack.c.l.b16 %v1856
    %v2191 = vunpack.c.h.b16 %v1856
    %v2192 = vunpack.c.l.b16 %v1857
    %v2193 = vunpack.c.h.b16 %v1857
    %v2194 = vunpack.c.l.b16 %v1858
    %v2195 = vunpack.c.h.b16 %v1858
    %v2196 = vunpack.c.l.b16 %v1859
    %v2197 = vunpack.c.h.b16 %v1859
    %v2198 = vunpack.c.l.b16 %v1860
    %v2199 = vunpack.c.h.b16 %v1860
    %v2200 = vunpack.c.l.b16 %v1861
    %v2201 = vunpack.c.h.b16 %v1861
    %v2202 = vunpack.c.l.b16 %v1862
    %v2203 = vunpack.c.h.b16 %v1862
    %v2204 = vunpack.c.l.b16 %v1863
    %v2205 = vunpack.c.h.b16 %v1863
    %v2206 = vunpack.c.l.b16 %v1864
    %v2207 = vunpack.c.h.b16 %v1864
    %v2208 = vunpack.c.l.b16 %v1865
    %v2209 = vunpack.c.h.b16 %v1865
    %v2210 = vunpack.c.l.b16 %v1866
    %v2211 = vunpack.c.h.b16 %v1866
    %v2212 = vunpack.c.l.b16 %v1867
    %v2213 = vunpack.c.h.b16 %v1867
    %v2214 = vunpack.c.l.b16 %v1868
    %v2215 = vunpack.c.h.b16 %v1868
    %v2216 = vunpack.c.l.b16 %v1869
    %v2217 = vunpack.c.h.b16 %v1869
    %v2218 = vunpack.c.l.b16 %v1870
    %v2219 = vunpack.c.h.b16 %v1870
    %v2220 = vunpack.c.l.b16 %v1871
    %v2221 = vunpack.c.h.b16 %v1871
    %v2222 = vunpack.c.l.b16 %v1872
    %v2223 = vunpack.c.h.b16 %v1872
    %v2224 = vunpack.c.l.b16 %v1873
    %v2225 = vunpack.c.h.b16 %v1873
    %v2226 = vunpack.c.l.b16 %v1874
    %v2227 = vunpack.c.h.b16 %v1874
    %v2228 = vunpack.c.l.b16 %v1875
    %v2229 = vunpack.c.h.b16 %v1875
    %v2230 = vunpack.c.l.b16 %v1876
    %v2231 = vunpack.c.h.b16 %v1876
    %v2232 = vunpack.c.l.b16 %v1877
    %v2233 = vunpack.c.h.b16 %v1877
    %v2234 = vunpack.c.l.b16 %v1878
    %v2235 = vunpack.c.h.b16 %v1878
    %v2236 = vunpack.c.l.b16 %v1879
    %v2237 = vunpack.c.h.b16 %v1879
    %v2238 = vunpack.c.l.b16 %v1880
    %v2239 = vunpack.c.h.b16 %v1880
    %v2240 = vunpack.c.l.b16 %v1881
    %v2241 = vunpack.c.h.b16 %v1881
    %v2242 = vunpack.c.l.b16 %v1882
    %v2243 = vunpack.c.h.b16 %v1882
    %v2244 = vunpack.c.l.b16 %v1883
    %v2245 = vunpack.c.h.b16 %v1883
    %v2246 = vunpack.c.l.b16 %v1884
    %v2247 = vunpack.c.h.b16 %v1884
    %v2248 = vunpack.c.l.b16 %v1885
    %v2249 = vunpack.c.h.b16 %v1885
    %v2250 = vunpack.c.l.b16 %v1886
    %v2251 = vunpack.c.h.b16 %v1886
    %v2252 = vunpack.c.l.b16 %v1887
    %v2253 = vunpack.c.h.b16 %v1887
    %v2254 = vunpack.c.l.b16 %v1888
    %v2255 = vunpack.c.h.b16 %v1888
    %v2256 = vunpack.c.l.b16 %v1889
    %v2257 = vunpack.c.h.b16 %v1889
    %v2258 = vunpack.c.l.b16 %v1890
    %v2259 = vunpack.c.h.b16 %v1890
    %v2260 = vunpack.c.l.b16 %v1891
    %v2261 = vunpack.c.h.b16 %v1891
    %v2262 = vunpack.c.l.b16 %v1892
    %v2263 = vunpack.c.h.b16 %v1892
    %v2264 = vunpack.c.l.b16 %v1893
    %v2265 = vunpack.c.h.b16 %v1893
    %v2266 = vunpack.c.l.b16 %v1894
    %v2267 = vunpack.c.h.b16 %v1894
    %v2268 = vunpack.c.l.b16 %v1895
    %v2269 = vunpack.c.h.b16 %v1895
    %v2270 = vunpack.c.l.b16 %v1896
    %v2271 = vunpack.c.h.b16 %v1896
    %v2272 = vunpack.c.l.b16 %v1897
    %v2273 = vunpack.c.h.b16 %v1897
    %v2274 = vunpack.c.l.b16 %v1898
    %v2275 = vunpack.c.h.b16 %v1898
    %v2276 = vunpack.c.l.b16 %v1899
    %v2277 = vunpack.c.h.b16 %v1899
    %v2278 = vunpack.c.l.b16 %v1900
    %v2279 = vunpack.c.h.b16 %v1900
    %v2280 = vunpack.c.l.b16 %v1901
    %v2281 = vunpack.c.h.b16 %v1901
    %v2282 = vunpack.c.l.b16 %v1902
    %v2283 = vunpack.c.h.b16 %v1902
    %v2284 = vunpack.c.l.b16 %v1903
    %v2285 = vunpack.c.h.b16 %v1903
    %v2286 = vunpack.c.l.b16 %v1904
    %v2287 = vunpack.c.h.b16 %v1904
    %v2288 = vunpack.c.l.b16 %v1905
    %v2289 = vunpack.c.h.b16 %v1905
    %v2290 = vunpack.c.l.b16 %v1906
    %v2291 = vunpack.c.h.b16 %v1906
    %v2292 = vunpack.c.l.b16 %v1907
    %v2293 = vunpack.c.h.b16 %v1907
    %v2294 = vunpack.c.l.b16 %v1908
    %v2295 = vunpack.c.h.b16 %v1908
    %v2296 = vunpack.c.l.b16 %v1909
    %v2297 = vunpack.c.h.b16 %v1909
    %v2298 = vunpack.c.l.b16 %v1910
    %v2299 = vunpack.c.h.b16 %v1910
    %v2300 = vunpack.c.l.b16 %v1911
    %v2301 = vunpack.c.h.b16 %v1911
    %v2302 = vunpack.c.l.b16 %v1912
    %v2303 = vunpack.c.h.b16 %v1912
    %v2304 = vunpack.c.l.b16 %v1913
    %v2305 = vunpack.c.h.b16 %v1913
    %v2306 = vunpack.c.l.b16 %v1914
    %v2307 = vunpack.c.h.b16 %v1914
    %v2308 = vunpack.c.l.b16 %v1915
    %v2309 = vunpack.c.h.b16 %v1915
    %v2310 = vunpack.c.l.b16 %v1916
    %v2311 = vunpack.c.h.b16 %v1916
    %v2312 = vunpack.c.l.b16 %v1917
    %v2313 = vunpack.c.h.b16 %v1917
    %v2314 = vunpack.c.l.b16 %v1918
    %v2315 = vunpack.c.h.b16 %v1918
    %v2316 = vunpack.c.l.b16 %v1919
    %v2317 = vunpack.c.h.b16 %v1919
    %v2318 = vunpack.c.l.b16 %v1920
    %v2319 = vunpack.c.h.b16 %v1920
    %v2320 = vunpack.c.l.b16 %v1921
    %v2321 = vunpack.c.h.b16 %v1921
    %v2322 = vunpack.c.l.b16 %v1922
    %v2323 = vunpack.c.h.b16 %v1922
    %v2324 = vunpack.c.l.b16 %v1923
    %v2325 = vunpack.c.h.b16 %v1923
    %v2326 = vpack.c.b16 %v2078, %v2070
    %v2327 = vpack.c.b16 %v2079, %v2071
    %v2328 = vpack.c.b16 %v2080, %v2072
    %v2329 = vpack.c.b16 %v2081, %v2073
    %v2330 = vpack.c.b16 %v2082, %v2074
    %v2331 = vpack.c.b16 %v2083, %v2075
    %v2332 = vpack.c.b16 %v2084, %v2076
    %v2333 = vpack.c.b16 %v2085, %v2077
    %v2334 = vpack.c.b16 %v2094, %v2086
    %v2335 = vpack.c.b16 %v2095, %v2087
    %v2336 = vpack.c.b16 %v2096, %v2088
    %v2337 = vpack.c.b16 %v2097, %v2089
    %v2338 = vpack.c.b16 %v2098, %v2090
    %v2339 = vpack.c.b16 %v2099, %v2091
    %v2340 = vpack.c.b16 %v2100, %v2092
    %v2341 = vpack.c.b16 %v2101, %v2093
    %v2342 = vpack.c.b16 %v2110, %v2102
    %v2343 = vpack.c.b16 %v2111, %v2103
    %v2344 = vpack.c.b16 %v2112, %v2104
    %v2345 = vpack.c.b16 %v2113, %v2105
    %v2346 = vpack.c.b16 %v2114, %v2106
    %v2347 = vpack.c.b16 %v2115, %v2107
    %v2348 = vpack.c.b16 %v2116, %v2108
    %v2349 = vpack.c.b16 %v2117, %v2109
    %v2350 = vpack.c.b16 %v2126, %v2118
    %v2351 = vpack.c.b16 %v2127, %v2119
    %v2352 = vpack.c.b16 %v2128, %v2120
    %v2353 = vpack.c.b16 %v2129, %v2121
    %v2354 = vpack.c.b16 %v2130, %v2122
    %v2355 = vpack.c.b16 %v2131, %v2123
    %v2356 = vpack.c.b16 %v2132, %v2124
    %v2357 = vpack.c.b16 %v2133, %v2125
    %v2358 = vpack.c.b16 %v2142, %v2134
    %v2359 = vpack.c.b16 %v2143, %v2135
    %v2360 = vpack.c.b16 %v2144, %v2136
    %v2361 = vpack.c.b16 %v2145, %v2137
    %v2362 = vpack.c.b16 %v2146, %v2138
    %v2363 = vpack.c.b16 %v2147, %v2139
    %v2364 = vpack.c.b16 %v2148, %v2140
    %v2365 = vpack.c.b16 %v2149, %v2141
    %v2366 = vpack.c.b16 %v2158, %v2150
    %v2367 = vpack.c.b16 %v2159, %v2151
    %v2368 = vpack.c.b16 %v2160, %v2152
    %v2369 = vpack.c.b16 %v2161, %v2153
    %v2370 = vpack.c.b16 %v2162, %v2154
    %v2371 = vpack.c.b16 %v2163, %v2155
    %v2372 = vpack.c.b16 %v2164, %v2156
    %v2373 = vpack.c.b16 %v2165, %v2157
    %v2374 = vpack.c.b16 %v2174, %v2166
    %v2375 = vpack.c.b16 %v2175, %v2167
    %v2376 = vpack.c.b16 %v2176, %v2168
    %v2377 = vpack.c.b16 %v2177, %v2169
    %v2378 = vpack.c.b16 %v2178, %v2170
    %v2379 = vpack.c.b16 %v2179, %v2171
    %v2380 = vpack.c.b16 %v2180, %v2172
    %v2381 = vpack.c.b16 %v2181, %v2173
    %v2382 = vpack.c.b16 %v2190, %v2182
    %v2383 = vpack.c.b16 %v2191, %v2183
    %v2384 = vpack.c.b16 %v2192, %v2184
    %v2385 = vpack.c.b16 %v2193, %v2185
    %v2386 = vpack.c.b16 %v2194, %v2186
    %v2387 = vpack.c.b16 %v2195, %v2187
    %v2388 = vpack.c.b16 %v2196, %v2188
    %v2389 = vpack.c.b16 %v2197, %v2189
    %v2390 = vpack.c.b16 %v2206, %v2198
    %v2391 = vpack.c.b16 %v2207, %v2199
    %v2392 = vpack.c.b16 %v2208, %v2200
    %v2393 = vpack.c.b16 %v2209, %v2201
    %v2394 = vpack.c.b16 %v2210, %v2202
    %v2395 = vpack.c.b16 %v2211, %v2203
    %v2396 = vpack.c.b16 %v2212, %v2204
    %v2397 = vpack.c.b16 %v2213, %v2205
    %v2398 = vpack.c.b16 %v2222, %v2214
    %v2399 = vpack.c.b16 %v2223, %v2215
    %v2400 = vpack.c.b16 %v2224, %v2216
    %v2401 = vpack.c.b16 %v2225, %v2217
    %v2402 = vpack.c.b16 %v2226, %v2218
    %v2403 = vpack.c.b16 %v2227, %v2219
    %v2404 = vpack.c.b16 %v2228, %v2220
    %v2405 = vpack.c.b16 %v2229, %v2221
    %v2406 = vpack.c.b16 %v2238, %v2230
    %v2407 = vpack.c.b16 %v2239, %v2231
    %v2408 = vpack.c.b16 %v2240, %v2232
    %v2409 = vpack.c.b16 %v2241, %v2233
    %v2410 = vpack.c.b16 %v2242, %v2234
    %v2411 = vpack.c.b16 %v2243, %v2235
    %v2412 = vpack.c.b16 %v2244, %v2236
    %v2413 = vpack.c.b16 %v2245, %v2237
    %v2414 = vpack.c.b16 %v2254, %v2246
    %v2415 = vpack.c.b16 %v2255, %v2247
    %v2416 = vpack.c.b16 %v2256, %v2248
    %v2417 = vpack.c.b16 %v2257, %v2249
    %v2418 = vpack.c.b16 %v2258, %v2250
    %v2419 = vpack.c.b16 %v2259, %v2251
    %v2420 = vpack.c.b16 %v2260, %v2252
    %v2421 = vpack.c.b16 %v2261, %v2253
    %v2422 = vpack.c.b16 %v2270, %v2262
    %v2423 = vpack.c.b16 %v2271, %v2263
    %v2424 = vpack.c.b16 %v2272, %v2264
    %v2425 = vpack.c.b16 %v2273, %v2265
    %v2426 = vpack.c.b16 %v2274, %v2266
    %v2427 = vpack.c.b16 %v2275, %v2267
    %v2428 = vpack.c.b16 %v2276, %v2268
    %v2429 = vpack.c.b16 %v2277, %v2269
    %v2430 = vpack.c.b16 %v2286, %v2278
    %v2431 = vpack.c.b16 %v2287, %v2279
    %v2432 = vpack.c.b16 %v2288, %v2280
    %v2433 = vpack.c.b16 %v2289, %v2281
    %v2434 = vpack.c.b16 %v2290, %v2282
    %v2435 = vpack.c.b16 %v2291, %v2283
    %v2436 = vpack.c.b16 %v2292, %v2284
    %v2437 = vpack.c.b16 %v2293, %v2285
    %v2438 = vpack.c.b16 %v2302, %v2294
    %v2439 = vpack.c.b16 %v2303, %v2295
    %v2440 = vpack.c.b16 %v2304, %v2296
    %v2441 = vpack.c.b16 %v2305, %v2297
    %v2442 = vpack.c.b16 %v2306, %v2298
    %v2443 = vpack.c.b16 %v2307, %v2299
    %v2444 = vpack.c.b16 %v2308, %v2300
    %v2445 = vpack.c.b16 %v2309, %v2301
    %v2446 = vpack.c.b16 %v2318, %v2310
    %v2447 = vpack.c.b16 %v2319, %v2311
    %v2448 = vpack.c.b16 %v2320, %v2312
    %v2449 = vpack.c.b16 %v2321, %v2313
    %v2450 = vpack.c.b16 %v2322, %v2314
    %v2451 = vpack.c.b16 %v2323, %v2315
    %v2452 = vpack.c.b16 %v2324, %v2316
    %v2453 = vpack.c.b16 %v2325, %v2317
    %2582 = vmatpush.bf16.msra.mxu0 %v2382
    %2583 = vmatpush.bf16.msra.mxu0 %v2374
    %2584 = vmatpush.bf16.msra.mxu0 %v2366
    %2585 = vmatpush.bf16.msra.mxu0 %v2358
    %2586 = vmatpush.bf16.msra.mxu0 %v2350
    %2587 = vmatpush.bf16.msra.mxu0 %v2342
    %2588 = vmatpush.bf16.msra.mxu0 %v2334
    %2589 = vmatpush.bf16.msra.mxu0 %v2326
    %2590 = vmatmul.bf16.gmra.mxu0 %v1794
    %v2591 = vpop.f32.mrf.mxu0
    %v2592 = vadd.f32 %v1926, %v2591
    %v2593 = vpop.f32.mrf.mxu0
    %v2594 = vadd.f32 %v1926, %v2593
    %2595 = vdwg.mxu0
    %2596 = vmatpush.bf16.msra.mxu0 %v2446
    %2597 = vmatpush.bf16.msra.mxu0 %v2438
    %2598 = vmatpush.bf16.msra.mxu0 %v2430
    %2599 = vmatpush.bf16.msra.mxu0 %v2422
    %2600 = vmatpush.bf16.msra.mxu0 %v2414
    %2601 = vmatpush.bf16.msra.mxu0 %v2406
    %2602 = vmatpush.bf16.msra.mxu0 %v2398
    %2603 = vmatpush.bf16.msra.mxu0 %v2390
    %2604 = vmatmul.bf16.gmra.mxu0 %v1795
    %v2605 = vpop.f32.mrf.mxu0
    %v2606 = vadd.f32 %v2592, %v2605
    %v2607 = vpop.f32.mrf.mxu0
    %v2608 = vadd.f32 %v2594, %v2607
    %2609 = vdwg.mxu0
    %2610 = vmatpush.bf16.msra.mxu0 %v2383
    %2611 = vmatpush.bf16.msra.mxu0 %v2375
    %2612 = vmatpush.bf16.msra.mxu0 %v2367
    %2613 = vmatpush.bf16.msra.mxu0 %v2359
    %2614 = vmatpush.bf16.msra.mxu0 %v2351
    %2615 = vmatpush.bf16.msra.mxu0 %v2343
    %2616 = vmatpush.bf16.msra.mxu0 %v2335
    %2617 = vmatpush.bf16.msra.mxu0 %v2327
    %2618 = vmatmul.bf16.gmra.mxu0 %v1794
    %v2619 = vpop.f32.mrf.mxu0
    %v2620 = vadd.f32 %v1927, %v2619
    %v2621 = vpop.f32.mrf.mxu0
    %v2622 = vadd.f32 %v1927, %v2621
    %2623 = vdwg.mxu0
    %2624 = vmatpush.bf16.msra.mxu0 %v2447
    %2625 = vmatpush.bf16.msra.mxu0 %v2439
    %2626 = vmatpush.bf16.msra.mxu0 %v2431
    %2627 = vmatpush.bf16.msra.mxu0 %v2423
    %2628 = vmatpush.bf16.msra.mxu0 %v2415
    %2629 = vmatpush.bf16.msra.mxu0 %v2407
    %2630 = vmatpush.bf16.msra.mxu0 %v2399
    %2631 = vmatpush.bf16.msra.mxu0 %v2391
    %2632 = vmatmul.bf16.gmra.mxu0 %v1795
    %v2633 = vpop.f32.mrf.mxu0
    %v2634 = vadd.f32 %v2620, %v2633
    %v2635 = vpop.f32.mrf.mxu0
    %v2636 = vadd.f32 %v2622, %v2635
    %2637 = vdwg.mxu0
    %2638 = vmatpush.bf16.msra.mxu0 %v2384
    %2639 = vmatpush.bf16.msra.mxu0 %v2376
    %2640 = vmatpush.bf16.msra.mxu0 %v2368
    %2641 = vmatpush.bf16.msra.mxu0 %v2360
    %2642 = vmatpush.bf16.msra.mxu0 %v2352
    %2643 = vmatpush.bf16.msra.mxu0 %v2344
    %2644 = vmatpush.bf16.msra.mxu0 %v2336
    %2645 = vmatpush.bf16.msra.mxu0 %v2328
    %2646 = vmatmul.bf16.gmra.mxu0 %v1794
    %v2647 = vpop.f32.mrf.mxu0
    %v2648 = vadd.f32 %v1928, %v2647
    %v2649 = vpop.f32.mrf.mxu0
    %v2650 = vadd.f32 %v1928, %v2649
    %2651 = vdwg.mxu0
    %2652 = vmatpush.bf16.msra.mxu0 %v2448
    %2653 = vmatpush.bf16.msra.mxu0 %v2440
    %2654 = vmatpush.bf16.msra.mxu0 %v2432
    %2655 = vmatpush.bf16.msra.mxu0 %v2424
    %2656 = vmatpush.bf16.msra.mxu0 %v2416
    %2657 = vmatpush.bf16.msra.mxu0 %v2408
    %2658 = vmatpush.bf16.msra.mxu0 %v2400
    %2659 = vmatpush.bf16.msra.mxu0 %v2392
    %2660 = vmatmul.bf16.gmra.mxu0 %v1795
    %v2661 = vpop.f32.mrf.mxu0
    %v2662 = vadd.f32 %v2648, %v2661
    %v2663 = vpop.f32.mrf.mxu0
    %v2664 = vadd.f32 %v2650, %v2663
    %2665 = vdwg.mxu0
    %2666 = vmatpush.bf16.msra.mxu0 %v2385
    %2667 = vmatpush.bf16.msra.mxu0 %v2377
    %2668 = vmatpush.bf16.msra.mxu0 %v2369
    %2669 = vmatpush.bf16.msra.mxu0 %v2361
    %2670 = vmatpush.bf16.msra.mxu0 %v2353
    %2671 = vmatpush.bf16.msra.mxu0 %v2345
    %2672 = vmatpush.bf16.msra.mxu0 %v2337
    %2673 = vmatpush.bf16.msra.mxu0 %v2329
    %2674 = vmatmul.bf16.gmra.mxu0 %v1794
    %v2675 = vpop.f32.mrf.mxu0
    %v2676 = vadd.f32 %v1929, %v2675
    %v2677 = vpop.f32.mrf.mxu0
    %v2678 = vadd.f32 %v1929, %v2677
    %2679 = vdwg.mxu0
    %2680 = vmatpush.bf16.msra.mxu0 %v2449
    %2681 = vmatpush.bf16.msra.mxu0 %v2441
    %2682 = vmatpush.bf16.msra.mxu0 %v2433
    %2683 = vmatpush.bf16.msra.mxu0 %v2425
    %2684 = vmatpush.bf16.msra.mxu0 %v2417
    %2685 = vmatpush.bf16.msra.mxu0 %v2409
    %2686 = vmatpush.bf16.msra.mxu0 %v2401
    %2687 = vmatpush.bf16.msra.mxu0 %v2393
    %2688 = vmatmul.bf16.gmra.mxu0 %v1795
    %v2689 = vpop.f32.mrf.mxu0
    %v2690 = vadd.f32 %v2676, %v2689
    %v2691 = vpop.f32.mrf.mxu0
    %v2692 = vadd.f32 %v2678, %v2691
    %2693 = vdwg.mxu0
    %2694 = vmatpush.bf16.msra.mxu0 %v2386
    %2695 = vmatpush.bf16.msra.mxu0 %v2378
    %2696 = vmatpush.bf16.msra.mxu0 %v2370
    %2697 = vmatpush.bf16.msra.mxu0 %v2362
    %2698 = vmatpush.bf16.msra.mxu0 %v2354
    %2699 = vmatpush.bf16.msra.mxu0 %v2346
    %2700 = vmatpush.bf16.msra.mxu0 %v2338
    %2701 = vmatpush.bf16.msra.mxu0 %v2330
    %2702 = vmatmul.bf16.gmra.mxu0 %v1794
    %v2703 = vpop.f32.mrf.mxu0
    %v2704 = vadd.f32 %v1930, %v2703
    %v2705 = vpop.f32.mrf.mxu0
    %v2706 = vadd.f32 %v1930, %v2705
    %2707 = vdwg.mxu0
    %2708 = vmatpush.bf16.msra.mxu0 %v2450
    %2709 = vmatpush.bf16.msra.mxu0 %v2442
    %2710 = vmatpush.bf16.msra.mxu0 %v2434
    %2711 = vmatpush.bf16.msra.mxu0 %v2426
    %2712 = vmatpush.bf16.msra.mxu0 %v2418
    %2713 = vmatpush.bf16.msra.mxu0 %v2410
    %2714 = vmatpush.bf16.msra.mxu0 %v2402
    %2715 = vmatpush.bf16.msra.mxu0 %v2394
    %2716 = vmatmul.bf16.gmra.mxu0 %v1795
    %v2717 = vpop.f32.mrf.mxu0
    %v2718 = vadd.f32 %v2704, %v2717
    %v2719 = vpop.f32.mrf.mxu0
    %v2720 = vadd.f32 %v2706, %v2719
    %2721 = vdwg.mxu0
    %2722 = vmatpush.bf16.msra.mxu0 %v2387
    %2723 = vmatpush.bf16.msra.mxu0 %v2379
    %2724 = vmatpush.bf16.msra.mxu0 %v2371
    %2725 = vmatpush.bf16.msra.mxu0 %v2363
    %2726 = vmatpush.bf16.msra.mxu0 %v2355
    %2727 = vmatpush.bf16.msra.mxu0 %v2347
    %2728 = vmatpush.bf16.msra.mxu0 %v2339
    %2729 = vmatpush.bf16.msra.mxu0 %v2331
    %2730 = vmatmul.bf16.gmra.mxu0 %v1794
    %v2731 = vpop.f32.mrf.mxu0
    %v2732 = vadd.f32 %v1931, %v2731
    %v2733 = vpop.f32.mrf.mxu0
    %v2734 = vadd.f32 %v1931, %v2733
    %2735 = vdwg.mxu0
    %2736 = vmatpush.bf16.msra.mxu0 %v2451
    %2737 = vmatpush.bf16.msra.mxu0 %v2443
    %2738 = vmatpush.bf16.msra.mxu0 %v2435
    %2739 = vmatpush.bf16.msra.mxu0 %v2427
    %2740 = vmatpush.bf16.msra.mxu0 %v2419
    %2741 = vmatpush.bf16.msra.mxu0 %v2411
    %2742 = vmatpush.bf16.msra.mxu0 %v2403
    %2743 = vmatpush.bf16.msra.mxu0 %v2395
    %2744 = vmatmul.bf16.gmra.mxu0 %v1795
    %v2745 = vpop.f32.mrf.mxu0
    %v2746 = vadd.f32 %v2732, %v2745
    %v2747 = vpop.f32.mrf.mxu0
    %v2748 = vadd.f32 %v2734, %v2747
    %2749 = vdwg.mxu0
    %2750 = vmatpush.bf16.msra.mxu0 %v2388
    %2751 = vmatpush.bf16.msra.mxu0 %v2380
    %2752 = vmatpush.bf16.msra.mxu0 %v2372
    %2753 = vmatpush.bf16.msra.mxu0 %v2364
    %2754 = vmatpush.bf16.msra.mxu0 %v2356
    %2755 = vmatpush.bf16.msra.mxu0 %v2348
    %2756 = vmatpush.bf16.msra.mxu0 %v2340
    %2757 = vmatpush.bf16.msra.mxu0 %v2332
    %2758 = vmatmul.bf16.gmra.mxu0 %v1794
    %v2759 = vpop.f32.mrf.mxu0
    %v2760 = vadd.f32 %v1932, %v2759
    %v2761 = vpop.f32.mrf.mxu0
    %v2762 = vadd.f32 %v1932, %v2761
    %2763 = vdwg.mxu0
    %2764 = vmatpush.bf16.msra.mxu0 %v2452
    %2765 = vmatpush.bf16.msra.mxu0 %v2444
    %2766 = vmatpush.bf16.msra.mxu0 %v2436
    %2767 = vmatpush.bf16.msra.mxu0 %v2428
    %2768 = vmatpush.bf16.msra.mxu0 %v2420
    %2769 = vmatpush.bf16.msra.mxu0 %v2412
    %2770 = vmatpush.bf16.msra.mxu0 %v2404
    %2771 = vmatpush.bf16.msra.mxu0 %v2396
    %2772 = vmatmul.bf16.gmra.mxu0 %v1795
    %v2773 = vpop.f32.mrf.mxu0
    %v2774 = vadd.f32 %v2760, %v2773
    %v2775 = vpop.f32.mrf.mxu0
    %v2776 = vadd.f32 %v2762, %v2775
    %2777 = vdwg.mxu0
    %2778 = vmatpush.bf16.msra.mxu0 %v2389
    %2779 = vmatpush.bf16.msra.mxu0 %v2381
    %2780 = vmatpush.bf16.msra.mxu0 %v2373
    %2781 = vmatpush.bf16.msra.mxu0 %v2365
    %2782 = vmatpush.bf16.msra.mxu0 %v2357
    %2783 = vmatpush.bf16.msra.mxu0 %v2349
    %2784 = vmatpush.bf16.msra.mxu0 %v2341
    %2785 = vmatpush.bf16.msra.mxu0 %v2333
    %2786 = vmatmul.bf16.gmra.mxu0 %v1794
    %v2787 = vpop.f32.mrf.mxu0
    %v2788 = vadd.f32 %v1933, %v2787
    %v2789 = vpop.f32.mrf.mxu0
    %v2790 = vadd.f32 %v1933, %v2789
    %2791 = vdwg.mxu0
    %2792 = vmatpush.bf16.msra.mxu0 %v2453
    %2793 = vmatpush.bf16.msra.mxu0 %v2445
    %2794 = vmatpush.bf16.msra.mxu0 %v2437
    %2795 = vmatpush.bf16.msra.mxu0 %v2429
    %2796 = vmatpush.bf16.msra.mxu0 %v2421
    %2797 = vmatpush.bf16.msra.mxu0 %v2413
    %2798 = vmatpush.bf16.msra.mxu0 %v2405
    %2799 = vmatpush.bf16.msra.mxu0 %v2397
    %2800 = vmatmul.bf16.gmra.mxu0 %v1795
    %v2801 = vpop.f32.mrf.mxu0
    %v2802 = vadd.f32 %v2788, %v2801
    %v2803 = vpop.f32.mrf.mxu0
    %v2804 = vadd.f32 %v2790, %v2803
    %2805 = vdwg.mxu0
    %v2806 = vmax.f32 %v2606, 0.0
    %v2807 = vmax.f32 %v2634, 0.0
    %v2808 = vmax.f32 %v2662, 0.0
    %v2809 = vmax.f32 %v2690, 0.0
    %v2810 = vmax.f32 %v2718, 0.0
    %v2811 = vmax.f32 %v2746, 0.0
    %v2812 = vmax.f32 %v2774, 0.0
    %v2813 = vmax.f32 %v2802, 0.0
    %v2814 = vmax.f32 %v2608, 0.0
    %v2815 = vmax.f32 %v2636, 0.0
    %v2816 = vmax.f32 %v2664, 0.0
    %v2817 = vmax.f32 %v2692, 0.0
    %v2818 = vmax.f32 %v2720, 0.0
    %v2819 = vmax.f32 %v2748, 0.0
    %v2820 = vmax.f32 %v2776, 0.0
    %v2821 = vmax.f32 %v2804, 0.0
    %v2822 = vpack.c.bf16 %v2814, %v2806
    %v2823 = vpack.c.bf16 %v2815, %v2807
    %v2824 = vpack.c.bf16 %v2816, %v2808
    %v2825 = vpack.c.bf16 %v2817, %v2809
    %v2826 = vpack.c.bf16 %v2818, %v2810
    %v2827 = vpack.c.bf16 %v2819, %v2811
    %v2828 = vpack.c.bf16 %v2820, %v2812
    %v2829 = vpack.c.bf16 %v2821, %v2813
    %v2830 = vld [vmem:[#allocation13] sm:$0xff]
    %v2831 = vld [vmem:[#allocation13 + $0x8] sm:$0xff]
    %v2832 = vld [vmem:[#allocation13 + $0x10] sm:$0xff]
    %v2833 = vld [vmem:[#allocation13 + $0x18] sm:$0xff]
    %v2834 = vld [vmem:[#allocation13 + $0x20] sm:$0xff]
    %v2835 = vld [vmem:[#allocation13 + $0x28] sm:$0xff]
    %v2836 = vld [vmem:[#allocation13 + $0x30] sm:$0xff]
    %v2837 = vld [vmem:[#allocation13 + $0x38] sm:$0xff]
    %v2838 = vld [vmem:[#allocation13 + $0x40] sm:$0xff]
    %v2839 = vld [vmem:[#allocation13 + $0x48] sm:$0xff]
    %v2840 = vld [vmem:[#allocation13 + $0x50] sm:$0xff]
    %v2841 = vld [vmem:[#allocation13 + $0x58] sm:$0xff]
    %v2842 = vld [vmem:[#allocation13 + $0x60] sm:$0xff]
    %v2843 = vld [vmem:[#allocation13 + $0x68] sm:$0xff]
    %v2844 = vld [vmem:[#allocation13 + $0x70] sm:$0xff]
    %v2845 = vld [vmem:[#allocation13 + $0x78] sm:$0xff]
    %v2846 = vld [vmem:[#allocation13 + $0x80] sm:$0xff]
    %v2847 = vld [vmem:[#allocation13 + $0x88] sm:$0xff]
    %v2848 = vld [vmem:[#allocation13 + $0x90] sm:$0xff]
    %v2849 = vld [vmem:[#allocation13 + $0x98] sm:$0xff]
    %v2850 = vld [vmem:[#allocation13 + $0xa0] sm:$0xff]
    %v2851 = vld [vmem:[#allocation13 + $0xa8] sm:$0xff]
    %v2852 = vld [vmem:[#allocation13 + $0xb0] sm:$0xff]
    %v2853 = vld [vmem:[#allocation13 + $0xb8] sm:$0xff]
    %v2854 = vld [vmem:[#allocation13 + $0xc0] sm:$0xff]
    %v2855 = vld [vmem:[#allocation13 + $0xc8] sm:$0xff]
    %v2856 = vld [vmem:[#allocation13 + $0xd0] sm:$0xff]
    %v2857 = vld [vmem:[#allocation13 + $0xd8] sm:$0xff]
    %v2858 = vld [vmem:[#allocation13 + $0xe0] sm:$0xff]
    %v2859 = vld [vmem:[#allocation13 + $0xe8] sm:$0xff]
    %v2860 = vld [vmem:[#allocation13 + $0xf0] sm:$0xff]
    %v2861 = vld [vmem:[#allocation13 + $0xf8] sm:$0xff]
    %v2862 = vld [vmem:[#allocation13 + $0x100] sm:$0xff]
    %v2863 = vld [vmem:[#allocation13 + $0x108] sm:$0xff]
    %v2864 = vld [vmem:[#allocation13 + $0x110] sm:$0xff]
    %v2865 = vld [vmem:[#allocation13 + $0x118] sm:$0xff]
    %v2866 = vld [vmem:[#allocation13 + $0x120] sm:$0xff]
    %v2867 = vld [vmem:[#allocation13 + $0x128] sm:$0xff]
    %v2868 = vld [vmem:[#allocation13 + $0x130] sm:$0xff]
    %v2869 = vld [vmem:[#allocation13 + $0x138] sm:$0xff]
    %v2870 = vld [vmem:[#allocation13 + $0x140] sm:$0xff]
    %v2871 = vld [vmem:[#allocation13 + $0x148] sm:$0xff]
    %v2872 = vld [vmem:[#allocation13 + $0x150] sm:$0xff]
    %v2873 = vld [vmem:[#allocation13 + $0x158] sm:$0xff]
    %v2874 = vld [vmem:[#allocation13 + $0x160] sm:$0xff]
    %v2875 = vld [vmem:[#allocation13 + $0x168] sm:$0xff]
    %v2876 = vld [vmem:[#allocation13 + $0x170] sm:$0xff]
    %v2877 = vld [vmem:[#allocation13 + $0x178] sm:$0xff]
    %v2878 = vld [vmem:[#allocation13 + $0x180] sm:$0xff]
    %v2879 = vld [vmem:[#allocation13 + $0x188] sm:$0xff]
    %v2880 = vld [vmem:[#allocation13 + $0x190] sm:$0xff]
    %v2881 = vld [vmem:[#allocation13 + $0x198] sm:$0xff]
    %v2882 = vld [vmem:[#allocation13 + $0x1a0] sm:$0xff]
    %v2883 = vld [vmem:[#allocation13 + $0x1a8] sm:$0xff]
    %v2884 = vld [vmem:[#allocation13 + $0x1b0] sm:$0xff]
    %v2885 = vld [vmem:[#allocation13 + $0x1b8] sm:$0xff]
    %v2886 = vld [vmem:[#allocation13 + $0x1c0] sm:$0xff]
    %v2887 = vld [vmem:[#allocation13 + $0x1c8] sm:$0xff]
    %v2888 = vld [vmem:[#allocation13 + $0x1d0] sm:$0xff]
    %v2889 = vld [vmem:[#allocation13 + $0x1d8] sm:$0xff]
    %v2890 = vld [vmem:[#allocation13 + $0x1e0] sm:$0xff]
    %v2891 = vld [vmem:[#allocation13 + $0x1e8] sm:$0xff]
    %v2892 = vld [vmem:[#allocation13 + $0x1f0] sm:$0xff]
    %v2893 = vld [vmem:[#allocation13 + $0x1f8] sm:$0xff]
    %v2894 = vld [vmem:[#allocation13 + $0x200] sm:$0xff]
    %v2895 = vld [vmem:[#allocation13 + $0x208] sm:$0xff]
    %v2896 = vld [vmem:[#allocation13 + $0x210] sm:$0xff]
    %v2897 = vld [vmem:[#allocation13 + $0x218] sm:$0xff]
    %v2898 = vld [vmem:[#allocation13 + $0x220] sm:$0xff]
    %v2899 = vld [vmem:[#allocation13 + $0x228] sm:$0xff]
    %v2900 = vld [vmem:[#allocation13 + $0x230] sm:$0xff]
    %v2901 = vld [vmem:[#allocation13 + $0x238] sm:$0xff]
    %v2902 = vld [vmem:[#allocation13 + $0x240] sm:$0xff]
    %v2903 = vld [vmem:[#allocation13 + $0x248] sm:$0xff]
    %v2904 = vld [vmem:[#allocation13 + $0x250] sm:$0xff]
    %v2905 = vld [vmem:[#allocation13 + $0x258] sm:$0xff]
    %v2906 = vld [vmem:[#allocation13 + $0x260] sm:$0xff]
    %v2907 = vld [vmem:[#allocation13 + $0x268] sm:$0xff]
    %v2908 = vld [vmem:[#allocation13 + $0x270] sm:$0xff]
    %v2909 = vld [vmem:[#allocation13 + $0x278] sm:$0xff]
    %v2910 = vld [vmem:[#allocation13 + $0x280] sm:$0xff]
    %v2911 = vld [vmem:[#allocation13 + $0x288] sm:$0xff]
    %v2912 = vld [vmem:[#allocation13 + $0x290] sm:$0xff]
    %v2913 = vld [vmem:[#allocation13 + $0x298] sm:$0xff]
    %v2914 = vld [vmem:[#allocation13 + $0x2a0] sm:$0xff]
    %v2915 = vld [vmem:[#allocation13 + $0x2a8] sm:$0xff]
    %v2916 = vld [vmem:[#allocation13 + $0x2b0] sm:$0xff]
    %v2917 = vld [vmem:[#allocation13 + $0x2b8] sm:$0xff]
    %v2918 = vld [vmem:[#allocation13 + $0x2c0] sm:$0xff]
    %v2919 = vld [vmem:[#allocation13 + $0x2c8] sm:$0xff]
    %v2920 = vld [vmem:[#allocation13 + $0x2d0] sm:$0xff]
    %v2921 = vld [vmem:[#allocation13 + $0x2d8] sm:$0xff]
    %v2922 = vld [vmem:[#allocation13 + $0x2e0] sm:$0xff]
    %v2923 = vld [vmem:[#allocation13 + $0x2e8] sm:$0xff]
    %v2924 = vld [vmem:[#allocation13 + $0x2f0] sm:$0xff]
    %v2925 = vld [vmem:[#allocation13 + $0x2f8] sm:$0xff]
    %v2926 = vld [vmem:[#allocation13 + $0x300] sm:$0xff]
    %v2927 = vld [vmem:[#allocation13 + $0x308] sm:$0xff]
    %v2928 = vld [vmem:[#allocation13 + $0x310] sm:$0xff]
    %v2929 = vld [vmem:[#allocation13 + $0x318] sm:$0xff]
    %v2930 = vld [vmem:[#allocation13 + $0x320] sm:$0xff]
    %v2931 = vld [vmem:[#allocation13 + $0x328] sm:$0xff]
    %v2932 = vld [vmem:[#allocation13 + $0x330] sm:$0xff]
    %v2933 = vld [vmem:[#allocation13 + $0x338] sm:$0xff]
    %v2934 = vld [vmem:[#allocation13 + $0x340] sm:$0xff]
    %v2935 = vld [vmem:[#allocation13 + $0x348] sm:$0xff]
    %v2936 = vld [vmem:[#allocation13 + $0x350] sm:$0xff]
    %v2937 = vld [vmem:[#allocation13 + $0x358] sm:$0xff]
    %v2938 = vld [vmem:[#allocation13 + $0x360] sm:$0xff]
    %v2939 = vld [vmem:[#allocation13 + $0x368] sm:$0xff]
    %v2940 = vld [vmem:[#allocation13 + $0x370] sm:$0xff]
    %v2941 = vld [vmem:[#allocation13 + $0x378] sm:$0xff]
    %v2942 = vld [vmem:[#allocation13 + $0x380] sm:$0xff]
    %v2943 = vld [vmem:[#allocation13 + $0x388] sm:$0xff]
    %v2944 = vld [vmem:[#allocation13 + $0x390] sm:$0xff]
    %v2945 = vld [vmem:[#allocation13 + $0x398] sm:$0xff]
    %v2946 = vld [vmem:[#allocation13 + $0x3a0] sm:$0xff]
    %v2947 = vld [vmem:[#allocation13 + $0x3a8] sm:$0xff]
    %v2948 = vld [vmem:[#allocation13 + $0x3b0] sm:$0xff]
    %v2949 = vld [vmem:[#allocation13 + $0x3b8] sm:$0xff]
    %v2950 = vld [vmem:[#allocation13 + $0x3c0] sm:$0xff]
    %v2951 = vld [vmem:[#allocation13 + $0x3c8] sm:$0xff]
    %v2952 = vld [vmem:[#allocation13 + $0x3d0] sm:$0xff]
    %v2953 = vld [vmem:[#allocation13 + $0x3d8] sm:$0xff]
    %v2954 = vld [vmem:[#allocation13 + $0x3e0] sm:$0xff]
    %v2955 = vld [vmem:[#allocation13 + $0x3e8] sm:$0xff]
    %v2956 = vld [vmem:[#allocation13 + $0x3f0] sm:$0xff]
    %v2957 = vld [vmem:[#allocation13 + $0x3f8] sm:$0xff]
    %v2958 = vld [vmem:[%s9] sm:$0x3]
    %v2960 = vperm.slane %v2958, 0
    %v2961 = vperm.slane %v2958, 1
    %v3092 = vunpack.c.l.b16 %v2830
    %v3093 = vunpack.c.h.b16 %v2830
    %v3094 = vunpack.c.l.b16 %v2831
    %v3095 = vunpack.c.h.b16 %v2831
    %v3096 = vunpack.c.l.b16 %v2832
    %v3097 = vunpack.c.h.b16 %v2832
    %v3098 = vunpack.c.l.b16 %v2833
    %v3099 = vunpack.c.h.b16 %v2833
    %v3100 = vunpack.c.l.b16 %v2834
    %v3101 = vunpack.c.h.b16 %v2834
    %v3102 = vunpack.c.l.b16 %v2835
    %v3103 = vunpack.c.h.b16 %v2835
    %v3104 = vunpack.c.l.b16 %v2836
    %v3105 = vunpack.c.h.b16 %v2836
    %v3106 = vunpack.c.l.b16 %v2837
    %v3107 = vunpack.c.h.b16 %v2837
    %v3108 = vunpack.c.l.b16 %v2838
    %v3109 = vunpack.c.h.b16 %v2838
    %v3110 = vunpack.c.l.b16 %v2839
    %v3111 = vunpack.c.h.b16 %v2839
    %v3112 = vunpack.c.l.b16 %v2840
    %v3113 = vunpack.c.h.b16 %v2840
    %v3114 = vunpack.c.l.b16 %v2841
    %v3115 = vunpack.c.h.b16 %v2841
    %v3116 = vunpack.c.l.b16 %v2842
    %v3117 = vunpack.c.h.b16 %v2842
    %v3118 = vunpack.c.l.b16 %v2843
    %v3119 = vunpack.c.h.b16 %v2843
    %v3120 = vunpack.c.l.b16 %v2844
    %v3121 = vunpack.c.h.b16 %v2844
    %v3122 = vunpack.c.l.b16 %v2845
    %v3123 = vunpack.c.h.b16 %v2845
    %v3124 = vunpack.c.l.b16 %v2846
    %v3125 = vunpack.c.h.b16 %v2846
    %v3126 = vunpack.c.l.b16 %v2847
    %v3127 = vunpack.c.h.b16 %v2847
    %v3128 = vunpack.c.l.b16 %v2848
    %v3129 = vunpack.c.h.b16 %v2848
    %v3130 = vunpack.c.l.b16 %v2849
    %v3131 = vunpack.c.h.b16 %v2849
    %v3132 = vunpack.c.l.b16 %v2850
    %v3133 = vunpack.c.h.b16 %v2850
    %v3134 = vunpack.c.l.b16 %v2851
    %v3135 = vunpack.c.h.b16 %v2851
    %v3136 = vunpack.c.l.b16 %v2852
    %v3137 = vunpack.c.h.b16 %v2852
    %v3138 = vunpack.c.l.b16 %v2853
    %v3139 = vunpack.c.h.b16 %v2853
    %v3140 = vunpack.c.l.b16 %v2854
    %v3141 = vunpack.c.h.b16 %v2854
    %v3142 = vunpack.c.l.b16 %v2855
    %v3143 = vunpack.c.h.b16 %v2855
    %v3144 = vunpack.c.l.b16 %v2856
    %v3145 = vunpack.c.h.b16 %v2856
    %v3146 = vunpack.c.l.b16 %v2857
    %v3147 = vunpack.c.h.b16 %v2857
    %v3148 = vunpack.c.l.b16 %v2858
    %v3149 = vunpack.c.h.b16 %v2858
    %v3150 = vunpack.c.l.b16 %v2859
    %v3151 = vunpack.c.h.b16 %v2859
    %v3152 = vunpack.c.l.b16 %v2860
    %v3153 = vunpack.c.h.b16 %v2860
    %v3154 = vunpack.c.l.b16 %v2861
    %v3155 = vunpack.c.h.b16 %v2861
    %v3156 = vunpack.c.l.b16 %v2862
    %v3157 = vunpack.c.h.b16 %v2862
    %v3158 = vunpack.c.l.b16 %v2863
    %v3159 = vunpack.c.h.b16 %v2863
    %v3160 = vunpack.c.l.b16 %v2864
    %v3161 = vunpack.c.h.b16 %v2864
    %v3162 = vunpack.c.l.b16 %v2865
    %v3163 = vunpack.c.h.b16 %v2865
    %v3164 = vunpack.c.l.b16 %v2866
    %v3165 = vunpack.c.h.b16 %v2866
    %v3166 = vunpack.c.l.b16 %v2867
    %v3167 = vunpack.c.h.b16 %v2867
    %v3168 = vunpack.c.l.b16 %v2868
    %v3169 = vunpack.c.h.b16 %v2868
    %v3170 = vunpack.c.l.b16 %v2869
    %v3171 = vunpack.c.h.b16 %v2869
    %v3172 = vunpack.c.l.b16 %v2870
    %v3173 = vunpack.c.h.b16 %v2870
    %v3174 = vunpack.c.l.b16 %v2871
    %v3175 = vunpack.c.h.b16 %v2871
    %v3176 = vunpack.c.l.b16 %v2872
    %v3177 = vunpack.c.h.b16 %v2872
    %v3178 = vunpack.c.l.b16 %v2873
    %v3179 = vunpack.c.h.b16 %v2873
    %v3180 = vunpack.c.l.b16 %v2874
    %v3181 = vunpack.c.h.b16 %v2874
    %v3182 = vunpack.c.l.b16 %v2875
    %v3183 = vunpack.c.h.b16 %v2875
    %v3184 = vunpack.c.l.b16 %v2876
    %v3185 = vunpack.c.h.b16 %v2876
    %v3186 = vunpack.c.l.b16 %v2877
    %v3187 = vunpack.c.h.b16 %v2877
    %v3188 = vunpack.c.l.b16 %v2878
    %v3189 = vunpack.c.h.b16 %v2878
    %v3190 = vunpack.c.l.b16 %v2879
    %v3191 = vunpack.c.h.b16 %v2879
    %v3192 = vunpack.c.l.b16 %v2880
    %v3193 = vunpack.c.h.b16 %v2880
    %v3194 = vunpack.c.l.b16 %v2881
    %v3195 = vunpack.c.h.b16 %v2881
    %v3196 = vunpack.c.l.b16 %v2882
    %v3197 = vunpack.c.h.b16 %v2882
    %v3198 = vunpack.c.l.b16 %v2883
    %v3199 = vunpack.c.h.b16 %v2883
    %v3200 = vunpack.c.l.b16 %v2884
    %v3201 = vunpack.c.h.b16 %v2884
    %v3202 = vunpack.c.l.b16 %v2885
    %v3203 = vunpack.c.h.b16 %v2885
    %v3204 = vunpack.c.l.b16 %v2886
    %v3205 = vunpack.c.h.b16 %v2886
    %v3206 = vunpack.c.l.b16 %v2887
    %v3207 = vunpack.c.h.b16 %v2887
    %v3208 = vunpack.c.l.b16 %v2888
    %v3209 = vunpack.c.h.b16 %v2888
    %v3210 = vunpack.c.l.b16 %v2889
    %v3211 = vunpack.c.h.b16 %v2889
    %v3212 = vunpack.c.l.b16 %v2890
    %v3213 = vunpack.c.h.b16 %v2890
    %v3214 = vunpack.c.l.b16 %v2891
    %v3215 = vunpack.c.h.b16 %v2891
    %v3216 = vunpack.c.l.b16 %v2892
    %v3217 = vunpack.c.h.b16 %v2892
    %v3218 = vunpack.c.l.b16 %v2893
    %v3219 = vunpack.c.h.b16 %v2893
    %v3220 = vunpack.c.l.b16 %v2894
    %v3221 = vunpack.c.h.b16 %v2894
    %v3222 = vunpack.c.l.b16 %v2895
    %v3223 = vunpack.c.h.b16 %v2895
    %v3224 = vunpack.c.l.b16 %v2896
    %v3225 = vunpack.c.h.b16 %v2896
    %v3226 = vunpack.c.l.b16 %v2897
    %v3227 = vunpack.c.h.b16 %v2897
    %v3228 = vunpack.c.l.b16 %v2898
    %v3229 = vunpack.c.h.b16 %v2898
    %v3230 = vunpack.c.l.b16 %v2899
    %v3231 = vunpack.c.h.b16 %v2899
    %v3232 = vunpack.c.l.b16 %v2900
    %v3233 = vunpack.c.h.b16 %v2900
    %v3234 = vunpack.c.l.b16 %v2901
    %v3235 = vunpack.c.h.b16 %v2901
    %v3236 = vunpack.c.l.b16 %v2902
    %v3237 = vunpack.c.h.b16 %v2902
    %v3238 = vunpack.c.l.b16 %v2903
    %v3239 = vunpack.c.h.b16 %v2903
    %v3240 = vunpack.c.l.b16 %v2904
    %v3241 = vunpack.c.h.b16 %v2904
    %v3242 = vunpack.c.l.b16 %v2905
    %v3243 = vunpack.c.h.b16 %v2905
    %v3244 = vunpack.c.l.b16 %v2906
    %v3245 = vunpack.c.h.b16 %v2906
    %v3246 = vunpack.c.l.b16 %v2907
    %v3247 = vunpack.c.h.b16 %v2907
    %v3248 = vunpack.c.l.b16 %v2908
    %v3249 = vunpack.c.h.b16 %v2908
    %v3250 = vunpack.c.l.b16 %v2909
    %v3251 = vunpack.c.h.b16 %v2909
    %v3252 = vunpack.c.l.b16 %v2910
    %v3253 = vunpack.c.h.b16 %v2910
    %v3254 = vunpack.c.l.b16 %v2911
    %v3255 = vunpack.c.h.b16 %v2911
    %v3256 = vunpack.c.l.b16 %v2912
    %v3257 = vunpack.c.h.b16 %v2912
    %v3258 = vunpack.c.l.b16 %v2913
    %v3259 = vunpack.c.h.b16 %v2913
    %v3260 = vunpack.c.l.b16 %v2914
    %v3261 = vunpack.c.h.b16 %v2914
    %v3262 = vunpack.c.l.b16 %v2915
    %v3263 = vunpack.c.h.b16 %v2915
    %v3264 = vunpack.c.l.b16 %v2916
    %v3265 = vunpack.c.h.b16 %v2916
    %v3266 = vunpack.c.l.b16 %v2917
    %v3267 = vunpack.c.h.b16 %v2917
    %v3268 = vunpack.c.l.b16 %v2918
    %v3269 = vunpack.c.h.b16 %v2918
    %v3270 = vunpack.c.l.b16 %v2919
    %v3271 = vunpack.c.h.b16 %v2919
    %v3272 = vunpack.c.l.b16 %v2920
    %v3273 = vunpack.c.h.b16 %v2920
    %v3274 = vunpack.c.l.b16 %v2921
    %v3275 = vunpack.c.h.b16 %v2921
    %v3276 = vunpack.c.l.b16 %v2922
    %v3277 = vunpack.c.h.b16 %v2922
    %v3278 = vunpack.c.l.b16 %v2923
    %v3279 = vunpack.c.h.b16 %v2923
    %v3280 = vunpack.c.l.b16 %v2924
    %v3281 = vunpack.c.h.b16 %v2924
    %v3282 = vunpack.c.l.b16 %v2925
    %v3283 = vunpack.c.h.b16 %v2925
    %v3284 = vunpack.c.l.b16 %v2926
    %v3285 = vunpack.c.h.b16 %v2926
    %v3286 = vunpack.c.l.b16 %v2927
    %v3287 = vunpack.c.h.b16 %v2927
    %v3288 = vunpack.c.l.b16 %v2928
    %v3289 = vunpack.c.h.b16 %v2928
    %v3290 = vunpack.c.l.b16 %v2929
    %v3291 = vunpack.c.h.b16 %v2929
    %v3292 = vunpack.c.l.b16 %v2930
    %v3293 = vunpack.c.h.b16 %v2930
    %v3294 = vunpack.c.l.b16 %v2931
    %v3295 = vunpack.c.h.b16 %v2931
    %v3296 = vunpack.c.l.b16 %v2932
    %v3297 = vunpack.c.h.b16 %v2932
    %v3298 = vunpack.c.l.b16 %v2933
    %v3299 = vunpack.c.h.b16 %v2933
    %v3300 = vunpack.c.l.b16 %v2934
    %v3301 = vunpack.c.h.b16 %v2934
    %v3302 = vunpack.c.l.b16 %v2935
    %v3303 = vunpack.c.h.b16 %v2935
    %v3304 = vunpack.c.l.b16 %v2936
    %v3305 = vunpack.c.h.b16 %v2936
    %v3306 = vunpack.c.l.b16 %v2937
    %v3307 = vunpack.c.h.b16 %v2937
    %v3308 = vunpack.c.l.b16 %v2938
    %v3309 = vunpack.c.h.b16 %v2938
    %v3310 = vunpack.c.l.b16 %v2939
    %v3311 = vunpack.c.h.b16 %v2939
    %v3312 = vunpack.c.l.b16 %v2940
    %v3313 = vunpack.c.h.b16 %v2940
    %v3314 = vunpack.c.l.b16 %v2941
    %v3315 = vunpack.c.h.b16 %v2941
    %v3316 = vunpack.c.l.b16 %v2942
    %v3317 = vunpack.c.h.b16 %v2942
    %v3318 = vunpack.c.l.b16 %v2943
    %v3319 = vunpack.c.h.b16 %v2943
    %v3320 = vunpack.c.l.b16 %v2944
    %v3321 = vunpack.c.h.b16 %v2944
    %v3322 = vunpack.c.l.b16 %v2945
    %v3323 = vunpack.c.h.b16 %v2945
    %v3324 = vunpack.c.l.b16 %v2946
    %v3325 = vunpack.c.h.b16 %v2946
    %v3326 = vunpack.c.l.b16 %v2947
    %v3327 = vunpack.c.h.b16 %v2947
    %v3328 = vunpack.c.l.b16 %v2948
    %v3329 = vunpack.c.h.b16 %v2948
    %v3330 = vunpack.c.l.b16 %v2949
    %v3331 = vunpack.c.h.b16 %v2949
    %v3332 = vunpack.c.l.b16 %v2950
    %v3333 = vunpack.c.h.b16 %v2950
    %v3334 = vunpack.c.l.b16 %v2951
    %v3335 = vunpack.c.h.b16 %v2951
    %v3336 = vunpack.c.l.b16 %v2952
    %v3337 = vunpack.c.h.b16 %v2952
    %v3338 = vunpack.c.l.b16 %v2953
    %v3339 = vunpack.c.h.b16 %v2953
    %v3340 = vunpack.c.l.b16 %v2954
    %v3341 = vunpack.c.h.b16 %v2954
    %v3342 = vunpack.c.l.b16 %v2955
    %v3343 = vunpack.c.h.b16 %v2955
    %v3344 = vunpack.c.l.b16 %v2956
    %v3345 = vunpack.c.h.b16 %v2956
    %v3346 = vunpack.c.l.b16 %v2957
    %v3347 = vunpack.c.h.b16 %v2957
    %v3348 = vpack.c.b16 %v3094, %v3092
    %v3349 = vpack.c.b16 %v3095, %v3093
    %v3350 = vpack.c.b16 %v3098, %v3096
    %v3351 = vpack.c.b16 %v3099, %v3097
    %v3352 = vpack.c.b16 %v3102, %v3100
    %v3353 = vpack.c.b16 %v3103, %v3101
    %v3354 = vpack.c.b16 %v3106, %v3104
    %v3355 = vpack.c.b16 %v3107, %v3105
    %v3356 = vpack.c.b16 %v3110, %v3108
    %v3357 = vpack.c.b16 %v3111, %v3109
    %v3358 = vpack.c.b16 %v3114, %v3112
    %v3359 = vpack.c.b16 %v3115, %v3113
    %v3360 = vpack.c.b16 %v3118, %v3116
    %v3361 = vpack.c.b16 %v3119, %v3117
    %v3362 = vpack.c.b16 %v3122, %v3120
    %v3363 = vpack.c.b16 %v3123, %v3121
    %v3364 = vpack.c.b16 %v3126, %v3124
    %v3365 = vpack.c.b16 %v3127, %v3125
    %v3366 = vpack.c.b16 %v3130, %v3128
    %v3367 = vpack.c.b16 %v3131, %v3129
    %v3368 = vpack.c.b16 %v3134, %v3132
    %v3369 = vpack.c.b16 %v3135, %v3133
    %v3370 = vpack.c.b16 %v3138, %v3136
    %v3371 = vpack.c.b16 %v3139, %v3137
    %v3372 = vpack.c.b16 %v3142, %v3140
    %v3373 = vpack.c.b16 %v3143, %v3141
    %v3374 = vpack.c.b16 %v3146, %v3144
    %v3375 = vpack.c.b16 %v3147, %v3145
    %v3376 = vpack.c.b16 %v3150, %v3148
    %v3377 = vpack.c.b16 %v3151, %v3149
    %v3378 = vpack.c.b16 %v3154, %v3152
    %v3379 = vpack.c.b16 %v3155, %v3153
    %v3380 = vpack.c.b16 %v3158, %v3156
    %v3381 = vpack.c.b16 %v3159, %v3157
    %v3382 = vpack.c.b16 %v3162, %v3160
    %v3383 = vpack.c.b16 %v3163, %v3161
    %v3384 = vpack.c.b16 %v3166, %v3164
    %v3385 = vpack.c.b16 %v3167, %v3165
    %v3386 = vpack.c.b16 %v3170, %v3168
    %v3387 = vpack.c.b16 %v3171, %v3169
    %v3388 = vpack.c.b16 %v3174, %v3172
    %v3389 = vpack.c.b16 %v3175, %v3173
    %v3390 = vpack.c.b16 %v3178, %v3176
    %v3391 = vpack.c.b16 %v3179, %v3177
    %v3392 = vpack.c.b16 %v3182, %v3180
    %v3393 = vpack.c.b16 %v3183, %v3181
    %v3394 = vpack.c.b16 %v3186, %v3184
    %v3395 = vpack.c.b16 %v3187, %v3185
    %v3396 = vpack.c.b16 %v3190, %v3188
    %v3397 = vpack.c.b16 %v3191, %v3189
    %v3398 = vpack.c.b16 %v3194, %v3192
    %v3399 = vpack.c.b16 %v3195, %v3193
    %v3400 = vpack.c.b16 %v3198, %v3196
    %v3401 = vpack.c.b16 %v3199, %v3197
    %v3402 = vpack.c.b16 %v3202, %v3200
    %v3403 = vpack.c.b16 %v3203, %v3201
    %v3404 = vpack.c.b16 %v3206, %v3204
    %v3405 = vpack.c.b16 %v3207, %v3205
    %v3406 = vpack.c.b16 %v3210, %v3208
    %v3407 = vpack.c.b16 %v3211, %v3209
    %v3408 = vpack.c.b16 %v3214, %v3212
    %v3409 = vpack.c.b16 %v3215, %v3213
    %v3410 = vpack.c.b16 %v3218, %v3216
    %v3411 = vpack.c.b16 %v3219, %v3217
    %v3412 = vpack.c.b16 %v3222, %v3220
    %v3413 = vpack.c.b16 %v3223, %v3221
    %v3414 = vpack.c.b16 %v3226, %v3224
    %v3415 = vpack.c.b16 %v3227, %v3225
    %v3416 = vpack.c.b16 %v3230, %v3228
    %v3417 = vpack.c.b16 %v3231, %v3229
    %v3418 = vpack.c.b16 %v3234, %v3232
    %v3419 = vpack.c.b16 %v3235, %v3233
    %v3420 = vpack.c.b16 %v3238, %v3236
    %v3421 = vpack.c.b16 %v3239, %v3237
    %v3422 = vpack.c.b16 %v3242, %v3240
    %v3423 = vpack.c.b16 %v3243, %v3241
    %v3424 = vpack.c.b16 %v3246, %v3244
    %v3425 = vpack.c.b16 %v3247, %v3245
    %v3426 = vpack.c.b16 %v3250, %v3248
    %v3427 = vpack.c.b16 %v3251, %v3249
    %v3428 = vpack.c.b16 %v3254, %v3252
    %v3429 = vpack.c.b16 %v3255, %v3253
    %v3430 = vpack.c.b16 %v3258, %v3256
    %v3431 = vpack.c.b16 %v3259, %v3257
    %v3432 = vpack.c.b16 %v3262, %v3260
    %v3433 = vpack.c.b16 %v3263, %v3261
    %v3434 = vpack.c.b16 %v3266, %v3264
    %v3435 = vpack.c.b16 %v3267, %v3265
    %v3436 = vpack.c.b16 %v3270, %v3268
    %v3437 = vpack.c.b16 %v3271, %v3269
    %v3438 = vpack.c.b16 %v3274, %v3272
    %v3439 = vpack.c.b16 %v3275, %v3273
    %v3440 = vpack.c.b16 %v3278, %v3276
    %v3441 = vpack.c.b16 %v3279, %v3277
    %v3442 = vpack.c.b16 %v3282, %v3280
    %v3443 = vpack.c.b16 %v3283, %v3281
    %v3444 = vpack.c.b16 %v3286, %v3284
    %v3445 = vpack.c.b16 %v3287, %v3285
    %v3446 = vpack.c.b16 %v3290, %v3288
    %v3447 = vpack.c.b16 %v3291, %v3289
    %v3448 = vpack.c.b16 %v3294, %v3292
    %v3449 = vpack.c.b16 %v3295, %v3293
    %v3450 = vpack.c.b16 %v3298, %v3296
    %v3451 = vpack.c.b16 %v3299, %v3297
    %v3452 = vpack.c.b16 %v3302, %v3300
    %v3453 = vpack.c.b16 %v3303, %v3301
    %v3454 = vpack.c.b16 %v3306, %v3304
    %v3455 = vpack.c.b16 %v3307, %v3305
    %v3456 = vpack.c.b16 %v3310, %v3308
    %v3457 = vpack.c.b16 %v3311, %v3309
    %v3458 = vpack.c.b16 %v3314, %v3312
    %v3459 = vpack.c.b16 %v3315, %v3313
    %v3460 = vpack.c.b16 %v3318, %v3316
    %v3461 = vpack.c.b16 %v3319, %v3317
    %v3462 = vpack.c.b16 %v3322, %v3320
    %v3463 = vpack.c.b16 %v3323, %v3321
    %v3464 = vpack.c.b16 %v3326, %v3324
    %v3465 = vpack.c.b16 %v3327, %v3325
    %v3466 = vpack.c.b16 %v3330, %v3328
    %v3467 = vpack.c.b16 %v3331, %v3329
    %v3468 = vpack.c.b16 %v3334, %v3332
    %v3469 = vpack.c.b16 %v3335, %v3333
    %v3470 = vpack.c.b16 %v3338, %v3336
    %v3471 = vpack.c.b16 %v3339, %v3337
    %v3472 = vpack.c.b16 %v3342, %v3340
    %v3473 = vpack.c.b16 %v3343, %v3341
    %v3474 = vpack.c.b16 %v3346, %v3344
    %v3475 = vpack.c.b16 %v3347, %v3345
    %3604 = vmatpush.bf16.msra.mxu0 %v3362
    %3605 = vmatpush.bf16.msra.mxu0 %v3360
    %3606 = vmatpush.bf16.msra.mxu0 %v3358
    %3607 = vmatpush.bf16.msra.mxu0 %v3356
    %3608 = vmatpush.bf16.msra.mxu0 %v3354
    %3609 = vmatpush.bf16.msra.mxu0 %v3352
    %3610 = vmatpush.bf16.msra.mxu0 %v3350
    %3611 = vmatpush.bf16.msra.mxu0 %v3348
    %3612 = vmatmul.bf16.gmra.mxu0 %v2822
    %v3613 = vpop.f32.mrf.mxu0
    %v3614 = vadd.f32 %v2960, %v3613
    %v3615 = vpop.f32.mrf.mxu0
    %v3616 = vadd.f32 %v2960, %v3615
    %3617 = vdwg.mxu0
    %3618 = vmatpush.bf16.msra.mxu0 %v3378
    %3619 = vmatpush.bf16.msra.mxu0 %v3376
    %3620 = vmatpush.bf16.msra.mxu0 %v3374
    %3621 = vmatpush.bf16.msra.mxu0 %v3372
    %3622 = vmatpush.bf16.msra.mxu0 %v3370
    %3623 = vmatpush.bf16.msra.mxu0 %v3368
    %3624 = vmatpush.bf16.msra.mxu0 %v3366
    %3625 = vmatpush.bf16.msra.mxu0 %v3364
    %3626 = vmatmul.bf16.gmra.mxu0 %v2823
    %v3627 = vpop.f32.mrf.mxu0
    %v3628 = vadd.f32 %v3614, %v3627
    %v3629 = vpop.f32.mrf.mxu0
    %v3630 = vadd.f32 %v3616, %v3629
    %3631 = vdwg.mxu0
    %3632 = vmatpush.bf16.msra.mxu0 %v3394
    %3633 = vmatpush.bf16.msra.mxu0 %v3392
    %3634 = vmatpush.bf16.msra.mxu0 %v3390
    %3635 = vmatpush.bf16.msra.mxu0 %v3388
    %3636 = vmatpush.bf16.msra.mxu0 %v3386
    %3637 = vmatpush.bf16.msra.mxu0 %v3384
    %3638 = vmatpush.bf16.msra.mxu0 %v3382
    %3639 = vmatpush.bf16.msra.mxu0 %v3380
    %3640 = vmatmul.bf16.gmra.mxu0 %v2824
    %v3641 = vpop.f32.mrf.mxu0
    %v3642 = vadd.f32 %v3628, %v3641
    %v3643 = vpop.f32.mrf.mxu0
    %v3644 = vadd.f32 %v3630, %v3643
    %3645 = vdwg.mxu0
    %3646 = vmatpush.bf16.msra.mxu0 %v3410
    %3647 = vmatpush.bf16.msra.mxu0 %v3408
    %3648 = vmatpush.bf16.msra.mxu0 %v3406
    %3649 = vmatpush.bf16.msra.mxu0 %v3404
    %3650 = vmatpush.bf16.msra.mxu0 %v3402
    %3651 = vmatpush.bf16.msra.mxu0 %v3400
    %3652 = vmatpush.bf16.msra.mxu0 %v3398
    %3653 = vmatpush.bf16.msra.mxu0 %v3396
    %3654 = vmatmul.bf16.gmra.mxu0 %v2825
    %v3655 = vpop.f32.mrf.mxu0
    %v3656 = vadd.f32 %v3642, %v3655
    %v3657 = vpop.f32.mrf.mxu0
    %v3658 = vadd.f32 %v3644, %v3657
    %3659 = vdwg.mxu0
    %3660 = vmatpush.bf16.msra.mxu0 %v3426
    %3661 = vmatpush.bf16.msra.mxu0 %v3424
    %3662 = vmatpush.bf16.msra.mxu0 %v3422
    %3663 = vmatpush.bf16.msra.mxu0 %v3420
    %3664 = vmatpush.bf16.msra.mxu0 %v3418
    %3665 = vmatpush.bf16.msra.mxu0 %v3416
    %3666 = vmatpush.bf16.msra.mxu0 %v3414
    %3667 = vmatpush.bf16.msra.mxu0 %v3412
    %3668 = vmatmul.bf16.gmra.mxu0 %v2826
    %v3669 = vpop.f32.mrf.mxu0
    %v3670 = vadd.f32 %v3656, %v3669
    %v3671 = vpop.f32.mrf.mxu0
    %v3672 = vadd.f32 %v3658, %v3671
    %3673 = vdwg.mxu0
    %3674 = vmatpush.bf16.msra.mxu0 %v3442
    %3675 = vmatpush.bf16.msra.mxu0 %v3440
    %3676 = vmatpush.bf16.msra.mxu0 %v3438
    %3677 = vmatpush.bf16.msra.mxu0 %v3436
    %3678 = vmatpush.bf16.msra.mxu0 %v3434
    %3679 = vmatpush.bf16.msra.mxu0 %v3432
    %3680 = vmatpush.bf16.msra.mxu0 %v3430
    %3681 = vmatpush.bf16.msra.mxu0 %v3428
    %3682 = vmatmul.bf16.gmra.mxu0 %v2827
    %v3683 = vpop.f32.mrf.mxu0
    %v3684 = vadd.f32 %v3670, %v3683
    %v3685 = vpop.f32.mrf.mxu0
    %v3686 = vadd.f32 %v3672, %v3685
    %3687 = vdwg.mxu0
    %3688 = vmatpush.bf16.msra.mxu0 %v3458
    %3689 = vmatpush.bf16.msra.mxu0 %v3456
    %3690 = vmatpush.bf16.msra.mxu0 %v3454
    %3691 = vmatpush.bf16.msra.mxu0 %v3452
    %3692 = vmatpush.bf16.msra.mxu0 %v3450
    %3693 = vmatpush.bf16.msra.mxu0 %v3448
    %3694 = vmatpush.bf16.msra.mxu0 %v3446
    %3695 = vmatpush.bf16.msra.mxu0 %v3444
    %3696 = vmatmul.bf16.gmra.mxu0 %v2828
    %v3697 = vpop.f32.mrf.mxu0
    %v3698 = vadd.f32 %v3684, %v3697
    %v3699 = vpop.f32.mrf.mxu0
    %v3700 = vadd.f32 %v3686, %v3699
    %3701 = vdwg.mxu0
    %3702 = vmatpush.bf16.msra.mxu0 %v3474
    %3703 = vmatpush.bf16.msra.mxu0 %v3472
    %3704 = vmatpush.bf16.msra.mxu0 %v3470
    %3705 = vmatpush.bf16.msra.mxu0 %v3468
    %3706 = vmatpush.bf16.msra.mxu0 %v3466
    %3707 = vmatpush.bf16.msra.mxu0 %v3464
    %3708 = vmatpush.bf16.msra.mxu0 %v3462
    %3709 = vmatpush.bf16.msra.mxu0 %v3460
    %3710 = vmatmul.bf16.gmra.mxu0 %v2829
    %v3711 = vpop.f32.mrf.mxu0
    %v3712 = vadd.f32 %v3698, %v3711
    %v3713 = vpop.f32.mrf.mxu0
    %v3714 = vadd.f32 %v3700, %v3713
    %3715 = vdwg.mxu0
    %3716 = vmatpush.bf16.msra.mxu0 %v3363
    %3717 = vmatpush.bf16.msra.mxu0 %v3361
    %3718 = vmatpush.bf16.msra.mxu0 %v3359
    %3719 = vmatpush.bf16.msra.mxu0 %v3357
    %3720 = vmatpush.bf16.msra.mxu0 %v3355
    %3721 = vmatpush.bf16.msra.mxu0 %v3353
    %3722 = vmatpush.bf16.msra.mxu0 %v3351
    %3723 = vmatpush.bf16.msra.mxu0 %v3349
    %3724 = vmatmul.bf16.gmra.mxu0 %v2822
    %v3725 = vpop.f32.mrf.mxu0
    %v3726 = vadd.f32 %v2961, %v3725
    %v3727 = vpop.f32.mrf.mxu0
    %v3728 = vadd.f32 %v2961, %v3727
    %3729 = vdwg.mxu0
    %3730 = vmatpush.bf16.msra.mxu0 %v3379
    %3731 = vmatpush.bf16.msra.mxu0 %v3377
    %3732 = vmatpush.bf16.msra.mxu0 %v3375
    %3733 = vmatpush.bf16.msra.mxu0 %v3373
    %3734 = vmatpush.bf16.msra.mxu0 %v3371
    %3735 = vmatpush.bf16.msra.mxu0 %v3369
    %3736 = vmatpush.bf16.msra.mxu0 %v3367
    %3737 = vmatpush.bf16.msra.mxu0 %v3365
    %3738 = vmatmul.bf16.gmra.mxu0 %v2823
    %v3739 = vpop.f32.mrf.mxu0
    %v3740 = vadd.f32 %v3726, %v3739
    %v3741 = vpop.f32.mrf.mxu0
    %v3742 = vadd.f32 %v3728, %v3741
    %3743 = vdwg.mxu0
    %3744 = vmatpush.bf16.msra.mxu0 %v3395
    %3745 = vmatpush.bf16.msra.mxu0 %v3393
    %3746 = vmatpush.bf16.msra.mxu0 %v3391
    %3747 = vmatpush.bf16.msra.mxu0 %v3389
    %3748 = vmatpush.bf16.msra.mxu0 %v3387
    %3749 = vmatpush.bf16.msra.mxu0 %v3385
    %3750 = vmatpush.bf16.msra.mxu0 %v3383
    %3751 = vmatpush.bf16.msra.mxu0 %v3381
    %3752 = vmatmul.bf16.gmra.mxu0 %v2824
    %v3753 = vpop.f32.mrf.mxu0
    %v3754 = vadd.f32 %v3740, %v3753
    %v3755 = vpop.f32.mrf.mxu0
    %v3756 = vadd.f32 %v3742, %v3755
    %3757 = vdwg.mxu0
    %3758 = vmatpush.bf16.msra.mxu0 %v3411
    %3759 = vmatpush.bf16.msra.mxu0 %v3409
    %3760 = vmatpush.bf16.msra.mxu0 %v3407
    %3761 = vmatpush.bf16.msra.mxu0 %v3405
    %3762 = vmatpush.bf16.msra.mxu0 %v3403
    %3763 = vmatpush.bf16.msra.mxu0 %v3401
    %3764 = vmatpush.bf16.msra.mxu0 %v3399
    %3765 = vmatpush.bf16.msra.mxu0 %v3397
    %3766 = vmatmul.bf16.gmra.mxu0 %v2825
    %v3767 = vpop.f32.mrf.mxu0
    %v3768 = vadd.f32 %v3754, %v3767
    %v3769 = vpop.f32.mrf.mxu0
    %v3770 = vadd.f32 %v3756, %v3769
    %3771 = vdwg.mxu0
    %3772 = vmatpush.bf16.msra.mxu0 %v3427
    %3773 = vmatpush.bf16.msra.mxu0 %v3425
    %3774 = vmatpush.bf16.msra.mxu0 %v3423
    %3775 = vmatpush.bf16.msra.mxu0 %v3421
    %3776 = vmatpush.bf16.msra.mxu0 %v3419
    %3777 = vmatpush.bf16.msra.mxu0 %v3417
    %3778 = vmatpush.bf16.msra.mxu0 %v3415
    %3779 = vmatpush.bf16.msra.mxu0 %v3413
    %3780 = vmatmul.bf16.gmra.mxu0 %v2826
    %v3781 = vpop.f32.mrf.mxu0
    %v3782 = vadd.f32 %v3768, %v3781
    %v3783 = vpop.f32.mrf.mxu0
    %v3784 = vadd.f32 %v3770, %v3783
    %3785 = vdwg.mxu0
    %3786 = vmatpush.bf16.msra.mxu0 %v3443
    %3787 = vmatpush.bf16.msra.mxu0 %v3441
    %3788 = vmatpush.bf16.msra.mxu0 %v3439
    %3789 = vmatpush.bf16.msra.mxu0 %v3437
    %3790 = vmatpush.bf16.msra.mxu0 %v3435
    %3791 = vmatpush.bf16.msra.mxu0 %v3433
    %3792 = vmatpush.bf16.msra.mxu0 %v3431
    %3793 = vmatpush.bf16.msra.mxu0 %v3429
    %3794 = vmatmul.bf16.gmra.mxu0 %v2827
    %v3795 = vpop.f32.mrf.mxu0
    %v3796 = vadd.f32 %v3782, %v3795
    %v3797 = vpop.f32.mrf.mxu0
    %v3798 = vadd.f32 %v3784, %v3797
    %3799 = vdwg.mxu0
    %3800 = vmatpush.bf16.msra.mxu0 %v3459
    %3801 = vmatpush.bf16.msra.mxu0 %v3457
    %3802 = vmatpush.bf16.msra.mxu0 %v3455
    %3803 = vmatpush.bf16.msra.mxu0 %v3453
    %3804 = vmatpush.bf16.msra.mxu0 %v3451
    %3805 = vmatpush.bf16.msra.mxu0 %v3449
    %3806 = vmatpush.bf16.msra.mxu0 %v3447
    %3807 = vmatpush.bf16.msra.mxu0 %v3445
    %3808 = vmatmul.bf16.gmra.mxu0 %v2828
    %v3809 = vpop.f32.mrf.mxu0
    %v3810 = vadd.f32 %v3796, %v3809
    %v3811 = vpop.f32.mrf.mxu0
    %v3812 = vadd.f32 %v3798, %v3811
    %3813 = vdwg.mxu0
    %3814 = vmatpush.bf16.msra.mxu0 %v3475
    %3815 = vmatpush.bf16.msra.mxu0 %v3473
    %3816 = vmatpush.bf16.msra.mxu0 %v3471
    %3817 = vmatpush.bf16.msra.mxu0 %v3469
    %3818 = vmatpush.bf16.msra.mxu0 %v3467
    %3819 = vmatpush.bf16.msra.mxu0 %v3465
    %3820 = vmatpush.bf16.msra.mxu0 %v3463
    %3821 = vmatpush.bf16.msra.mxu0 %v3461
    %3822 = vmatmul.bf16.gmra.mxu0 %v2829
    %v3823 = vpop.f32.mrf.mxu0
    %v3824 = vadd.f32 %v3810, %v3823
    %v3825 = vpop.f32.mrf.mxu0
    %v3826 = vadd.f32 %v3812, %v3825
    %3827 = vdwg.mxu0
    %v3828 = vadd.f32 %v1720, %v3712
    %v3829 = vadd.f32 %v1721, %v3824
    %v3830 = vadd.f32 %v1722, %v3714
    %v3831 = vadd.f32 %v1723, %v3826
    %3832 = vst [vmem:[#allocation14] sm:$0xff] %v3828
    %3833 = vst [vmem:[#allocation14 + $0x8] sm:$0xff] %v3829
    %3834 = vst [vmem:[#allocation14 + $0x10] sm:$0xff] %v3830
    %3835 = vst [vmem:[#allocation14 + $0x18] sm:$0xff] %v3831
    // Predicated region
    $region78: #{tpu_custom_call.1} parent=1 // pred_check
      _
    $region79: #{tpu_custom_call.1} parent=1 // pred_check_branch
      %3837 = sbr.rel (0) target = $region81
    $region80: #{tpu_custom_call.1} parent=1 // pred_region
      %3839 = vsyncadd [#allocation4], 0
      %s3840 = sshll.u32 [#allocation14], 4
      %s3841 = int_to_ptr.vmem [resolvable:$true] %s3840
      %s3842 = sshll.u32 %s12, 4
      %s3843 = int_to_ptr.hbm [resolvable:$true] %s3842
      %3848 = dma.vmem_to_hbm [thread:$0]  %s3841, 512, %s3843, [#allocation4], 256, 256, 16
    $region81: #{tpu_custom_call.1} parent=1 // pred_fallthru
      _
    // Predicated region
    $region82: #{tpu_custom_call.1} parent=1 // pred_check
      _
    $region83: #{tpu_custom_call.1} parent=1 // pred_check_branch
      %3850 = sbr.rel (0) target = $region85
    $region84: #{tpu_custom_call.1} parent=1 // pred_region
      %3852 = dma.done [#allocation4], 512
    $region85: #{tpu_custom_call.1} parent=1 // pred_fallthru
      _
    %3853 = vsyncpa [#allocation3], 1
    %3854 = vsyncpa [#allocation6], 1
    %3855 = vsyncpa [#allocation9], 1
    %3856 = vsyncpa [#allocation12], 1
    %3857 = vsyncpa [#allocation4], 1

</llo_original>
